<compile_context>
chip_gen: v5e
topology: v5e:2x2
jax: 0.10.0
libtpu: 0.0.40
codegen_flags: <defaults>
</compile_context>

<pallas_src>
import jax
import jax.numpy as jnp
from jax.experimental import pallas as pl
from jax.experimental.pallas import tpu as pltpu

NC = 2  # split-K factor: leading "parallel" grid axis (2 TensorCores on v7x)


def _round_up(n, m):
    return ((n + m - 1) // m) * m


def _plan_k(K, nc, tk):
    """K-tiling plan: tiles <= tk cols, tile count a multiple of nc,
    TK a multiple of 512, ragged padding minimized."""
    n_tiles = _round_up(max(1, -(-K // tk)), nc)
    TK = _round_up(-(-K // n_tiles), 512)
    K_pad = n_tiles * TK
    return TK, K_pad, n_tiles // nc


# ---------------------------------------------------------------------------
# Kernel 1: streamed split-K backbone matmul   (B_pad, K) @ (K, 512)
# ---------------------------------------------------------------------------
def backbone_kernel(x_ref, w_fe_ref, part_ref, acc_ref):
    k = pl.program_id(1)

    @pl.when(k == 0)
    def _init():
        acc_ref[...] = jnp.zeros_like(acc_ref)

    # bf16 inputs, f32 accumulation on the MXU; HBM-stream (w_fe) bound.
    acc_ref[...] += jnp.dot(x_ref[...], w_fe_ref[...],
                            preferred_element_type=jnp.float32)

    @pl.when(k == pl.num_programs(1) - 1)
    def _flush():
        part_ref[0] = acc_ref[...]          # per-core partial-sum slice


# ---------------------------------------------------------------------------
# Kernel 2: tiny tail — partial add + bias + head + FE_proj + select_rgb
# ---------------------------------------------------------------------------
def tail_kernel(part_ref, b_fe_ref, w_head_ref, b_head_ref,
                w_proj_ref, b_proj_ref, w_rgb_ref, b_rgb_ref,
                feat_ref, rgb_ref):
    backbone = jnp.sum(part_ref[...], axis=0) + b_fe_ref[...]
    # FE head: Linear(512, bottle_neck)
    fe_out = jnp.dot(backbone, w_head_ref[...],
                     preferred_element_type=jnp.float32) + b_head_ref[...]
    # FE_proj = Sequential(ReLU, Linear(bottle_neck, hidden_dim))
    feat = jnp.dot(jnp.maximum(fe_out, 0.0), w_proj_ref[...],
                   preferred_element_type=jnp.float32) + b_proj_ref[...]
    # select_rgb = Sequential(ReLU, Linear(hidden_dim, 3), Tanh)
    rgb = jnp.tanh(jnp.dot(jnp.maximum(feat, 0.0), w_rgb_ref[...],
                           preferred_element_type=jnp.float32) + b_rgb_ref[...])
    feat_ref[...] = feat
    rgb_ref[...] = rgb


# ---------------------------------------------------------------------------
# One-time weight preparation (hoisted out of the per-call path).
# ---------------------------------------------------------------------------
def prepare_params(params, K, hidden_dim, *, nc=NC, tk=8192):
    TK, K_pad, _ = _plan_k(K, nc, tk)
    bottle_neck = params["w_head"].shape[1]
    HD_pad = _round_up(hidden_dim, 128)
    RGB_pad = 128
    return dict(
        w_fe=jnp.zeros((K_pad, 512), jnp.bfloat16).at[:K, :].set(
            params["w_fe"].astype(jnp.bfloat16)),
        b_fe=params["b_fe"].astype(jnp.float32).reshape(1, 512),
        w_head=params["w_head"].astype(jnp.float32),
        b_head=params["b_head"].astype(jnp.float32).reshape(1, bottle_neck),
        w_proj=jnp.zeros((bottle_neck, HD_pad), jnp.float32).at[:, :hidden_dim].set(
            params["w_proj"].astype(jnp.float32)),
        b_proj=jnp.zeros((1, HD_pad), jnp.float32).at[:, :hidden_dim].set(
            params["b_proj"].astype(jnp.float32)),
        w_rgb=jnp.zeros((HD_pad, RGB_pad), jnp.float32).at[:hidden_dim, :3].set(
            params["w_rgb"].astype(jnp.float32)),
        b_rgb=jnp.zeros((1, RGB_pad), jnp.float32).at[:, :3].set(
            params["b_rgb"].astype(jnp.float32)),
    )


def channel_selector_forward(x, prep, *, hidden_dim, nc=NC, tk=8192):
    """x: (B, 3, H, W) f32.  Returns (prompt (B,3,224,224), feat (B,1,hidden_dim))."""
    B = x.shape[0]
    K = x.shape[1] * x.shape[2] * x.shape[3]
    TK, K_pad, n_k = _plan_k(K, nc, tk)
    assert prep["w_fe"].shape == (K_pad, 512), "prepare_params used different K/nc/tk"

    HD_pad = prep["w_proj"].shape[1]
    RGB_pad = prep["w_rgb"].shape[1]
    B_pad = _round_up(max(B, 16), 16)       # packed bf16 sublanes for the LHS

    # x: flatten -> bf16 -> zero-pad (zero padding keeps the math exact).
    x_p = jnp.zeros((B_pad, K_pad), jnp.bfloat16).at[:B, :K].set(
        x.reshape(B, K).astype(jnp.bfloat16))

    cost = pl.CostEstimate(
        flops=2 * B_pad * K_pad * 512,
        transcendentals=0,
        bytes_accessed=x_p.size * 2 + prep["w_fe"].size * 2 + nc * B_pad * 512 * 4,
    )

    # --- kernel 1: split-K streamed backbone matmul -> per-core partials ----
    partials = pl.pallas_call(
        backbone_kernel,
        out_shape=jax.ShapeDtypeStruct((nc, B_pad, 512), jnp.float32),
        grid_spec=pltpu.PrefetchScalarGridSpec(
            num_scalar_prefetch=0,
            grid=(nc, n_k),
            in_specs=[
                pl.BlockSpec((B_pad, TK), lambda c, k: (0, c * n_k + k)),
                pl.BlockSpec((TK, 512), lambda c, k: (c * n_k + k, 0)),
            ],
            out_specs=pl.BlockSpec((1, B_pad, 512), lambda c, k: (c, 0, 0)),
            scratch_shapes=[pltpu.VMEM((B_pad, 512), jnp.float32)],
        ),
        compiler_params=pltpu.CompilerParams(
            dimension_semantics=("parallel", "arbitrary"),
            vmem_limit_bytes=32 * 1024 * 1024,
        ),
        cost_estimate=cost,
    )(x_p, prep["w_fe"])

    # --- kernel 2: tiny tail, single step, everything resident in VMEM ------
    feat_p, rgb_p = pl.pallas_call(
        tail_kernel,
        out_shape=(
            jax.ShapeDtypeStruct((B_pad, HD_pad), jnp.float32),
            jax.ShapeDtypeStruct((B_pad, RGB_pad), jnp.float32),
        ),
    )(partials, prep["b_fe"], prep["w_head"], prep["b_head"],
      prep["w_proj"], prep["b_proj"], prep["w_rgb"], prep["b_rgb"])

    feat = feat_p[:B, :hidden_dim]
    rgb = rgb_p[:B, :3]

    # PyTorch: .reshape(B,3,1,1).expand([B,3,224,224]) is a zero-copy view.
    # Materialized here only for shape fidelity; consumers needing only the
    # per-channel values should use `rgb` directly.
    prompt = jnp.broadcast_to(rgb.reshape(B, 3, 1, 1), (B, 3, 224, 224))
    return prompt, feat.reshape(B, 1, hidden_dim)


def init_params(key, in_features, bottle_neck, hidden_dim):
    ks = jax.random.split(key, 8)

    def linear(kw, kb, fan_in, fan_out):
        w = jax.random.normal(kw, (fan_in, fan_out), jnp.float32) * (1.0 / jnp.sqrt(fan_in))
        b = jax.random.normal(kb, (1, fan_out), jnp.float32) * 0.01
        return w, b

    w_fe, b_fe = linear(ks[0], ks[1], in_features, 512)
    w_head, b_head = linear(ks[2], ks[3], 512, bottle_neck)
    w_proj, b_proj = linear(ks[4], ks[5], bottle_neck, hidden_dim)
    w_rgb, b_rgb = linear(ks[6], ks[7], hidden_dim, 3)
    return dict(w_fe=w_fe, b_fe=b_fe, w_head=w_head, b_head=b_head,
                w_proj=w_proj, b_proj=b_proj, w_rgb=w_rgb, b_rgb=b_rgb)


if __name__ == "__main__":
    B, H, W = 2, 32, 32          # small image (nominal resnet input is 224)
    hidden_dim, bottle_neck = 64, 32

    key = jax.random.PRNGKey(0)
    k_x, k_p = jax.random.split(key)
    x = jax.random.normal(k_x, (B, 3, H, W), jnp.float32)
    params = init_params(k_p, 3 * H * W, bottle_neck, hidden_dim)

    K = 3 * H * W
    prep = prepare_params(params, K, hidden_dim)        # one-time pad/cast

    fwd = jax.jit(channel_selector_forward,
                  static_argnames=("hidden_dim", "nc", "tk"))
    prompt, feat = fwd(x, prep, hidden_dim=hidden_dim)
    jax.block_until_ready((prompt, feat))

    # pure-JAX f32 reference (kernel streams bf16 weights -> loose tolerance)
    x_flat = x.reshape(B, -1)
    backbone = x_flat @ params["w_fe"] + params["b_fe"]
    fe_out = backbone @ params["w_head"] + params["b_head"]
    feat_exp = jnp.maximum(fe_out, 0.0) @ params["w_proj"] + params["b_proj"]
    rgb_exp = jnp.tanh(jnp.maximum(feat_exp, 0.0) @ params["w_rgb"] + params["b_rgb"])

    assert prompt.shape == (B, 3, 224, 224), prompt.shape
    assert feat.shape == (B, 1, hidden_dim), feat.shape
    assert bool(jnp.allclose(feat[:, 0, :], feat_exp, rtol=5e-2, atol=5e-2))
    assert bool(jnp.allclose(prompt[:, :, 0, 0], rgb_exp, rtol=5e-2, atol=5e-2))
    # prompt is tanh-bounded and constant over the spatial dims
    assert bool(jnp.all(jnp.abs(prompt) <= 1.0))
    assert bool(jnp.allclose(prompt, prompt[..., :1, :1]))
    print("KERNEL_OK")
</pallas_src>

<mosaic_0001>
module attributes {stable_mosaic.version = 11 : i64} {
  func.func @backbone_kernel(%arg0: i32, %arg1: i32, %arg2: memref<16x1536xbf16, #tpu.memory_space<vmem>>, %arg3: memref<1536x512xbf16, #tpu.memory_space<vmem>>, %arg4: memref<1x16x512xf32, #tpu.memory_space<vmem>>, %arg5: memref<16x512xf32, #tpu.memory_space<vmem>>) attributes {dimension_semantics = [#tpu.dimension_semantics<parallel>, #tpu.dimension_semantics<arbitrary>], iteration_bounds = array<i64: 2, 1>, scalar_prefetch = 0 : i64, scratch_operands = 1 : i64, tpu.core_type = #tpu.core_type<tc>, window_params = [{transform_indices = @transform_0, window_bounds = array<i64: 16, 1536>}, {transform_indices = @transform_1, window_bounds = array<i64: 1536, 512>}, {transform_indices = @transform_2, window_bounds = array<i64: 1, 16, 512>}]} {
    %c0_i32 = arith.constant 0 : i32
    %0 = arith.cmpi eq, %arg1, %c0_i32 : i32
    %1 = arith.extui %0 : i1 to i32
    %c0_i32_0 = arith.constant 0 : i32
    %2 = arith.cmpi ne, %1, %c0_i32_0 : i32
    scf.if %2 {
      %cst_10 = arith.constant 0.000000e+00 : f32
      %12 = vector.broadcast %cst_10 : f32 to vector<16x512xf32>
      %c0_11 = arith.constant 0 : index
      %c0_12 = arith.constant 0 : index
      %13 = vector.load %arg5[%c0_11, %c0_12] : memref<16x512xf32, #tpu.memory_space<vmem>>, vector<16x512xf32>
      tpu.vector_store %arg5[%c0_11, %c0_12], %12 {strides = array<i32>} : memref<16x512xf32, #tpu.memory_space<vmem>>, vector<16x512xf32>,
    } else {
    }
    %c0 = arith.constant 0 : index
    %c0_1 = arith.constant 0 : index
    %3 = vector.load %arg5[%c0, %c0_1] : memref<16x512xf32, #tpu.memory_space<vmem>>, vector<16x512xf32>
    %c0_2 = arith.constant 0 : index
    %c0_3 = arith.constant 0 : index
    %4 = vector.load %arg2[%c0_2, %c0_3] : memref<16x1536xbf16, #tpu.memory_space<vmem>>, vector<16x1536xbf16>
    %c0_4 = arith.constant 0 : index
    %c0_5 = arith.constant 0 : index
    %5 = vector.load %arg3[%c0_4, %c0_5] : memref<1536x512xbf16, #tpu.memory_space<vmem>>, vector<1536x512xbf16>
    %cst = arith.constant dense<0.000000e+00> : vector<16x512xf32>
    %6 = tpu.matmul %4, %5, %cst {dimension_numbers = #tpu.dot_dimension_numbers<[1], [0], [0], [1], [0, 0, 1, 1], [], []>} : vector<16x1536xbf16>, vector<1536x512xbf16>, vector<16x512xf32> -> vector<16x512xf32>
    %7 = arith.addf %3, %6 : vector<16x512xf32>
    %c0_6 = arith.constant 0 : index
    %c0_7 = arith.constant 0 : index
    %8 = vector.load %arg5[%c0_6, %c0_7] : memref<16x512xf32, #tpu.memory_space<vmem>>, vector<16x512xf32>
    tpu.vector_store %arg5[%c0_6, %c0_7], %7 {strides = array<i32>} : memref<16x512xf32, #tpu.memory_space<vmem>>, vector<16x512xf32>,
    %c0_i32_8 = arith.constant 0 : i32
    %9 = arith.cmpi eq, %arg1, %c0_i32_8 : i32
    %10 = arith.extui %9 : i1 to i32
    %c0_i32_9 = arith.constant 0 : i32
    %11 = arith.cmpi ne, %10, %c0_i32_9 : i32
    scf.if %11 {
      %c0_10 = arith.constant 0 : index
      %c0_11 = arith.constant 0 : index
      %12 = vector.load %arg5[%c0_10, %c0_11] : memref<16x512xf32, #tpu.memory_space<vmem>>, vector<16x512xf32>
      %c0_12 = arith.constant 0 : index
      %c0_13 = arith.constant 0 : index
      %c0_14 = arith.constant 0 : index
      %13 = vector.load %arg4[%c0_12, %c0_13, %c0_14] : memref<1x16x512xf32, #tpu.memory_space<vmem>>, vector<1x16x512xf32>
      %14 = vector.shape_cast %13 : vector<1x16x512xf32> to vector<16x512xf32>
      %15 = vector.shape_cast %12 : vector<16x512xf32> to vector<1x16x512xf32>
      tpu.vector_store %arg4[%c0_12, %c0_13, %c0_14], %15 {strides = array<i32>} : memref<1x16x512xf32, #tpu.memory_space<vmem>>, vector<1x16x512xf32>,
    } else {
    }
    return
  }
  func.func @transform_0(%arg0: i32, %arg1: i32) -> (i32, i32) {
    %c1_i32 = arith.constant 1 : i32
    %0 = arith.muli %arg0, %c1_i32 : i32
    %1 = arith.addi %0, %arg1 : i32
    %c0_i32 = arith.constant 0 : i32
    %c0_i32_0 = arith.constant 0 : i32
    return %c0_i32, %1 : i32, i32
  }
  func.func @transform_1(%arg0: i32, %arg1: i32) -> (i32, i32) {
    %c1_i32 = arith.constant 1 : i32
    %0 = arith.muli %arg0, %c1_i32 : i32
    %1 = arith.addi %0, %arg1 : i32
    %c0_i32 = arith.constant 0 : i32
    %c0_i32_0 = arith.constant 0 : i32
    return %1, %c0_i32 : i32, i32
  }
  func.func @transform_2(%arg0: i32, %arg1: i32) -> (i32, i32, i32) {
    %c0_i32 = arith.constant 0 : i32
    %c0_i32_0 = arith.constant 0 : i32
    %c0_i32_1 = arith.constant 0 : i32
    return %arg0, %c0_i32, %c0_i32_0 : i32, i32, i32
  }
}

module attributes {stable_mosaic.version = 11 : i64} {
  func.func @tail_kernel(%arg0: memref<2x16x512xf32, #tpu.memory_space<vmem>>, %arg1: memref<1x512xf32, #tpu.memory_space<vmem>>, %arg2: memref<512x32xf32, #tpu.memory_space<vmem>>, %arg3: memref<1x32xf32, #tpu.memory_space<vmem>>, %arg4: memref<32x128xf32, #tpu.memory_space<vmem>>, %arg5: memref<1x128xf32, #tpu.memory_space<vmem>>, %arg6: memref<128x128xf32, #tpu.memory_space<vmem>>, %arg7: memref<1x128xf32, #tpu.memory_space<vmem>>, %arg8: memref<16x128xf32, #tpu.memory_space<vmem>>, %arg9: memref<16x128xf32, #tpu.memory_space<vmem>>) attributes {dimension_semantics = [], scalar_prefetch = 0 : i64, scratch_operands = 0 : i64, tpu.core_type = #tpu.core_type<tc>} {
    %c0 = arith.constant 0 : index
    %c0_0 = arith.constant 0 : index
    %c0_1 = arith.constant 0 : index
    %0 = vector.load %arg0[%c0, %c0_0, %c0_1] : memref<2x16x512xf32, #tpu.memory_space<vmem>>, vector<2x16x512xf32>
    %cst = arith.constant dense<0.000000e+00> : vector<16x512xf32>
    %1 = vector.multi_reduction <add>, %0, %cst [0] : vector<2x16x512xf32> to vector<16x512xf32>
    %c0_2 = arith.constant 0 : index
    %c0_3 = arith.constant 0 : index
    %2 = vector.load %arg1[%c0_2, %c0_3] : memref<1x512xf32, #tpu.memory_space<vmem>>, vector<1x512xf32>
    %3 = vector.broadcast %2 : vector<1x512xf32> to vector<16x512xf32>
    %4 = arith.addf %1, %3 : vector<16x512xf32>
    %c0_4 = arith.constant 0 : index
    %c0_5 = arith.constant 0 : index
    %5 = vector.load %arg2[%c0_4, %c0_5] : memref<512x32xf32, #tpu.memory_space<vmem>>, vector<512x32xf32>
    %cst_6 = arith.constant dense<0.000000e+00> : vector<16x32xf32>
    %6 = tpu.matmul %4, %5, %cst_6 {dimension_numbers = #tpu.dot_dimension_numbers<[1], [0], [0], [1], [0, 0, 1, 1], [], []>} : vector<16x512xf32>, vector<512x32xf32>, vector<16x32xf32> -> vector<16x32xf32>
    %c0_7 = arith.constant 0 : index
    %c0_8 = arith.constant 0 : index
    %7 = vector.load %arg3[%c0_7, %c0_8] : memref<1x32xf32, #tpu.memory_space<vmem>>, vector<1x32xf32>
    %8 = vector.broadcast %7 : vector<1x32xf32> to vector<16x32xf32>
    %9 = arith.addf %6, %8 : vector<16x32xf32>
    %cst_9 = arith.constant 0.000000e+00 : f32
    %10 = vector.broadcast %cst_9 : f32 to vector<16x32xf32>
    %11 = arith.maximumf %9, %10 : vector<16x32xf32>
    %c0_10 = arith.constant 0 : index
    %c0_11 = arith.constant 0 : index
    %12 = vector.load %arg4[%c0_10, %c0_11] : memref<32x128xf32, #tpu.memory_space<vmem>>, vector<32x128xf32>
    %cst_12 = arith.constant dense<0.000000e+00> : vector<16x128xf32>
    %13 = tpu.matmul %11, %12, %cst_12 {dimension_numbers = #tpu.dot_dimension_numbers<[1], [0], [0], [1], [0, 0, 1, 1], [], []>} : vector<16x32xf32>, vector<32x128xf32>, vector<16x128xf32> -> vector<16x128xf32>
    %c0_13 = arith.constant 0 : index
    %c0_14 = arith.constant 0 : index
    %14 = vector.load %arg5[%c0_13, %c0_14] : memref<1x128xf32, #tpu.memory_space<vmem>>, vector<1x128xf32>
    %15 = vector.broadcast %14 : vector<1x128xf32> to vector<16x128xf32>
    %16 = arith.addf %13, %15 : vector<16x128xf32>
    %cst_15 = arith.constant 0.000000e+00 : f32
    %17 = vector.broadcast %cst_15 : f32 to vector<16x128xf32>
    %18 = arith.maximumf %16, %17 : vector<16x128xf32>
    %c0_16 = arith.constant 0 : index
    %c0_17 = arith.constant 0 : index
    %19 = vector.load %arg6[%c0_16, %c0_17] : memref<128x128xf32, #tpu.memory_space<vmem>>, vector<128x128xf32>
    %cst_18 = arith.constant dense<0.000000e+00> : vector<16x128xf32>
    %20 = tpu.matmul %18, %19, %cst_18 {dimension_numbers = #tpu.dot_dimension_numbers<[1], [0], [0], [1], [0, 0, 1, 1], [], []>} : vector<16x128xf32>, vector<128x128xf32>, vector<16x128xf32> -> vector<16x128xf32>
    %c0_19 = arith.constant 0 : index
    %c0_20 = arith.constant 0 : index
    %21 = vector.load %arg7[%c0_19, %c0_20] : memref<1x128xf32, #tpu.memory_space<vmem>>, vector<1x128xf32>
    %22 = vector.broadcast %21 : vector<1x128xf32> to vector<16x128xf32>
    %23 = arith.addf %20, %22 : vector<16x128xf32>
    %24 = math.tanh %23 : vector<16x128xf32>
    %c0_21 = arith.constant 0 : index
    %c0_22 = arith.constant 0 : index
    %25 = vector.load %arg8[%c0_21, %c0_22] : memref<16x128xf32, #tpu.memory_space<vmem>>, vector<16x128xf32>
    tpu.vector_store %arg8[%c0_21, %c0_22], %16 {strides = array<i32>} : memref<16x128xf32, #tpu.memory_space<vmem>>, vector<16x128xf32>,
    %c0_23 = arith.constant 0 : index
    %c0_24 = arith.constant 0 : index
    %26 = vector.load %arg9[%c0_23, %c0_24] : memref<16x128xf32, #tpu.memory_space<vmem>>, vector<16x128xf32>
    tpu.vector_store %arg9[%c0_23, %c0_24], %24 {strides = array<i32>} : memref<16x128xf32, #tpu.memory_space<vmem>>, vector<16x128xf32>,
    return
  }
}

</mosaic_0001>

<llo_original>
// kernel: channel_selector_forward.3
$region0: #{channel_selector_forward.3}
  #allocation0 [shape = 'u32[]', space=smem, size = 0x4, offset = 0x4, fixed_abs, tag = 'smem constant byte address 0x4 - core index']
  #allocation1 [shape = 'u32[72,128]{1,0:T(1,128)}', space=vmem, size = 0x9000, scoped, tag = 'internal scratch']
  %s0 = inlined_call_operand.vmem [shape: f32[2,16,512], index: 0, kind: input, shape index: {}]
  %s1 = inlined_call_operand.vmem [shape: f32[1,512], index: 1, kind: input, shape index: {}]
  %s2 = inlined_call_operand.vmem [shape: f32[512,32], index: 2, kind: input, shape index: {}]
  %s3 = inlined_call_operand.vmem [shape: f32[1,32], index: 3, kind: input, shape index: {}]
  %s4 = inlined_call_operand.vmem [shape: f32[32,128], index: 4, kind: input, shape index: {}]
  %s5 = inlined_call_operand.vmem [shape: f32[1,128], index: 5, kind: input, shape index: {}]
  %s6 = inlined_call_operand.vmem [shape: f32[128,128], index: 6, kind: input, shape index: {}]
  %s7 = inlined_call_operand.vmem [shape: f32[1,128], index: 7, kind: input, shape index: {}]
  %s8 = inlined_call_operand.vmem [shape: f32[16,128], index: 8, kind: output, shape index: {0}]
  %s9 = inlined_call_operand.vmem [shape: f32[16,128], index: 9, kind: output, shape index: {1}]
  %10 = xla_tuple %s8, %s9
  %s11 = sld [smem:[#allocation0]]
  $region50: #{channel_selector_forward.3} parent=0
    _
  %s13 = ssub.s32 1, %s11
  %s14 = scalar_select 0, %s13, %s11
  // Predicated region
  $region2: #{channel_selector_forward.3} parent=0 // pred_check
    _
  $region3: #{channel_selector_forward.3} parent=0 // pred_check_branch
    %16 = sbr.rel (0) target = $region5
  $region4: #{channel_selector_forward.3} parent=0 // pred_region
    _
  $region5: #{channel_selector_forward.3} parent=0 // pred_fallthru
    _
  // Predicated region
  $region6: #{channel_selector_forward.3} parent=0 // pred_check
    _
  $region7: #{channel_selector_forward.3} parent=0 // pred_check_branch
    %18 = sbr.rel (0) target = $region9
  $region8: #{channel_selector_forward.3} parent=0 // pred_region
    _
  $region9: #{channel_selector_forward.3} parent=0 // pred_fallthru
    _
  // Predicated region
  $region10: #{channel_selector_forward.3} parent=0 // pred_check
    _
  $region11: #{channel_selector_forward.3} parent=0 // pred_check_branch
    %20 = sbr.rel (0) target = $region13
  $region12: #{channel_selector_forward.3} parent=0 // pred_region
    _
  $region13: #{channel_selector_forward.3} parent=0 // pred_fallthru
    _
  // Predicated region
  $region14: #{channel_selector_forward.3} parent=0 // pred_check
    _
  $region15: #{channel_selector_forward.3} parent=0 // pred_check_branch
    %22 = sbr.rel (0) target = $region17
  $region16: #{channel_selector_forward.3} parent=0 // pred_region
    _
  $region17: #{channel_selector_forward.3} parent=0 // pred_fallthru
    _
  // Predicated region
  $region18: #{channel_selector_forward.3} parent=0 // pred_check
    _
  $region19: #{channel_selector_forward.3} parent=0 // pred_check_branch
    %24 = sbr.rel (0) target = $region21
  $region20: #{channel_selector_forward.3} parent=0 // pred_region
    _
  $region21: #{channel_selector_forward.3} parent=0 // pred_fallthru
    _
  // Predicated region
  $region22: #{channel_selector_forward.3} parent=0 // pred_check
    _
  $region23: #{channel_selector_forward.3} parent=0 // pred_check_branch
    %26 = sbr.rel (0) target = $region25
  $region24: #{channel_selector_forward.3} parent=0 // pred_region
    _
  $region25: #{channel_selector_forward.3} parent=0 // pred_fallthru
    _
  // Predicated region
  $region26: #{channel_selector_forward.3} parent=0 // pred_check
    _
  $region27: #{channel_selector_forward.3} parent=0 // pred_check_branch
    %28 = sbr.rel (0) target = $region29
  $region28: #{channel_selector_forward.3} parent=0 // pred_region
    _
  $region29: #{channel_selector_forward.3} parent=0 // pred_fallthru
    _
  // Predicated region
  $region30: #{channel_selector_forward.3} parent=0 // pred_check
    _
  $region31: #{channel_selector_forward.3} parent=0 // pred_check_branch
    %30 = sbr.rel (0) target = $region33
  $region32: #{channel_selector_forward.3} parent=0 // pred_region
    _
  $region33: #{channel_selector_forward.3} parent=0 // pred_fallthru
    _
  %v31 = vld [vmem:[%s0] sm:$0xff]
  %v32 = vld [vmem:[%s0 + $0x8] sm:$0xff]
  %v33 = vld [vmem:[%s0 + $0x10] sm:$0xff]
  %v34 = vld [vmem:[%s0 + $0x18] sm:$0xff]
  %v35 = vld [vmem:[%s0 + $0x20] sm:$0xff]
  %v36 = vld [vmem:[%s0 + $0x28] sm:$0xff]
  %v37 = vld [vmem:[%s0 + $0x30] sm:$0xff]
  %v38 = vld [vmem:[%s0 + $0x38] sm:$0xff]
  %v39 = vld [vmem:[%s0 + $0x40] sm:$0xff]
  %v40 = vld [vmem:[%s0 + $0x48] sm:$0xff]
  %v41 = vld [vmem:[%s0 + $0x50] sm:$0xff]
  %v42 = vld [vmem:[%s0 + $0x58] sm:$0xff]
  %v43 = vld [vmem:[%s0 + $0x60] sm:$0xff]
  %v44 = vld [vmem:[%s0 + $0x68] sm:$0xff]
  %v45 = vld [vmem:[%s0 + $0x70] sm:$0xff]
  %v46 = vld [vmem:[%s0 + $0x78] sm:$0xff]
  %v47 = vadd.f32 %v31, %v39
  %v48 = vadd.f32 %v32, %v40
  %v49 = vadd.f32 %v33, %v41
  %v50 = vadd.f32 %v34, %v42
  %v51 = vadd.f32 %v35, %v43
  %v52 = vadd.f32 %v36, %v44
  %v53 = vadd.f32 %v37, %v45
  %v54 = vadd.f32 %v38, %v46
  %v55 = vld [vmem:[%s1] sm:$0xf]
  %v57 = vperm.slane %v55, 0
  %v58 = vperm.slane %v55, 1
  %v59 = vperm.slane %v55, 2
  %v60 = vperm.slane %v55, 3
  %v65 = vadd.f32 %v47, %v57
  %v66 = vadd.f32 %v48, %v58
  %v67 = vadd.f32 %v49, %v59
  %v68 = vadd.f32 %v50, %v60
  %v69 = vadd.f32 %v51, %v57
  %v70 = vadd.f32 %v52, %v58
  %v71 = vadd.f32 %v53, %v59
  %v72 = vadd.f32 %v54, %v60
  %v73 = vld [vmem:[%s2] sm:$0xff]
  %v74 = vld [vmem:[%s2 + $0x8] sm:$0xff]
  %v75 = vld [vmem:[%s2 + $0x10] sm:$0xff]
  %v76 = vld [vmem:[%s2 + $0x18] sm:$0xff]
  %v77 = vld [vmem:[%s2 + $0x20] sm:$0xff]
  %v78 = vld [vmem:[%s2 + $0x28] sm:$0xff]
  %v79 = vld [vmem:[%s2 + $0x30] sm:$0xff]
  %v80 = vld [vmem:[%s2 + $0x38] sm:$0xff]
  %v81 = vld [vmem:[%s2 + $0x40] sm:$0xff]
  %v82 = vld [vmem:[%s2 + $0x48] sm:$0xff]
  %v83 = vld [vmem:[%s2 + $0x50] sm:$0xff]
  %v84 = vld [vmem:[%s2 + $0x58] sm:$0xff]
  %v85 = vld [vmem:[%s2 + $0x60] sm:$0xff]
  %v86 = vld [vmem:[%s2 + $0x68] sm:$0xff]
  %v87 = vld [vmem:[%s2 + $0x70] sm:$0xff]
  %v88 = vld [vmem:[%s2 + $0x78] sm:$0xff]
  %v89 = vld [vmem:[%s2 + $0x80] sm:$0xff]
  %v90 = vld [vmem:[%s2 + $0x88] sm:$0xff]
  %v91 = vld [vmem:[%s2 + $0x90] sm:$0xff]
  %v92 = vld [vmem:[%s2 + $0x98] sm:$0xff]
  %v93 = vld [vmem:[%s2 + $0xa0] sm:$0xff]
  %v94 = vld [vmem:[%s2 + $0xa8] sm:$0xff]
  %v95 = vld [vmem:[%s2 + $0xb0] sm:$0xff]
  %v96 = vld [vmem:[%s2 + $0xb8] sm:$0xff]
  %v97 = vld [vmem:[%s2 + $0xc0] sm:$0xff]
  %v98 = vld [vmem:[%s2 + $0xc8] sm:$0xff]
  %v99 = vld [vmem:[%s2 + $0xd0] sm:$0xff]
  %v100 = vld [vmem:[%s2 + $0xd8] sm:$0xff]
  %v101 = vld [vmem:[%s2 + $0xe0] sm:$0xff]
  %v102 = vld [vmem:[%s2 + $0xe8] sm:$0xff]
  %v103 = vld [vmem:[%s2 + $0xf0] sm:$0xff]
  %v104 = vld [vmem:[%s2 + $0xf8] sm:$0xff]
  %v105 = vld [vmem:[%s2 + $0x100] sm:$0xff]
  %v106 = vld [vmem:[%s2 + $0x108] sm:$0xff]
  %v107 = vld [vmem:[%s2 + $0x110] sm:$0xff]
  %v108 = vld [vmem:[%s2 + $0x118] sm:$0xff]
  %v109 = vld [vmem:[%s2 + $0x120] sm:$0xff]
  %v110 = vld [vmem:[%s2 + $0x128] sm:$0xff]
  %v111 = vld [vmem:[%s2 + $0x130] sm:$0xff]
  %v112 = vld [vmem:[%s2 + $0x138] sm:$0xff]
  %v113 = vld [vmem:[%s2 + $0x140] sm:$0xff]
  %v114 = vld [vmem:[%s2 + $0x148] sm:$0xff]
  %v115 = vld [vmem:[%s2 + $0x150] sm:$0xff]
  %v116 = vld [vmem:[%s2 + $0x158] sm:$0xff]
  %v117 = vld [vmem:[%s2 + $0x160] sm:$0xff]
  %v118 = vld [vmem:[%s2 + $0x168] sm:$0xff]
  %v119 = vld [vmem:[%s2 + $0x170] sm:$0xff]
  %v120 = vld [vmem:[%s2 + $0x178] sm:$0xff]
  %v121 = vld [vmem:[%s2 + $0x180] sm:$0xff]
  %v122 = vld [vmem:[%s2 + $0x188] sm:$0xff]
  %v123 = vld [vmem:[%s2 + $0x190] sm:$0xff]
  %v124 = vld [vmem:[%s2 + $0x198] sm:$0xff]
  %v125 = vld [vmem:[%s2 + $0x1a0] sm:$0xff]
  %v126 = vld [vmem:[%s2 + $0x1a8] sm:$0xff]
  %v127 = vld [vmem:[%s2 + $0x1b0] sm:$0xff]
  %v128 = vld [vmem:[%s2 + $0x1b8] sm:$0xff]
  %v129 = vld [vmem:[%s2 + $0x1c0] sm:$0xff]
  %v130 = vld [vmem:[%s2 + $0x1c8] sm:$0xff]
  %v131 = vld [vmem:[%s2 + $0x1d0] sm:$0xff]
  %v132 = vld [vmem:[%s2 + $0x1d8] sm:$0xff]
  %v133 = vld [vmem:[%s2 + $0x1e0] sm:$0xff]
  %v134 = vld [vmem:[%s2 + $0x1e8] sm:$0xff]
  %v135 = vld [vmem:[%s2 + $0x1f0] sm:$0xff]
  %v136 = vld [vmem:[%s2 + $0x1f8] sm:$0xff]
  %v137 = vld [vmem:[%s3] sm:$0x1]
  %v139 = vperm.slane %v137, 0
  %141 = vmatpush.msra.mxu0 %v88
  %142 = vmatpush.msra.mxu0 %v87
  %143 = vmatpush.msra.mxu0 %v86
  %144 = vmatpush.msra.mxu0 %v85
  %145 = vmatpush.msra.mxu0 %v84
  %146 = vmatpush.msra.mxu0 %v83
  %147 = vmatpush.msra.mxu0 %v82
  %148 = vmatpush.msra.mxu0 %v81
  %149 = vmatpush.msra.mxu0 %v80
  %150 = vmatpush.msra.mxu0 %v79
  %151 = vmatpush.msra.mxu0 %v78
  %152 = vmatpush.msra.mxu0 %v77
  %153 = vmatpush.msra.mxu0 %v76
  %154 = vmatpush.msra.mxu0 %v75
  %155 = vmatpush.msra.mxu0 %v74
  %156 = vmatpush.msra.mxu0 %v73
  %157 = vmatmul.f32.gmra.mxu0 %v65
  %v158 = vpop.f32.mrf.mxu0
  %v159 = vadd.f32 %v139, %v158
  %160 = vmatmul.f32.gmra.mxu0 %v69
  %v161 = vpop.f32.mrf.mxu0
  %v162 = vadd.f32 %v139, %v161
  %163 = vdwg.mxu0
  %164 = vmatpush.msra.mxu0 %v104
  %165 = vmatpush.msra.mxu0 %v103
  %166 = vmatpush.msra.mxu0 %v102
  %167 = vmatpush.msra.mxu0 %v101
  %168 = vmatpush.msra.mxu0 %v100
  %169 = vmatpush.msra.mxu0 %v99
  %170 = vmatpush.msra.mxu0 %v98
  %171 = vmatpush.msra.mxu0 %v97
  %172 = vmatpush.msra.mxu0 %v96
  %173 = vmatpush.msra.mxu0 %v95
  %174 = vmatpush.msra.mxu0 %v94
  %175 = vmatpush.msra.mxu0 %v93
  %176 = vmatpush.msra.mxu0 %v92
  %177 = vmatpush.msra.mxu0 %v91
  %178 = vmatpush.msra.mxu0 %v90
  %179 = vmatpush.msra.mxu0 %v89
  %180 = vmatmul.f32.gmra.mxu0 %v66
  %v181 = vpop.f32.mrf.mxu0
  %v182 = vadd.f32 %v159, %v181
  %183 = vmatmul.f32.gmra.mxu0 %v70
  %v184 = vpop.f32.mrf.mxu0
  %v185 = vadd.f32 %v162, %v184
  %186 = vdwg.mxu0
  %187 = vmatpush.msra.mxu0 %v120
  %188 = vmatpush.msra.mxu0 %v119
  %189 = vmatpush.msra.mxu0 %v118
  %190 = vmatpush.msra.mxu0 %v117
  %191 = vmatpush.msra.mxu0 %v116
  %192 = vmatpush.msra.mxu0 %v115
  %193 = vmatpush.msra.mxu0 %v114
  %194 = vmatpush.msra.mxu0 %v113
  %195 = vmatpush.msra.mxu0 %v112
  %196 = vmatpush.msra.mxu0 %v111
  %197 = vmatpush.msra.mxu0 %v110
  %198 = vmatpush.msra.mxu0 %v109
  %199 = vmatpush.msra.mxu0 %v108
  %200 = vmatpush.msra.mxu0 %v107
  %201 = vmatpush.msra.mxu0 %v106
  %202 = vmatpush.msra.mxu0 %v105
  %203 = vmatmul.f32.gmra.mxu0 %v67
  %v204 = vpop.f32.mrf.mxu0
  %v205 = vadd.f32 %v182, %v204
  %206 = vmatmul.f32.gmra.mxu0 %v71
  %v207 = vpop.f32.mrf.mxu0
  %v208 = vadd.f32 %v185, %v207
  %209 = vdwg.mxu0
  %210 = vmatpush.msra.mxu0 %v136
  %211 = vmatpush.msra.mxu0 %v135
  %212 = vmatpush.msra.mxu0 %v134
  %213 = vmatpush.msra.mxu0 %v133
  %214 = vmatpush.msra.mxu0 %v132
  %215 = vmatpush.msra.mxu0 %v131
  %216 = vmatpush.msra.mxu0 %v130
  %217 = vmatpush.msra.mxu0 %v129
  %218 = vmatpush.msra.mxu0 %v128
  %219 = vmatpush.msra.mxu0 %v127
  %220 = vmatpush.msra.mxu0 %v126
  %221 = vmatpush.msra.mxu0 %v125
  %222 = vmatpush.msra.mxu0 %v124
  %223 = vmatpush.msra.mxu0 %v123
  %224 = vmatpush.msra.mxu0 %v122
  %225 = vmatpush.msra.mxu0 %v121
  %226 = vmatmul.f32.gmra.mxu0 %v68
  %v227 = vpop.f32.mrf.mxu0
  %v228 = vadd.f32 %v205, %v227
  %229 = vmatmul.f32.gmra.mxu0 %v72
  %v230 = vpop.f32.mrf.mxu0
  %v231 = vadd.f32 %v208, %v230
  %232 = vdwg.mxu0
  %v233 = vmax.f32 %v228, 0.0
  %v234 = vmax.f32 %v231, 0.0
  %v235 = vld [vmem:[%s4] sm:$0xff]
  %v236 = vld [vmem:[%s4 + $0x8] sm:$0xff]
  %v237 = vld [vmem:[%s4 + $0x10] sm:$0xff]
  %v238 = vld [vmem:[%s4 + $0x18] sm:$0xff]
  %v239 = vld [vmem:[%s5] sm:$0x1]
  %v241 = vperm.slane %v239, 0
  %vm243 = vcmask 261120
  %v245 = vsel %vm243, %v233, 0
  %v248 = vsel %vm243, %v234, 0
  %250 = vmatpush.msra.mxu0 0.0
  %251 = vmatpush.msra.mxu0 0.0
  %252 = vmatpush.msra.mxu0 0.0
  %253 = vmatpush.msra.mxu0 0.0
  %254 = vmatpush.msra.mxu0 0.0
  %255 = vmatpush.msra.mxu0 0.0
  %256 = vmatpush.msra.mxu0 0.0
  %257 = vmatpush.msra.mxu0 0.0
  %258 = vmatpush.msra.mxu0 0.0
  %259 = vmatpush.msra.mxu0 0.0
  %260 = vmatpush.msra.mxu0 0.0
  %261 = vmatpush.msra.mxu0 0.0
  %262 = vmatpush.msra.mxu0 %v238
  %263 = vmatpush.msra.mxu0 %v237
  %264 = vmatpush.msra.mxu0 %v236
  %265 = vmatpush.msra.mxu0 %v235
  %266 = vmatmul.f32.gmra.mxu0 %v245
  %v267 = vpop.f32.mrf.mxu0
  %v268 = vadd.f32 %v241, %v267
  %269 = vmatmul.f32.gmra.mxu0 %v248
  %v270 = vpop.f32.mrf.mxu0
  %v271 = vadd.f32 %v241, %v270
  %272 = vdwg.mxu0
  %v273 = vmax.f32 %v268, 0.0
  %v274 = vmax.f32 %v271, 0.0
  %v275 = vld [vmem:[%s6] sm:$0xff]
  %v276 = vld [vmem:[%s6 + $0x8] sm:$0xff]
  %v277 = vld [vmem:[%s6 + $0x10] sm:$0xff]
  %v278 = vld [vmem:[%s6 + $0x18] sm:$0xff]
  %v279 = vld [vmem:[%s6 + $0x20] sm:$0xff]
  %v280 = vld [vmem:[%s6 + $0x28] sm:$0xff]
  %v281 = vld [vmem:[%s6 + $0x30] sm:$0xff]
  %v282 = vld [vmem:[%s6 + $0x38] sm:$0xff]
  %v283 = vld [vmem:[%s6 + $0x40] sm:$0xff]
  %v284 = vld [vmem:[%s6 + $0x48] sm:$0xff]
  %v285 = vld [vmem:[%s6 + $0x50] sm:$0xff]
  %v286 = vld [vmem:[%s6 + $0x58] sm:$0xff]
  %v287 = vld [vmem:[%s6 + $0x60] sm:$0xff]
  %v288 = vld [vmem:[%s6 + $0x68] sm:$0xff]
  %v289 = vld [vmem:[%s6 + $0x70] sm:$0xff]
  %v290 = vld [vmem:[%s6 + $0x78] sm:$0xff]
  %v291 = vld [vmem:[%s7] sm:$0x1]
  %v293 = vperm.slane %v291, 0
  %295 = vmatpush.msra.mxu0 %v290
  %296 = vmatpush.msra.mxu0 %v289
  %297 = vmatpush.msra.mxu0 %v288
  %298 = vmatpush.msra.mxu0 %v287
  %299 = vmatpush.msra.mxu0 %v286
  %300 = vmatpush.msra.mxu0 %v285
  %301 = vmatpush.msra.mxu0 %v284
  %302 = vmatpush.msra.mxu0 %v283
  %303 = vmatpush.msra.mxu0 %v282
  %304 = vmatpush.msra.mxu0 %v281
  %305 = vmatpush.msra.mxu0 %v280
  %306 = vmatpush.msra.mxu0 %v279
  %307 = vmatpush.msra.mxu0 %v278
  %308 = vmatpush.msra.mxu0 %v277
  %309 = vmatpush.msra.mxu0 %v276
  %310 = vmatpush.msra.mxu0 %v275
  %311 = vmatmul.f32.gmra.mxu0 %v273
  %v312 = vpop.f32.mrf.mxu0
  %v313 = vadd.f32 %v293, %v312
  %314 = vmatmul.f32.gmra.mxu0 %v274
  %v315 = vpop.f32.mrf.mxu0
  %v316 = vadd.f32 %v293, %v315
  %317 = vdwg.mxu0
  %v318 = vtanh.pop %v313
  %v319 = vtanh.pop %v316
  %320 = vst [vmem:[%s8] sm:$0xff] %v268
  %321 = vst [vmem:[%s8 + $0x8] sm:$0xff] %v271
  %322 = vst [vmem:[%s9] sm:$0xff] %v318
  %323 = vst [vmem:[%s9 + $0x8] sm:$0xff] %v319
  // Predicated region
  $region34: #{channel_selector_forward.3} parent=0 // pred_check
    _
  $region35: #{channel_selector_forward.3} parent=0 // pred_check_branch
    %325 = sbr.rel (0) target = $region37
  $region36: #{channel_selector_forward.3} parent=0 // pred_region
    _
  $region37: #{channel_selector_forward.3} parent=0 // pred_fallthru
    _
  // Predicated region
  $region38: #{channel_selector_forward.3} parent=0 // pred_check
    _
  $region39: #{channel_selector_forward.3} parent=0 // pred_check_branch
    %327 = sbr.rel (0) target = $region41
  $region40: #{channel_selector_forward.3} parent=0 // pred_region
    _
  $region41: #{channel_selector_forward.3} parent=0 // pred_fallthru
    _
  // Predicated region
  $region42: #{channel_selector_forward.3} parent=0 // pred_check
    _
  $region43: #{channel_selector_forward.3} parent=0 // pred_check_branch
    %329 = sbr.rel (0) target = $region45
  $region44: #{channel_selector_forward.3} parent=0 // pred_region
    _
  $region45: #{channel_selector_forward.3} parent=0 // pred_fallthru
    _
  // Predicated region
  $region46: #{channel_selector_forward.3} parent=0 // pred_check
    _
  $region47: #{channel_selector_forward.3} parent=0 // pred_check_branch
    %331 = sbr.rel (0) target = $region49
  $region48: #{channel_selector_forward.3} parent=0 // pred_region
    _
  $region49: #{channel_selector_forward.3} parent=0 // pred_fallthru
    _

// kernel: channel_selector_forward.2
$region0: #{channel_selector_forward.2}
  #allocation0 [shape = 'u32[]', space=smem, size = 0x4, offset = 0x4, fixed_abs, tag = 'smem constant byte address 0x4 - core index']
  #allocation1 [shape = 'u32[72,128]{1,0:T(1,128)}', space=vmem, size = 0x9000, scoped, tag = 'internal scratch']
  #allocation2 [shape = 'f32[16,512]{1,0:T(8,128)}', space=vmem, size = 0x8000, scoped, tag = 'scratch operand']
  %s0 = inlined_call_operand.vmem [shape: bf16[16,3072], index: 0, kind: input, shape index: {}]
  %s1 = inlined_call_operand.hbm [shape: bf16[3072,512], index: 1, kind: input, shape index: {}]
  %s2 = inlined_call_operand.vmem [shape: f32[2,16,512], index: 2, kind: output, shape index: {}]
  %s3 = sld [smem:[#allocation0]]
  $region76: #{channel_selector_forward.2} parent=0
    _
  %s5 = ssub.s32 1, %s3
  %s6 = scalar_select 0, %s5, %s3
  $region1: #{channel_selector_forward.2} parent=0
    #allocation3 [shape = 'u8[98304]{0}', space=vmem, size = 0x18000, scoped, tag = 'input window, operand 0']
    #allocation4 [shape = 'u8[3145728]{0}', space=vmem, size = 0x300000, scoped, tag = 'input window, operand 1']
    #allocation5 [shape = 's32[2]{0}', space=sflag, size = 0x8, scoped, tag = 'scoped memory for channel_selector_forward.2']
    %7 = vsyncpa [#allocation5], 0
    %s8 = scalar_lea.sflag [#allocation5], 1
    %9 = vsyncpa %s8, 0
    loop: start=0, step=1, limit=4
    $region2: #{channel_selector_forward.2} parent=1 // loop_pre_header
      _
    $region3: #{channel_selector_forward.2} parent=1 // loop_header
      %s11 = sphi 0, %s15
      %p12 = scmp.ge.s32.totalorder %s11, 4
      %s18 = sphi 0, %s30
      %s19 = sphi 0, %s26
      %s20 = sphi 0, %s18
      %s21 = sphi 0, %s19
      %s22 = sphi 0, %s20
      %s23 = sphi 0, %s21
      %s35 = sphi 0, %s37
      %s38 = sphi 0, %s35
      %s39 = sphi 0, %s38
      %s55 = sphi 0, %s39
      %s63 = sphi 0, %s65
      %s66 = sphi 0, %s63
      %s67 = sphi 0, %s66
      %s83 = sphi 0, %s67
      %s89 = sphi 0, %s91
      %s92 = sphi 0, %s89
      %s93 = sphi 0, %s92
      %s109 = sphi 0, %s93
    $region4: #{channel_selector_forward.2} parent=1 // loop_header_branch
      %14 = sbr.rel (%p12) target = $region8
    $region5: #{channel_selector_forward.2} parent=1 // loop_body
      %s16 = ssub.s32 %s11, 1
      %s17 = ssub.s32 %s11, 2
      %s24 = sadd.s32 1, %s19
      %p25 = scmp.ge.s32.totalorder %s24, 1
      %s26 = scalar_select %p25, 0, %s24
      %s27 = sadd.s32 1, %s18
      %s28 = scalar_select %p25, %s27, %s18
      %p29 = scmp.ge.s32.totalorder %s28, 2
      %s30 = scalar_select %p29, 0, %s28
      %s31 = sadd.s32 %s18, %s19
      %s32 = sadd.s32 %s30, %s26
      %s33 = ssub.s32 %s31, %s32
      %p34 = scmp.eq.s32.totalorder %s33, 0
      %s36 = sadd.s32 %s35, 1
      %s37 = scalar_select %p34, %s35, %s36
      %p40 = pneg %p34
      %p41 = scmp.eq.s32.totalorder %s11, 1
      %p42 = por %p40, %p41
      %p43 = scmp.ne.s32.totalorder %s35, %s38
      %p44 = scmp.eq.s32.totalorder %s11, 0
      %p45 = por %p43, %p44
      %p46 = scmp.ne.s32.totalorder %s35, %s38
      %p47 = scmp.eq.s32.totalorder %s16, 1
      %p48 = por %p46, %p47
      %p49 = scmp.ne.s32.totalorder %s38, %s39
      %p50 = scmp.eq.s32.totalorder %s16, 0
      %p51 = por %p49, %p50
      %p52 = scmp.ne.s32.totalorder %s38, %s39
      %p53 = scmp.eq.s32.totalorder %s17, 1
      %p54 = por %p52, %p53
      %p56 = scmp.ne.s32.totalorder %s39, %s55
      %p57 = scmp.eq.s32.totalorder %s17, 0
      %p58 = por %p56, %p57
      %s59 = sadd.s32 %s18, %s19
      %s60 = sadd.s32 %s30, %s26
      %s61 = ssub.s32 %s59, %s60
      %p62 = scmp.eq.s32.totalorder %s61, 0
      %s64 = sadd.s32 %s63, 1
      %s65 = scalar_select %p62, %s63, %s64
      %p68 = pneg %p62
      %p69 = scmp.eq.s32.totalorder %s11, 1
      %p70 = por %p68, %p69
      %p71 = scmp.ne.s32.totalorder %s63, %s66
      %p72 = scmp.eq.s32.totalorder %s11, 0
      %p73 = por %p71, %p72
      %p74 = scmp.ne.s32.totalorder %s63, %s66
      %p75 = scmp.eq.s32.totalorder %s16, 1
      %p76 = por %p74, %p75
      %p77 = scmp.ne.s32.totalorder %s66, %s67
      %p78 = scmp.eq.s32.totalorder %s16, 0
      %p79 = por %p77, %p78
      %p80 = scmp.ne.s32.totalorder %s66, %s67
      %p81 = scmp.eq.s32.totalorder %s17, 1
      %p82 = por %p80, %p81
      %p84 = scmp.ne.s32.totalorder %s67, %s83
      %p85 = scmp.eq.s32.totalorder %s17, 0
      %p86 = por %p84, %p85
      %s87 = ssub.s32 %s18, %s30
      %p88 = scmp.eq.s32.totalorder %s87, 0
      %s90 = sadd.s32 %s89, 1
      %s91 = scalar_select %p88, %s89, %s90
      %p94 = pneg %p88
      %p95 = scmp.eq.s32.totalorder %s11, 1
      %p96 = por %p94, %p95
      %p97 = scmp.ne.s32.totalorder %s89, %s92
      %p98 = scmp.eq.s32.totalorder %s11, 0
      %p99 = por %p97, %p98
      %p100 = scmp.ne.s32.totalorder %s89, %s92
      %p101 = scmp.eq.s32.totalorder %s16, 1
      %p102 = por %p100, %p101
      %p103 = scmp.ne.s32.totalorder %s92, %s93
      %p104 = scmp.eq.s32.totalorder %s16, 0
      %p105 = por %p103, %p104
      %p106 = scmp.ne.s32.totalorder %s92, %s93
      %p107 = scmp.eq.s32.totalorder %s17, 1
      %p108 = por %p106, %p107
      %p110 = scmp.ne.s32.totalorder %s93, %s109
      %p111 = scmp.eq.s32.totalorder %s17, 0
      %p112 = por %p110, %p111
      %p113 = scmp.le.s32.totalorder 1, %s11
      %p114 = scmp.lt.s32.totalorder %s11, 3
      %p115 = pnand %p113, %p114
      %p116 = pneg %p115
      // Predicated region
      $region9: #{channel_selector_forward.2} parent=5 // pred_check
        _
      $region10: #{channel_selector_forward.2} parent=5 // pred_check_branch
        %118 = sbr.rel (%p115) target = $region12
      $region11: #{channel_selector_forward.2} parent=5 // pred_region
        %s119 = ssub.s32 %s11, 1
      $region12: #{channel_selector_forward.2} parent=5 // pred_fallthru
        _
      %p120 = scmp.lt.s32.totalorder %s11, 2
      // Predicated region
      $region13: #{channel_selector_forward.2} parent=5 // pred_check
        %p121 = pneg %p120
      $region14: #{channel_selector_forward.2} parent=5 // pred_check_branch
        %123 = sbr.rel (%p121) target = $region16
      $region15: #{channel_selector_forward.2} parent=5 // pred_region
        // Predicated region
        $region17: #{channel_selector_forward.2} parent=15 // pred_check
          %p124 = pneg %p45
        $region18: #{channel_selector_forward.2} parent=15 // pred_check_branch
          %126 = sbr.rel (%p124) target = $region20
        $region19: #{channel_selector_forward.2} parent=15 // pred_region
          %s127 = sand.u32 %s35, 1
          %s128 = sand.u32 %s35, 1
          %s129 = smul.addr %s128, 96
          %s130 = scalar_lea.vmem [#allocation3], %s129
          %s131 = sadd.s32 %s18, %s19
          %s132 = smul.u32 12, %s131
          %s133 = smul.addr %s132, 4
          %s134 = scalar_lea.vmem %s0, %s133
          // Predicated region
          $region21: #{channel_selector_forward.2} parent=19 // pred_check
            _
          $region22: #{channel_selector_forward.2} parent=19 // pred_check_branch
            %136 = sbr.rel (0) target = $region24
          $region23: #{channel_selector_forward.2} parent=19 // pred_region
            // Predicated region
            $region25: #{channel_selector_forward.2} parent=23 // pred_check
              _
            $region26: #{channel_selector_forward.2} parent=23 // pred_check_branch
              %138 = sbr.rel (0) target = $region28
            $region27: #{channel_selector_forward.2} parent=23 // pred_region
              loop: start=0, step=1, limit=1
              $region29: #{channel_selector_forward.2} parent=27 // loop_pre_header
                _
              $region30: #{channel_selector_forward.2} parent=27 // loop_header
                %s140 = sphi 0, %s144
                %p141 = scmp.ge.s32.totalorder %s140, 1
                %s145 = sphi %s134, %s134
                %s146 = sphi %s130, %s130
              $region31: #{channel_selector_forward.2} parent=27 // loop_header_branch
                %143 = sbr.rel (%p141) target = $region35
              $region32: #{channel_selector_forward.2} parent=27 // loop_body
                %v147 = vld [vmem:[%s145] sm:$0xff]
                %148 = vst [vmem:[%s146] sm:$0xff] %v147
                %v149 = vld [vmem:[%s145 + $0x8] sm:$0xff]
                %150 = vst [vmem:[%s146 + $0x8] sm:$0xff] %v149
                %v151 = vld [vmem:[%s145 + $0x10] sm:$0xff]
                %152 = vst [vmem:[%s146 + $0x10] sm:$0xff] %v151
                %v153 = vld [vmem:[%s145 + $0x18] sm:$0xff]
                %154 = vst [vmem:[%s146 + $0x18] sm:$0xff] %v153
                %v155 = vld [vmem:[%s145 + $0x20] sm:$0xff]
                %156 = vst [vmem:[%s146 + $0x20] sm:$0xff] %v155
                %v157 = vld [vmem:[%s145 + $0x28] sm:$0xff]
                %158 = vst [vmem:[%s146 + $0x28] sm:$0xff] %v157
                %v159 = vld [vmem:[%s145 + $0x60] sm:$0xff]
                %160 = vst [vmem:[%s146 + $0x30] sm:$0xff] %v159
                %v161 = vld [vmem:[%s145 + $0x68] sm:$0xff]
                %162 = vst [vmem:[%s146 + $0x38] sm:$0xff] %v161
                %v163 = vld [vmem:[%s145 + $0x70] sm:$0xff]
                %164 = vst [vmem:[%s146 + $0x40] sm:$0xff] %v163
                %v165 = vld [vmem:[%s145 + $0x78] sm:$0xff]
                %166 = vst [vmem:[%s146 + $0x48] sm:$0xff] %v165
                %v167 = vld [vmem:[%s145 + $0x80] sm:$0xff]
                %168 = vst [vmem:[%s146 + $0x50] sm:$0xff] %v167
                %v169 = vld [vmem:[%s145 + $0x88] sm:$0xff]
                %170 = vst [vmem:[%s146 + $0x58] sm:$0xff] %v169
              $region33: #{channel_selector_forward.2} parent=27 // loop_footer
                %s144 = sadd.s32 1, %s140
              $region34: #{channel_selector_forward.2} parent=27 // loop_footer_branch
                %139 = sbr.rel target = $region30
              $region35: #{channel_selector_forward.2} parent=27 // loop_exit
                _
            $region28: #{channel_selector_forward.2} parent=23 // pred_fallthru
              _
            // Predicated region
            $region36: #{channel_selector_forward.2} parent=23 // pred_check
              _
            $region37: #{channel_selector_forward.2} parent=23 // pred_check_branch
              %172 = sbr.rel target = $region39
            $region38: #{channel_selector_forward.2} parent=23 // pred_region
              _
            $region39: #{channel_selector_forward.2} parent=23 // pred_fallthru
              _
          $region24: #{channel_selector_forward.2} parent=19 // pred_fallthru
            _
          %173 = vnop
        $region20: #{channel_selector_forward.2} parent=15 // pred_fallthru
          _
        // Predicated region
        $region40: #{channel_selector_forward.2} parent=15 // pred_check
          %p174 = pneg %p73
        $region41: #{channel_selector_forward.2} parent=15 // pred_check_branch
          %176 = sbr.rel (%p174) target = $region43
        $region42: #{channel_selector_forward.2} parent=15 // pred_region
          %s177 = sand.u32 %s63, 1
          %s178 = scalar_lea.sflag [#allocation5], %s177
          %s179 = sand.u32 %s63, 1
          %s180 = smul.addr %s179, 3072
          %s181 = scalar_lea.vmem [#allocation4], %s180
          %s182 = sadd.s32 %s18, %s19
          %s183 = smul.u32 192, %s182
          %185 = vsyncadd %s178, 0
          %s186 = smul.addr %s183, 4
          %s187 = smul.addr %s186, 4
          %s188 = scalar_lea.hbm %s1, %s187
          %s189 = sshll.u32 %s188, 4
          %s190 = int_to_ptr.hbm [resolvable:$true] %s189
          %s191 = sshll.u32 %s181, 4
          %s192 = int_to_ptr.vmem [resolvable:$true] %s191
          %197 = dma.hbm_to_vmem [thread:$0]  %s190, 49152, %s192, %s178, 256, 256, 16
        $region43: #{channel_selector_forward.2} parent=15 // pred_fallthru
          _
      $region16: #{channel_selector_forward.2} parent=5 // pred_fallthru
        _
      %p198 = scmp.le.s32.totalorder 1, %s11
      %p199 = scmp.lt.s32.totalorder %s11, 3
      %p200 = pnand %p198, %p199
      %p201 = pneg %p200
      // Predicated region
      $region44: #{channel_selector_forward.2} parent=5 // pred_check
        _
      $region45: #{channel_selector_forward.2} parent=5 // pred_check_branch
        %203 = sbr.rel (%p200) target = $region47
      $region46: #{channel_selector_forward.2} parent=5 // pred_region
        %s204 = ssub.s32 %s11, 1
        %s205 = sand.u32 %s38, 1
        %s206 = sand.u32 %s38, 1
        %s207 = smul.addr %s206, 96
        %s208 = scalar_lea.vmem [#allocation3], %s207
        // Predicated region
        $region48: #{channel_selector_forward.2} parent=46 // pred_check
          %p209 = pneg %p51
        $region49: #{channel_selector_forward.2} parent=46 // pred_check_branch
          %211 = sbr.rel (%p209) target = $region51
        $region50: #{channel_selector_forward.2} parent=46 // pred_region
          _
        $region51: #{channel_selector_forward.2} parent=46 // pred_fallthru
          _
        %s212 = sand.u32 %s66, 1
        %s213 = scalar_lea.sflag [#allocation5], %s212
        %s214 = sand.u32 %s66, 1
        %s215 = smul.addr %s214, 3072
        %s216 = scalar_lea.vmem [#allocation4], %s215
        // Predicated region
        $region52: #{channel_selector_forward.2} parent=46 // pred_check
          %p217 = pneg %p79
        $region53: #{channel_selector_forward.2} parent=46 // pred_check_branch
          %219 = sbr.rel (%p217) target = $region55
        $region54: #{channel_selector_forward.2} parent=46 // pred_region
          %221 = dma.done %s213, 49152
        $region55: #{channel_selector_forward.2} parent=46 // pred_fallthru
          _
        %s222 = sand.u32 %s38, 1
        %s223 = sand.u32 %s38, 1
        %s224 = smul.addr %s223, 96
        %s225 = scalar_lea.vmem [#allocation3], %s224
        %p226 = pneg %p51
        %p227 = pneg %p48
        %s228 = sand.u32 %s66, 1
        %s229 = scalar_lea.sflag [#allocation5], %s228
        %s230 = sand.u32 %s66, 1
        %s231 = smul.addr %s230, 3072
        %s232 = scalar_lea.vmem [#allocation4], %s231
        %p233 = pneg %p79
        %p234 = pneg %p76
        %p235 = pneg %p105
        %p236 = pneg %p102
        %p237 = scmp.lt.s32.totalorder %s20, 1
        %s238 = scalar_select %p237, %s20, 1
        %s239 = smul.addr %s238, 8
        %s240 = smul.addr %s239, 8
        %s241 = scalar_lea.vmem %s2, %s240
        %s242 = sadd.s32 %s20, %s21
        %s243 = smul.u32 12, %s242
        %s244 = sadd.s32 %s20, %s21
        %s245 = smul.u32 192, %s244
        %p246 = scmp.lt.s32.totalorder %s20, 1
        %s247 = scalar_select %p246, %s20, 1
        %s248 = smul.addr %s247, 8
        %s249 = smul.addr %s248, 8
        %s250 = scalar_lea.vmem %s2, %s249
        %p251 = scmp.eq.s32.totalorder %s21, 0
        // Predicated region
        $region56: #{channel_selector_forward.2} parent=46 // pred_check
          %p252 = pneg %p251
        $region57: #{channel_selector_forward.2} parent=46 // pred_check_branch
          %254 = sbr.rel (%p252) target = $region59
        $region58: #{channel_selector_forward.2} parent=46 // pred_region
          %255 = vst [vmem:[#allocation2] sm:$0xff] 0.0
          %256 = vst [vmem:[#allocation2 + $0x8] sm:$0xff] 0.0
          %257 = vst [vmem:[#allocation2 + $0x10] sm:$0xff] 0.0
          %258 = vst [vmem:[#allocation2 + $0x18] sm:$0xff] 0.0
          %259 = vst [vmem:[#allocation2 + $0x20] sm:$0xff] 0.0
          %260 = vst [vmem:[#allocation2 + $0x28] sm:$0xff] 0.0
          %261 = vst [vmem:[#allocation2 + $0x30] sm:$0xff] 0.0
          %262 = vst [vmem:[#allocation2 + $0x38] sm:$0xff] 0.0
        $region59: #{channel_selector_forward.2} parent=46 // pred_fallthru
          _
        %v263 = vld [vmem:[#allocation2] sm:$0xff]
        %v264 = vld [vmem:[#allocation2 + $0x8] sm:$0xff]
        %v265 = vld [vmem:[#allocation2 + $0x10] sm:$0xff]
        %v266 = vld [vmem:[#allocation2 + $0x18] sm:$0xff]
        %v267 = vld [vmem:[#allocation2 + $0x20] sm:$0xff]
        %v268 = vld [vmem:[#allocation2 + $0x28] sm:$0xff]
        %v269 = vld [vmem:[#allocation2 + $0x30] sm:$0xff]
        %v270 = vld [vmem:[#allocation2 + $0x38] sm:$0xff]
        %v271 = vld [vmem:[%s208] sm:$0xff]
        %v272 = vld [vmem:[%s208 + $0x8] sm:$0xff]
        %v273 = vld [vmem:[%s208 + $0x10] sm:$0xff]
        %v274 = vld [vmem:[%s208 + $0x18] sm:$0xff]
        %v275 = vld [vmem:[%s208 + $0x20] sm:$0xff]
        %v276 = vld [vmem:[%s208 + $0x28] sm:$0xff]
        %v277 = vld [vmem:[%s208 + $0x30] sm:$0xff]
        %v278 = vld [vmem:[%s208 + $0x38] sm:$0xff]
        %v279 = vld [vmem:[%s208 + $0x40] sm:$0xff]
        %v280 = vld [vmem:[%s208 + $0x48] sm:$0xff]
        %v281 = vld [vmem:[%s208 + $0x50] sm:$0xff]
        %v282 = vld [vmem:[%s208 + $0x58] sm:$0xff]
        %v283 = vld [vmem:[%s216] sm:$0xff]
        %v284 = vld [vmem:[%s216 + $0x8] sm:$0xff]
        %v285 = vld [vmem:[%s216 + $0x10] sm:$0xff]
        %v286 = vld [vmem:[%s216 + $0x18] sm:$0xff]
        %v287 = vld [vmem:[%s216 + $0x20] sm:$0xff]
        %v288 = vld [vmem:[%s216 + $0x28] sm:$0xff]
        %v289 = vld [vmem:[%s216 + $0x30] sm:$0xff]
        %v290 = vld [vmem:[%s216 + $0x38] sm:$0xff]
        %v291 = vld [vmem:[%s216 + $0x40] sm:$0xff]
        %v292 = vld [vmem:[%s216 + $0x48] sm:$0xff]
        %v293 = vld [vmem:[%s216 + $0x50] sm:$0xff]
        %v294 = vld [vmem:[%s216 + $0x58] sm:$0xff]
        %v295 = vld [vmem:[%s216 + $0x60] sm:$0xff]
        %v296 = vld [vmem:[%s216 + $0x68] sm:$0xff]
        %v297 = vld [vmem:[%s216 + $0x70] sm:$0xff]
        %v298 = vld [vmem:[%s216 + $0x78] sm:$0xff]
        %v299 = vld [vmem:[%s216 + $0x80] sm:$0xff]
        %v300 = vld [vmem:[%s216 + $0x88] sm:$0xff]
        %v301 = vld [vmem:[%s216 + $0x90] sm:$0xff]
        %v302 = vld [vmem:[%s216 + $0x98] sm:$0xff]
        %v303 = vld [vmem:[%s216 + $0xa0] sm:$0xff]
        %v304 = vld [vmem:[%s216 + $0xa8] sm:$0xff]
        %v305 = vld [vmem:[%s216 + $0xb0] sm:$0xff]
        %v306 = vld [vmem:[%s216 + $0xb8] sm:$0xff]
        %v307 = vld [vmem:[%s216 + $0xc0] sm:$0xff]
        %v308 = vld [vmem:[%s216 + $0xc8] sm:$0xff]
        %v309 = vld [vmem:[%s216 + $0xd0] sm:$0xff]
        %v310 = vld [vmem:[%s216 + $0xd8] sm:$0xff]
        %v311 = vld [vmem:[%s216 + $0xe0] sm:$0xff]
        %v312 = vld [vmem:[%s216 + $0xe8] sm:$0xff]
        %v313 = vld [vmem:[%s216 + $0xf0] sm:$0xff]
        %v314 = vld [vmem:[%s216 + $0xf8] sm:$0xff]
        %v315 = vld [vmem:[%s216 + $0x100] sm:$0xff]
        %v316 = vld [vmem:[%s216 + $0x108] sm:$0xff]
        %v317 = vld [vmem:[%s216 + $0x110] sm:$0xff]
        %v318 = vld [vmem:[%s216 + $0x118] sm:$0xff]
        %v319 = vld [vmem:[%s216 + $0x120] sm:$0xff]
        %v320 = vld [vmem:[%s216 + $0x128] sm:$0xff]
        %v321 = vld [vmem:[%s216 + $0x130] sm:$0xff]
        %v322 = vld [vmem:[%s216 + $0x138] sm:$0xff]
        %v323 = vld [vmem:[%s216 + $0x140] sm:$0xff]
        %v324 = vld [vmem:[%s216 + $0x148] sm:$0xff]
        %v325 = vld [vmem:[%s216 + $0x150] sm:$0xff]
        %v326 = vld [vmem:[%s216 + $0x158] sm:$0xff]
        %v327 = vld [vmem:[%s216 + $0x160] sm:$0xff]
        %v328 = vld [vmem:[%s216 + $0x168] sm:$0xff]
        %v329 = vld [vmem:[%s216 + $0x170] sm:$0xff]
        %v330 = vld [vmem:[%s216 + $0x178] sm:$0xff]
        %v331 = vld [vmem:[%s216 + $0x180] sm:$0xff]
        %v332 = vld [vmem:[%s216 + $0x188] sm:$0xff]
        %v333 = vld [vmem:[%s216 + $0x190] sm:$0xff]
        %v334 = vld [vmem:[%s216 + $0x198] sm:$0xff]
        %v335 = vld [vmem:[%s216 + $0x1a0] sm:$0xff]
        %v336 = vld [vmem:[%s216 + $0x1a8] sm:$0xff]
        %v337 = vld [vmem:[%s216 + $0x1b0] sm:$0xff]
        %v338 = vld [vmem:[%s216 + $0x1b8] sm:$0xff]
        %v339 = vld [vmem:[%s216 + $0x1c0] sm:$0xff]
        %v340 = vld [vmem:[%s216 + $0x1c8] sm:$0xff]
        %v341 = vld [vmem:[%s216 + $0x1d0] sm:$0xff]
        %v342 = vld [vmem:[%s216 + $0x1d8] sm:$0xff]
        %v343 = vld [vmem:[%s216 + $0x1e0] sm:$0xff]
        %v344 = vld [vmem:[%s216 + $0x1e8] sm:$0xff]
        %v345 = vld [vmem:[%s216 + $0x1f0] sm:$0xff]
        %v346 = vld [vmem:[%s216 + $0x1f8] sm:$0xff]
        %v347 = vld [vmem:[%s216 + $0x200] sm:$0xff]
        %v348 = vld [vmem:[%s216 + $0x208] sm:$0xff]
        %v349 = vld [vmem:[%s216 + $0x210] sm:$0xff]
        %v350 = vld [vmem:[%s216 + $0x218] sm:$0xff]
        %v351 = vld [vmem:[%s216 + $0x220] sm:$0xff]
        %v352 = vld [vmem:[%s216 + $0x228] sm:$0xff]
        %v353 = vld [vmem:[%s216 + $0x230] sm:$0xff]
        %v354 = vld [vmem:[%s216 + $0x238] sm:$0xff]
        %v355 = vld [vmem:[%s216 + $0x240] sm:$0xff]
        %v356 = vld [vmem:[%s216 + $0x248] sm:$0xff]
        %v357 = vld [vmem:[%s216 + $0x250] sm:$0xff]
        %v358 = vld [vmem:[%s216 + $0x258] sm:$0xff]
        %v359 = vld [vmem:[%s216 + $0x260] sm:$0xff]
        %v360 = vld [vmem:[%s216 + $0x268] sm:$0xff]
        %v361 = vld [vmem:[%s216 + $0x270] sm:$0xff]
        %v362 = vld [vmem:[%s216 + $0x278] sm:$0xff]
        %v363 = vld [vmem:[%s216 + $0x280] sm:$0xff]
        %v364 = vld [vmem:[%s216 + $0x288] sm:$0xff]
        %v365 = vld [vmem:[%s216 + $0x290] sm:$0xff]
        %v366 = vld [vmem:[%s216 + $0x298] sm:$0xff]
        %v367 = vld [vmem:[%s216 + $0x2a0] sm:$0xff]
        %v368 = vld [vmem:[%s216 + $0x2a8] sm:$0xff]
        %v369 = vld [vmem:[%s216 + $0x2b0] sm:$0xff]
        %v370 = vld [vmem:[%s216 + $0x2b8] sm:$0xff]
        %v371 = vld [vmem:[%s216 + $0x2c0] sm:$0xff]
        %v372 = vld [vmem:[%s216 + $0x2c8] sm:$0xff]
        %v373 = vld [vmem:[%s216 + $0x2d0] sm:$0xff]
        %v374 = vld [vmem:[%s216 + $0x2d8] sm:$0xff]
        %v375 = vld [vmem:[%s216 + $0x2e0] sm:$0xff]
        %v376 = vld [vmem:[%s216 + $0x2e8] sm:$0xff]
        %v377 = vld [vmem:[%s216 + $0x2f0] sm:$0xff]
        %v378 = vld [vmem:[%s216 + $0x2f8] sm:$0xff]
        %v379 = vld [vmem:[%s216 + $0x300] sm:$0xff]
        %v380 = vld [vmem:[%s216 + $0x308] sm:$0xff]
        %v381 = vld [vmem:[%s216 + $0x310] sm:$0xff]
        %v382 = vld [vmem:[%s216 + $0x318] sm:$0xff]
        %v383 = vld [vmem:[%s216 + $0x320] sm:$0xff]
        %v384 = vld [vmem:[%s216 + $0x328] sm:$0xff]
        %v385 = vld [vmem:[%s216 + $0x330] sm:$0xff]
        %v386 = vld [vmem:[%s216 + $0x338] sm:$0xff]
        %v387 = vld [vmem:[%s216 + $0x340] sm:$0xff]
        %v388 = vld [vmem:[%s216 + $0x348] sm:$0xff]
        %v389 = vld [vmem:[%s216 + $0x350] sm:$0xff]
        %v390 = vld [vmem:[%s216 + $0x358] sm:$0xff]
        %v391 = vld [vmem:[%s216 + $0x360] sm:$0xff]
        %v392 = vld [vmem:[%s216 + $0x368] sm:$0xff]
        %v393 = vld [vmem:[%s216 + $0x370] sm:$0xff]
        %v394 = vld [vmem:[%s216 + $0x378] sm:$0xff]
        %v395 = vld [vmem:[%s216 + $0x380] sm:$0xff]
        %v396 = vld [vmem:[%s216 + $0x388] sm:$0xff]
        %v397 = vld [vmem:[%s216 + $0x390] sm:$0xff]
        %v398 = vld [vmem:[%s216 + $0x398] sm:$0xff]
        %v399 = vld [vmem:[%s216 + $0x3a0] sm:$0xff]
        %v400 = vld [vmem:[%s216 + $0x3a8] sm:$0xff]
        %v401 = vld [vmem:[%s216 + $0x3b0] sm:$0xff]
        %v402 = vld [vmem:[%s216 + $0x3b8] sm:$0xff]
        %v403 = vld [vmem:[%s216 + $0x3c0] sm:$0xff]
        %v404 = vld [vmem:[%s216 + $0x3c8] sm:$0xff]
        %v405 = vld [vmem:[%s216 + $0x3d0] sm:$0xff]
        %v406 = vld [vmem:[%s216 + $0x3d8] sm:$0xff]
        %v407 = vld [vmem:[%s216 + $0x3e0] sm:$0xff]
        %v408 = vld [vmem:[%s216 + $0x3e8] sm:$0xff]
        %v409 = vld [vmem:[%s216 + $0x3f0] sm:$0xff]
        %v410 = vld [vmem:[%s216 + $0x3f8] sm:$0xff]
        %v411 = vld [vmem:[%s216 + $0x400] sm:$0xff]
        %v412 = vld [vmem:[%s216 + $0x408] sm:$0xff]
        %v413 = vld [vmem:[%s216 + $0x410] sm:$0xff]
        %v414 = vld [vmem:[%s216 + $0x418] sm:$0xff]
        %v415 = vld [vmem:[%s216 + $0x420] sm:$0xff]
        %v416 = vld [vmem:[%s216 + $0x428] sm:$0xff]
        %v417 = vld [vmem:[%s216 + $0x430] sm:$0xff]
        %v418 = vld [vmem:[%s216 + $0x438] sm:$0xff]
        %v419 = vld [vmem:[%s216 + $0x440] sm:$0xff]
        %v420 = vld [vmem:[%s216 + $0x448] sm:$0xff]
        %v421 = vld [vmem:[%s216 + $0x450] sm:$0xff]
        %v422 = vld [vmem:[%s216 + $0x458] sm:$0xff]
        %v423 = vld [vmem:[%s216 + $0x460] sm:$0xff]
        %v424 = vld [vmem:[%s216 + $0x468] sm:$0xff]
        %v425 = vld [vmem:[%s216 + $0x470] sm:$0xff]
        %v426 = vld [vmem:[%s216 + $0x478] sm:$0xff]
        %v427 = vld [vmem:[%s216 + $0x480] sm:$0xff]
        %v428 = vld [vmem:[%s216 + $0x488] sm:$0xff]
        %v429 = vld [vmem:[%s216 + $0x490] sm:$0xff]
        %v430 = vld [vmem:[%s216 + $0x498] sm:$0xff]
        %v431 = vld [vmem:[%s216 + $0x4a0] sm:$0xff]
        %v432 = vld [vmem:[%s216 + $0x4a8] sm:$0xff]
        %v433 = vld [vmem:[%s216 + $0x4b0] sm:$0xff]
        %v434 = vld [vmem:[%s216 + $0x4b8] sm:$0xff]
        %v435 = vld [vmem:[%s216 + $0x4c0] sm:$0xff]
        %v436 = vld [vmem:[%s216 + $0x4c8] sm:$0xff]
        %v437 = vld [vmem:[%s216 + $0x4d0] sm:$0xff]
        %v438 = vld [vmem:[%s216 + $0x4d8] sm:$0xff]
        %v439 = vld [vmem:[%s216 + $0x4e0] sm:$0xff]
        %v440 = vld [vmem:[%s216 + $0x4e8] sm:$0xff]
        %v441 = vld [vmem:[%s216 + $0x4f0] sm:$0xff]
        %v442 = vld [vmem:[%s216 + $0x4f8] sm:$0xff]
        %v443 = vld [vmem:[%s216 + $0x500] sm:$0xff]
        %v444 = vld [vmem:[%s216 + $0x508] sm:$0xff]
        %v445 = vld [vmem:[%s216 + $0x510] sm:$0xff]
        %v446 = vld [vmem:[%s216 + $0x518] sm:$0xff]
        %v447 = vld [vmem:[%s216 + $0x520] sm:$0xff]
        %v448 = vld [vmem:[%s216 + $0x528] sm:$0xff]
        %v449 = vld [vmem:[%s216 + $0x530] sm:$0xff]
        %v450 = vld [vmem:[%s216 + $0x538] sm:$0xff]
        %v451 = vld [vmem:[%s216 + $0x540] sm:$0xff]
        %v452 = vld [vmem:[%s216 + $0x548] sm:$0xff]
        %v453 = vld [vmem:[%s216 + $0x550] sm:$0xff]
        %v454 = vld [vmem:[%s216 + $0x558] sm:$0xff]
        %v455 = vld [vmem:[%s216 + $0x560] sm:$0xff]
        %v456 = vld [vmem:[%s216 + $0x568] sm:$0xff]
        %v457 = vld [vmem:[%s216 + $0x570] sm:$0xff]
        %v458 = vld [vmem:[%s216 + $0x578] sm:$0xff]
        %v459 = vld [vmem:[%s216 + $0x580] sm:$0xff]
        %v460 = vld [vmem:[%s216 + $0x588] sm:$0xff]
        %v461 = vld [vmem:[%s216 + $0x590] sm:$0xff]
        %v462 = vld [vmem:[%s216 + $0x598] sm:$0xff]
        %v463 = vld [vmem:[%s216 + $0x5a0] sm:$0xff]
        %v464 = vld [vmem:[%s216 + $0x5a8] sm:$0xff]
        %v465 = vld [vmem:[%s216 + $0x5b0] sm:$0xff]
        %v466 = vld [vmem:[%s216 + $0x5b8] sm:$0xff]
        %v467 = vld [vmem:[%s216 + $0x5c0] sm:$0xff]
        %v468 = vld [vmem:[%s216 + $0x5c8] sm:$0xff]
        %v469 = vld [vmem:[%s216 + $0x5d0] sm:$0xff]
        %v470 = vld [vmem:[%s216 + $0x5d8] sm:$0xff]
        %v471 = vld [vmem:[%s216 + $0x5e0] sm:$0xff]
        %v472 = vld [vmem:[%s216 + $0x5e8] sm:$0xff]
        %v473 = vld [vmem:[%s216 + $0x5f0] sm:$0xff]
        %v474 = vld [vmem:[%s216 + $0x5f8] sm:$0xff]
        %v475 = vld [vmem:[%s216 + $0x600] sm:$0xff]
        %v476 = vld [vmem:[%s216 + $0x608] sm:$0xff]
        %v477 = vld [vmem:[%s216 + $0x610] sm:$0xff]
        %v478 = vld [vmem:[%s216 + $0x618] sm:$0xff]
        %v479 = vld [vmem:[%s216 + $0x620] sm:$0xff]
        %v480 = vld [vmem:[%s216 + $0x628] sm:$0xff]
        %v481 = vld [vmem:[%s216 + $0x630] sm:$0xff]
        %v482 = vld [vmem:[%s216 + $0x638] sm:$0xff]
        %v483 = vld [vmem:[%s216 + $0x640] sm:$0xff]
        %v484 = vld [vmem:[%s216 + $0x648] sm:$0xff]
        %v485 = vld [vmem:[%s216 + $0x650] sm:$0xff]
        %v486 = vld [vmem:[%s216 + $0x658] sm:$0xff]
        %v487 = vld [vmem:[%s216 + $0x660] sm:$0xff]
        %v488 = vld [vmem:[%s216 + $0x668] sm:$0xff]
        %v489 = vld [vmem:[%s216 + $0x670] sm:$0xff]
        %v490 = vld [vmem:[%s216 + $0x678] sm:$0xff]
        %v491 = vld [vmem:[%s216 + $0x680] sm:$0xff]
        %v492 = vld [vmem:[%s216 + $0x688] sm:$0xff]
        %v493 = vld [vmem:[%s216 + $0x690] sm:$0xff]
        %v494 = vld [vmem:[%s216 + $0x698] sm:$0xff]
        %v495 = vld [vmem:[%s216 + $0x6a0] sm:$0xff]
        %v496 = vld [vmem:[%s216 + $0x6a8] sm:$0xff]
        %v497 = vld [vmem:[%s216 + $0x6b0] sm:$0xff]
        %v498 = vld [vmem:[%s216 + $0x6b8] sm:$0xff]
        %v499 = vld [vmem:[%s216 + $0x6c0] sm:$0xff]
        %v500 = vld [vmem:[%s216 + $0x6c8] sm:$0xff]
        %v501 = vld [vmem:[%s216 + $0x6d0] sm:$0xff]
        %v502 = vld [vmem:[%s216 + $0x6d8] sm:$0xff]
        %v503 = vld [vmem:[%s216 + $0x6e0] sm:$0xff]
        %v504 = vld [vmem:[%s216 + $0x6e8] sm:$0xff]
        %v505 = vld [vmem:[%s216 + $0x6f0] sm:$0xff]
        %v506 = vld [vmem:[%s216 + $0x6f8] sm:$0xff]
        %v507 = vld [vmem:[%s216 + $0x700] sm:$0xff]
        %v508 = vld [vmem:[%s216 + $0x708] sm:$0xff]
        %v509 = vld [vmem:[%s216 + $0x710] sm:$0xff]
        %v510 = vld [vmem:[%s216 + $0x718] sm:$0xff]
        %v511 = vld [vmem:[%s216 + $0x720] sm:$0xff]
        %v512 = vld [vmem:[%s216 + $0x728] sm:$0xff]
        %v513 = vld [vmem:[%s216 + $0x730] sm:$0xff]
        %v514 = vld [vmem:[%s216 + $0x738] sm:$0xff]
        %v515 = vld [vmem:[%s216 + $0x740] sm:$0xff]
        %v516 = vld [vmem:[%s216 + $0x748] sm:$0xff]
        %v517 = vld [vmem:[%s216 + $0x750] sm:$0xff]
        %v518 = vld [vmem:[%s216 + $0x758] sm:$0xff]
        %v519 = vld [vmem:[%s216 + $0x760] sm:$0xff]
        %v520 = vld [vmem:[%s216 + $0x768] sm:$0xff]
        %v521 = vld [vmem:[%s216 + $0x770] sm:$0xff]
        %v522 = vld [vmem:[%s216 + $0x778] sm:$0xff]
        %v523 = vld [vmem:[%s216 + $0x780] sm:$0xff]
        %v524 = vld [vmem:[%s216 + $0x788] sm:$0xff]
        %v525 = vld [vmem:[%s216 + $0x790] sm:$0xff]
        %v526 = vld [vmem:[%s216 + $0x798] sm:$0xff]
        %v527 = vld [vmem:[%s216 + $0x7a0] sm:$0xff]
        %v528 = vld [vmem:[%s216 + $0x7a8] sm:$0xff]
        %v529 = vld [vmem:[%s216 + $0x7b0] sm:$0xff]
        %v530 = vld [vmem:[%s216 + $0x7b8] sm:$0xff]
        %v531 = vld [vmem:[%s216 + $0x7c0] sm:$0xff]
        %v532 = vld [vmem:[%s216 + $0x7c8] sm:$0xff]
        %v533 = vld [vmem:[%s216 + $0x7d0] sm:$0xff]
        %v534 = vld [vmem:[%s216 + $0x7d8] sm:$0xff]
        %v535 = vld [vmem:[%s216 + $0x7e0] sm:$0xff]
        %v536 = vld [vmem:[%s216 + $0x7e8] sm:$0xff]
        %v537 = vld [vmem:[%s216 + $0x7f0] sm:$0xff]
        %v538 = vld [vmem:[%s216 + $0x7f8] sm:$0xff]
        %v539 = vld [vmem:[%s216 + $0x800] sm:$0xff]
        %v540 = vld [vmem:[%s216 + $0x808] sm:$0xff]
        %v541 = vld [vmem:[%s216 + $0x810] sm:$0xff]
        %v542 = vld [vmem:[%s216 + $0x818] sm:$0xff]
        %v543 = vld [vmem:[%s216 + $0x820] sm:$0xff]
        %v544 = vld [vmem:[%s216 + $0x828] sm:$0xff]
        %v545 = vld [vmem:[%s216 + $0x830] sm:$0xff]
        %v546 = vld [vmem:[%s216 + $0x838] sm:$0xff]
        %v547 = vld [vmem:[%s216 + $0x840] sm:$0xff]
        %v548 = vld [vmem:[%s216 + $0x848] sm:$0xff]
        %v549 = vld [vmem:[%s216 + $0x850] sm:$0xff]
        %v550 = vld [vmem:[%s216 + $0x858] sm:$0xff]
        %v551 = vld [vmem:[%s216 + $0x860] sm:$0xff]
        %v552 = vld [vmem:[%s216 + $0x868] sm:$0xff]
        %v553 = vld [vmem:[%s216 + $0x870] sm:$0xff]
        %v554 = vld [vmem:[%s216 + $0x878] sm:$0xff]
        %v555 = vld [vmem:[%s216 + $0x880] sm:$0xff]
        %v556 = vld [vmem:[%s216 + $0x888] sm:$0xff]
        %v557 = vld [vmem:[%s216 + $0x890] sm:$0xff]
        %v558 = vld [vmem:[%s216 + $0x898] sm:$0xff]
        %v559 = vld [vmem:[%s216 + $0x8a0] sm:$0xff]
        %v560 = vld [vmem:[%s216 + $0x8a8] sm:$0xff]
        %v561 = vld [vmem:[%s216 + $0x8b0] sm:$0xff]
        %v562 = vld [vmem:[%s216 + $0x8b8] sm:$0xff]
        %v563 = vld [vmem:[%s216 + $0x8c0] sm:$0xff]
        %v564 = vld [vmem:[%s216 + $0x8c8] sm:$0xff]
        %v565 = vld [vmem:[%s216 + $0x8d0] sm:$0xff]
        %v566 = vld [vmem:[%s216 + $0x8d8] sm:$0xff]
        %v567 = vld [vmem:[%s216 + $0x8e0] sm:$0xff]
        %v568 = vld [vmem:[%s216 + $0x8e8] sm:$0xff]
        %v569 = vld [vmem:[%s216 + $0x8f0] sm:$0xff]
        %v570 = vld [vmem:[%s216 + $0x8f8] sm:$0xff]
        %v571 = vld [vmem:[%s216 + $0x900] sm:$0xff]
        %v572 = vld [vmem:[%s216 + $0x908] sm:$0xff]
        %v573 = vld [vmem:[%s216 + $0x910] sm:$0xff]
        %v574 = vld [vmem:[%s216 + $0x918] sm:$0xff]
        %v575 = vld [vmem:[%s216 + $0x920] sm:$0xff]
        %v576 = vld [vmem:[%s216 + $0x928] sm:$0xff]
        %v577 = vld [vmem:[%s216 + $0x930] sm:$0xff]
        %v578 = vld [vmem:[%s216 + $0x938] sm:$0xff]
        %v579 = vld [vmem:[%s216 + $0x940] sm:$0xff]
        %v580 = vld [vmem:[%s216 + $0x948] sm:$0xff]
        %v581 = vld [vmem:[%s216 + $0x950] sm:$0xff]
        %v582 = vld [vmem:[%s216 + $0x958] sm:$0xff]
        %v583 = vld [vmem:[%s216 + $0x960] sm:$0xff]
        %v584 = vld [vmem:[%s216 + $0x968] sm:$0xff]
        %v585 = vld [vmem:[%s216 + $0x970] sm:$0xff]
        %v586 = vld [vmem:[%s216 + $0x978] sm:$0xff]
        %v587 = vld [vmem:[%s216 + $0x980] sm:$0xff]
        %v588 = vld [vmem:[%s216 + $0x988] sm:$0xff]
        %v589 = vld [vmem:[%s216 + $0x990] sm:$0xff]
        %v590 = vld [vmem:[%s216 + $0x998] sm:$0xff]
        %v591 = vld [vmem:[%s216 + $0x9a0] sm:$0xff]
        %v592 = vld [vmem:[%s216 + $0x9a8] sm:$0xff]
        %v593 = vld [vmem:[%s216 + $0x9b0] sm:$0xff]
        %v594 = vld [vmem:[%s216 + $0x9b8] sm:$0xff]
        %v595 = vld [vmem:[%s216 + $0x9c0] sm:$0xff]
        %v596 = vld [vmem:[%s216 + $0x9c8] sm:$0xff]
        %v597 = vld [vmem:[%s216 + $0x9d0] sm:$0xff]
        %v598 = vld [vmem:[%s216 + $0x9d8] sm:$0xff]
        %v599 = vld [vmem:[%s216 + $0x9e0] sm:$0xff]
        %v600 = vld [vmem:[%s216 + $0x9e8] sm:$0xff]
        %v601 = vld [vmem:[%s216 + $0x9f0] sm:$0xff]
        %v602 = vld [vmem:[%s216 + $0x9f8] sm:$0xff]
        %v603 = vld [vmem:[%s216 + $0xa00] sm:$0xff]
        %v604 = vld [vmem:[%s216 + $0xa08] sm:$0xff]
        %v605 = vld [vmem:[%s216 + $0xa10] sm:$0xff]
        %v606 = vld [vmem:[%s216 + $0xa18] sm:$0xff]
        %v607 = vld [vmem:[%s216 + $0xa20] sm:$0xff]
        %v608 = vld [vmem:[%s216 + $0xa28] sm:$0xff]
        %v609 = vld [vmem:[%s216 + $0xa30] sm:$0xff]
        %v610 = vld [vmem:[%s216 + $0xa38] sm:$0xff]
        %v611 = vld [vmem:[%s216 + $0xa40] sm:$0xff]
        %v612 = vld [vmem:[%s216 + $0xa48] sm:$0xff]
        %v613 = vld [vmem:[%s216 + $0xa50] sm:$0xff]
        %v614 = vld [vmem:[%s216 + $0xa58] sm:$0xff]
        %v615 = vld [vmem:[%s216 + $0xa60] sm:$0xff]
        %v616 = vld [vmem:[%s216 + $0xa68] sm:$0xff]
        %v617 = vld [vmem:[%s216 + $0xa70] sm:$0xff]
        %v618 = vld [vmem:[%s216 + $0xa78] sm:$0xff]
        %v619 = vld [vmem:[%s216 + $0xa80] sm:$0xff]
        %v620 = vld [vmem:[%s216 + $0xa88] sm:$0xff]
        %v621 = vld [vmem:[%s216 + $0xa90] sm:$0xff]
        %v622 = vld [vmem:[%s216 + $0xa98] sm:$0xff]
        %v623 = vld [vmem:[%s216 + $0xaa0] sm:$0xff]
        %v624 = vld [vmem:[%s216 + $0xaa8] sm:$0xff]
        %v625 = vld [vmem:[%s216 + $0xab0] sm:$0xff]
        %v626 = vld [vmem:[%s216 + $0xab8] sm:$0xff]
        %v627 = vld [vmem:[%s216 + $0xac0] sm:$0xff]
        %v628 = vld [vmem:[%s216 + $0xac8] sm:$0xff]
        %v629 = vld [vmem:[%s216 + $0xad0] sm:$0xff]
        %v630 = vld [vmem:[%s216 + $0xad8] sm:$0xff]
        %v631 = vld [vmem:[%s216 + $0xae0] sm:$0xff]
        %v632 = vld [vmem:[%s216 + $0xae8] sm:$0xff]
        %v633 = vld [vmem:[%s216 + $0xaf0] sm:$0xff]
        %v634 = vld [vmem:[%s216 + $0xaf8] sm:$0xff]
        %v635 = vld [vmem:[%s216 + $0xb00] sm:$0xff]
        %v636 = vld [vmem:[%s216 + $0xb08] sm:$0xff]
        %v637 = vld [vmem:[%s216 + $0xb10] sm:$0xff]
        %v638 = vld [vmem:[%s216 + $0xb18] sm:$0xff]
        %v639 = vld [vmem:[%s216 + $0xb20] sm:$0xff]
        %v640 = vld [vmem:[%s216 + $0xb28] sm:$0xff]
        %v641 = vld [vmem:[%s216 + $0xb30] sm:$0xff]
        %v642 = vld [vmem:[%s216 + $0xb38] sm:$0xff]
        %v643 = vld [vmem:[%s216 + $0xb40] sm:$0xff]
        %v644 = vld [vmem:[%s216 + $0xb48] sm:$0xff]
        %v645 = vld [vmem:[%s216 + $0xb50] sm:$0xff]
        %v646 = vld [vmem:[%s216 + $0xb58] sm:$0xff]
        %v647 = vld [vmem:[%s216 + $0xb60] sm:$0xff]
        %v648 = vld [vmem:[%s216 + $0xb68] sm:$0xff]
        %v649 = vld [vmem:[%s216 + $0xb70] sm:$0xff]
        %v650 = vld [vmem:[%s216 + $0xb78] sm:$0xff]
        %v651 = vld [vmem:[%s216 + $0xb80] sm:$0xff]
        %v652 = vld [vmem:[%s216 + $0xb88] sm:$0xff]
        %v653 = vld [vmem:[%s216 + $0xb90] sm:$0xff]
        %v654 = vld [vmem:[%s216 + $0xb98] sm:$0xff]
        %v655 = vld [vmem:[%s216 + $0xba0] sm:$0xff]
        %v656 = vld [vmem:[%s216 + $0xba8] sm:$0xff]
        %v657 = vld [vmem:[%s216 + $0xbb0] sm:$0xff]
        %v658 = vld [vmem:[%s216 + $0xbb8] sm:$0xff]
        %v659 = vld [vmem:[%s216 + $0xbc0] sm:$0xff]
        %v660 = vld [vmem:[%s216 + $0xbc8] sm:$0xff]
        %v661 = vld [vmem:[%s216 + $0xbd0] sm:$0xff]
        %v662 = vld [vmem:[%s216 + $0xbd8] sm:$0xff]
        %v663 = vld [vmem:[%s216 + $0xbe0] sm:$0xff]
        %v664 = vld [vmem:[%s216 + $0xbe8] sm:$0xff]
        %v665 = vld [vmem:[%s216 + $0xbf0] sm:$0xff]
        %v666 = vld [vmem:[%s216 + $0xbf8] sm:$0xff]
        %v679 = vunpack.c.l.b16 %v271
        %v680 = vunpack.c.h.b16 %v271
        %v681 = vunpack.c.l.b16 %v272
        %v682 = vunpack.c.h.b16 %v272
        %v683 = vunpack.c.l.b16 %v273
        %v684 = vunpack.c.h.b16 %v273
        %v685 = vunpack.c.l.b16 %v274
        %v686 = vunpack.c.h.b16 %v274
        %v687 = vunpack.c.l.b16 %v275
        %v688 = vunpack.c.h.b16 %v275
        %v689 = vunpack.c.l.b16 %v276
        %v690 = vunpack.c.h.b16 %v276
        %v691 = vunpack.c.l.b16 %v277
        %v692 = vunpack.c.h.b16 %v277
        %v693 = vunpack.c.l.b16 %v278
        %v694 = vunpack.c.h.b16 %v278
        %v695 = vunpack.c.l.b16 %v279
        %v696 = vunpack.c.h.b16 %v279
        %v697 = vunpack.c.l.b16 %v280
        %v698 = vunpack.c.h.b16 %v280
        %v699 = vunpack.c.l.b16 %v281
        %v700 = vunpack.c.h.b16 %v281
        %v701 = vunpack.c.l.b16 %v282
        %v702 = vunpack.c.h.b16 %v282
        %v703 = vpack.c.b16 %v691, %v679
        %v704 = vpack.c.b16 %v692, %v680
        %v705 = vpack.c.b16 %v693, %v681
        %v706 = vpack.c.b16 %v694, %v682
        %v707 = vpack.c.b16 %v695, %v683
        %v708 = vpack.c.b16 %v696, %v684
        %v709 = vpack.c.b16 %v697, %v685
        %v710 = vpack.c.b16 %v698, %v686
        %v711 = vpack.c.b16 %v699, %v687
        %v712 = vpack.c.b16 %v700, %v688
        %v713 = vpack.c.b16 %v701, %v689
        %v714 = vpack.c.b16 %v702, %v690
        %v1111 = vunpack.c.l.b16 %v283
        %v1112 = vunpack.c.h.b16 %v283
        %v1113 = vunpack.c.l.b16 %v284
        %v1114 = vunpack.c.h.b16 %v284
        %v1115 = vunpack.c.l.b16 %v285
        %v1116 = vunpack.c.h.b16 %v285
        %v1117 = vunpack.c.l.b16 %v286
        %v1118 = vunpack.c.h.b16 %v286
        %v1119 = vunpack.c.l.b16 %v287
        %v1120 = vunpack.c.h.b16 %v287
        %v1121 = vunpack.c.l.b16 %v288
        %v1122 = vunpack.c.h.b16 %v288
        %v1123 = vunpack.c.l.b16 %v289
        %v1124 = vunpack.c.h.b16 %v289
        %v1125 = vunpack.c.l.b16 %v290
        %v1126 = vunpack.c.h.b16 %v290
        %v1127 = vunpack.c.l.b16 %v291
        %v1128 = vunpack.c.h.b16 %v291
        %v1129 = vunpack.c.l.b16 %v292
        %v1130 = vunpack.c.h.b16 %v292
        %v1131 = vunpack.c.l.b16 %v293
        %v1132 = vunpack.c.h.b16 %v293
        %v1133 = vunpack.c.l.b16 %v294
        %v1134 = vunpack.c.h.b16 %v294
        %v1135 = vunpack.c.l.b16 %v295
        %v1136 = vunpack.c.h.b16 %v295
        %v1137 = vunpack.c.l.b16 %v296
        %v1138 = vunpack.c.h.b16 %v296
        %v1139 = vunpack.c.l.b16 %v297
        %v1140 = vunpack.c.h.b16 %v297
        %v1141 = vunpack.c.l.b16 %v298
        %v1142 = vunpack.c.h.b16 %v298
        %v1143 = vunpack.c.l.b16 %v299
        %v1144 = vunpack.c.h.b16 %v299
        %v1145 = vunpack.c.l.b16 %v300
        %v1146 = vunpack.c.h.b16 %v300
        %v1147 = vunpack.c.l.b16 %v301
        %v1148 = vunpack.c.h.b16 %v301
        %v1149 = vunpack.c.l.b16 %v302
        %v1150 = vunpack.c.h.b16 %v302
        %v1151 = vunpack.c.l.b16 %v303
        %v1152 = vunpack.c.h.b16 %v303
        %v1153 = vunpack.c.l.b16 %v304
        %v1154 = vunpack.c.h.b16 %v304
        %v1155 = vunpack.c.l.b16 %v305
        %v1156 = vunpack.c.h.b16 %v305
        %v1157 = vunpack.c.l.b16 %v306
        %v1158 = vunpack.c.h.b16 %v306
        %v1159 = vunpack.c.l.b16 %v307
        %v1160 = vunpack.c.h.b16 %v307
        %v1161 = vunpack.c.l.b16 %v308
        %v1162 = vunpack.c.h.b16 %v308
        %v1163 = vunpack.c.l.b16 %v309
        %v1164 = vunpack.c.h.b16 %v309
        %v1165 = vunpack.c.l.b16 %v310
        %v1166 = vunpack.c.h.b16 %v310
        %v1167 = vunpack.c.l.b16 %v311
        %v1168 = vunpack.c.h.b16 %v311
        %v1169 = vunpack.c.l.b16 %v312
        %v1170 = vunpack.c.h.b16 %v312
        %v1171 = vunpack.c.l.b16 %v313
        %v1172 = vunpack.c.h.b16 %v313
        %v1173 = vunpack.c.l.b16 %v314
        %v1174 = vunpack.c.h.b16 %v314
        %v1175 = vunpack.c.l.b16 %v315
        %v1176 = vunpack.c.h.b16 %v315
        %v1177 = vunpack.c.l.b16 %v316
        %v1178 = vunpack.c.h.b16 %v316
        %v1179 = vunpack.c.l.b16 %v317
        %v1180 = vunpack.c.h.b16 %v317
        %v1181 = vunpack.c.l.b16 %v318
        %v1182 = vunpack.c.h.b16 %v318
        %v1183 = vunpack.c.l.b16 %v319
        %v1184 = vunpack.c.h.b16 %v319
        %v1185 = vunpack.c.l.b16 %v320
        %v1186 = vunpack.c.h.b16 %v320
        %v1187 = vunpack.c.l.b16 %v321
        %v1188 = vunpack.c.h.b16 %v321
        %v1189 = vunpack.c.l.b16 %v322
        %v1190 = vunpack.c.h.b16 %v322
        %v1191 = vunpack.c.l.b16 %v323
        %v1192 = vunpack.c.h.b16 %v323
        %v1193 = vunpack.c.l.b16 %v324
        %v1194 = vunpack.c.h.b16 %v324
        %v1195 = vunpack.c.l.b16 %v325
        %v1196 = vunpack.c.h.b16 %v325
        %v1197 = vunpack.c.l.b16 %v326
        %v1198 = vunpack.c.h.b16 %v326
        %v1199 = vunpack.c.l.b16 %v327
        %v1200 = vunpack.c.h.b16 %v327
        %v1201 = vunpack.c.l.b16 %v328
        %v1202 = vunpack.c.h.b16 %v328
        %v1203 = vunpack.c.l.b16 %v329
        %v1204 = vunpack.c.h.b16 %v329
        %v1205 = vunpack.c.l.b16 %v330
        %v1206 = vunpack.c.h.b16 %v330
        %v1207 = vunpack.c.l.b16 %v331
        %v1208 = vunpack.c.h.b16 %v331
        %v1209 = vunpack.c.l.b16 %v332
        %v1210 = vunpack.c.h.b16 %v332
        %v1211 = vunpack.c.l.b16 %v333
        %v1212 = vunpack.c.h.b16 %v333
        %v1213 = vunpack.c.l.b16 %v334
        %v1214 = vunpack.c.h.b16 %v334
        %v1215 = vunpack.c.l.b16 %v335
        %v1216 = vunpack.c.h.b16 %v335
        %v1217 = vunpack.c.l.b16 %v336
        %v1218 = vunpack.c.h.b16 %v336
        %v1219 = vunpack.c.l.b16 %v337
        %v1220 = vunpack.c.h.b16 %v337
        %v1221 = vunpack.c.l.b16 %v338
        %v1222 = vunpack.c.h.b16 %v338
        %v1223 = vunpack.c.l.b16 %v339
        %v1224 = vunpack.c.h.b16 %v339
        %v1225 = vunpack.c.l.b16 %v340
        %v1226 = vunpack.c.h.b16 %v340
        %v1227 = vunpack.c.l.b16 %v341
        %v1228 = vunpack.c.h.b16 %v341
        %v1229 = vunpack.c.l.b16 %v342
        %v1230 = vunpack.c.h.b16 %v342
        %v1231 = vunpack.c.l.b16 %v343
        %v1232 = vunpack.c.h.b16 %v343
        %v1233 = vunpack.c.l.b16 %v344
        %v1234 = vunpack.c.h.b16 %v344
        %v1235 = vunpack.c.l.b16 %v345
        %v1236 = vunpack.c.h.b16 %v345
        %v1237 = vunpack.c.l.b16 %v346
        %v1238 = vunpack.c.h.b16 %v346
        %v1239 = vunpack.c.l.b16 %v347
        %v1240 = vunpack.c.h.b16 %v347
        %v1241 = vunpack.c.l.b16 %v348
        %v1242 = vunpack.c.h.b16 %v348
        %v1243 = vunpack.c.l.b16 %v349
        %v1244 = vunpack.c.h.b16 %v349
        %v1245 = vunpack.c.l.b16 %v350
        %v1246 = vunpack.c.h.b16 %v350
        %v1247 = vunpack.c.l.b16 %v351
        %v1248 = vunpack.c.h.b16 %v351
        %v1249 = vunpack.c.l.b16 %v352
        %v1250 = vunpack.c.h.b16 %v352
        %v1251 = vunpack.c.l.b16 %v353
        %v1252 = vunpack.c.h.b16 %v353
        %v1253 = vunpack.c.l.b16 %v354
        %v1254 = vunpack.c.h.b16 %v354
        %v1255 = vunpack.c.l.b16 %v355
        %v1256 = vunpack.c.h.b16 %v355
        %v1257 = vunpack.c.l.b16 %v356
        %v1258 = vunpack.c.h.b16 %v356
        %v1259 = vunpack.c.l.b16 %v357
        %v1260 = vunpack.c.h.b16 %v357
        %v1261 = vunpack.c.l.b16 %v358
        %v1262 = vunpack.c.h.b16 %v358
        %v1263 = vunpack.c.l.b16 %v359
        %v1264 = vunpack.c.h.b16 %v359
        %v1265 = vunpack.c.l.b16 %v360
        %v1266 = vunpack.c.h.b16 %v360
        %v1267 = vunpack.c.l.b16 %v361
        %v1268 = vunpack.c.h.b16 %v361
        %v1269 = vunpack.c.l.b16 %v362
        %v1270 = vunpack.c.h.b16 %v362
        %v1271 = vunpack.c.l.b16 %v363
        %v1272 = vunpack.c.h.b16 %v363
        %v1273 = vunpack.c.l.b16 %v364
        %v1274 = vunpack.c.h.b16 %v364
        %v1275 = vunpack.c.l.b16 %v365
        %v1276 = vunpack.c.h.b16 %v365
        %v1277 = vunpack.c.l.b16 %v366
        %v1278 = vunpack.c.h.b16 %v366
        %v1279 = vunpack.c.l.b16 %v367
        %v1280 = vunpack.c.h.b16 %v367
        %v1281 = vunpack.c.l.b16 %v368
        %v1282 = vunpack.c.h.b16 %v368
        %v1283 = vunpack.c.l.b16 %v369
        %v1284 = vunpack.c.h.b16 %v369
        %v1285 = vunpack.c.l.b16 %v370
        %v1286 = vunpack.c.h.b16 %v370
        %v1287 = vunpack.c.l.b16 %v371
        %v1288 = vunpack.c.h.b16 %v371
        %v1289 = vunpack.c.l.b16 %v372
        %v1290 = vunpack.c.h.b16 %v372
        %v1291 = vunpack.c.l.b16 %v373
        %v1292 = vunpack.c.h.b16 %v373
        %v1293 = vunpack.c.l.b16 %v374
        %v1294 = vunpack.c.h.b16 %v374
        %v1295 = vunpack.c.l.b16 %v375
        %v1296 = vunpack.c.h.b16 %v375
        %v1297 = vunpack.c.l.b16 %v376
        %v1298 = vunpack.c.h.b16 %v376
        %v1299 = vunpack.c.l.b16 %v377
        %v1300 = vunpack.c.h.b16 %v377
        %v1301 = vunpack.c.l.b16 %v378
        %v1302 = vunpack.c.h.b16 %v378
        %v1303 = vunpack.c.l.b16 %v379
        %v1304 = vunpack.c.h.b16 %v379
        %v1305 = vunpack.c.l.b16 %v380
        %v1306 = vunpack.c.h.b16 %v380
        %v1307 = vunpack.c.l.b16 %v381
        %v1308 = vunpack.c.h.b16 %v381
        %v1309 = vunpack.c.l.b16 %v382
        %v1310 = vunpack.c.h.b16 %v382
        %v1311 = vunpack.c.l.b16 %v383
        %v1312 = vunpack.c.h.b16 %v383
        %v1313 = vunpack.c.l.b16 %v384
        %v1314 = vunpack.c.h.b16 %v384
        %v1315 = vunpack.c.l.b16 %v385
        %v1316 = vunpack.c.h.b16 %v385
        %v1317 = vunpack.c.l.b16 %v386
        %v1318 = vunpack.c.h.b16 %v386
        %v1319 = vunpack.c.l.b16 %v387
        %v1320 = vunpack.c.h.b16 %v387
        %v1321 = vunpack.c.l.b16 %v388
        %v1322 = vunpack.c.h.b16 %v388
        %v1323 = vunpack.c.l.b16 %v389
        %v1324 = vunpack.c.h.b16 %v389
        %v1325 = vunpack.c.l.b16 %v390
        %v1326 = vunpack.c.h.b16 %v390
        %v1327 = vunpack.c.l.b16 %v391
        %v1328 = vunpack.c.h.b16 %v391
        %v1329 = vunpack.c.l.b16 %v392
        %v1330 = vunpack.c.h.b16 %v392
        %v1331 = vunpack.c.l.b16 %v393
        %v1332 = vunpack.c.h.b16 %v393
        %v1333 = vunpack.c.l.b16 %v394
        %v1334 = vunpack.c.h.b16 %v394
        %v1335 = vunpack.c.l.b16 %v395
        %v1336 = vunpack.c.h.b16 %v395
        %v1337 = vunpack.c.l.b16 %v396
        %v1338 = vunpack.c.h.b16 %v396
        %v1339 = vunpack.c.l.b16 %v397
        %v1340 = vunpack.c.h.b16 %v397
        %v1341 = vunpack.c.l.b16 %v398
        %v1342 = vunpack.c.h.b16 %v398
        %v1343 = vunpack.c.l.b16 %v399
        %v1344 = vunpack.c.h.b16 %v399
        %v1345 = vunpack.c.l.b16 %v400
        %v1346 = vunpack.c.h.b16 %v400
        %v1347 = vunpack.c.l.b16 %v401
        %v1348 = vunpack.c.h.b16 %v401
        %v1349 = vunpack.c.l.b16 %v402
        %v1350 = vunpack.c.h.b16 %v402
        %v1351 = vunpack.c.l.b16 %v403
        %v1352 = vunpack.c.h.b16 %v403
        %v1353 = vunpack.c.l.b16 %v404
        %v1354 = vunpack.c.h.b16 %v404
        %v1355 = vunpack.c.l.b16 %v405
        %v1356 = vunpack.c.h.b16 %v405
        %v1357 = vunpack.c.l.b16 %v406
        %v1358 = vunpack.c.h.b16 %v406
        %v1359 = vunpack.c.l.b16 %v407
        %v1360 = vunpack.c.h.b16 %v407
        %v1361 = vunpack.c.l.b16 %v408
        %v1362 = vunpack.c.h.b16 %v408
        %v1363 = vunpack.c.l.b16 %v409
        %v1364 = vunpack.c.h.b16 %v409
        %v1365 = vunpack.c.l.b16 %v410
        %v1366 = vunpack.c.h.b16 %v410
        %v1367 = vunpack.c.l.b16 %v411
        %v1368 = vunpack.c.h.b16 %v411
        %v1369 = vunpack.c.l.b16 %v412
        %v1370 = vunpack.c.h.b16 %v412
        %v1371 = vunpack.c.l.b16 %v413
        %v1372 = vunpack.c.h.b16 %v413
        %v1373 = vunpack.c.l.b16 %v414
        %v1374 = vunpack.c.h.b16 %v414
        %v1375 = vunpack.c.l.b16 %v415
        %v1376 = vunpack.c.h.b16 %v415
        %v1377 = vunpack.c.l.b16 %v416
        %v1378 = vunpack.c.h.b16 %v416
        %v1379 = vunpack.c.l.b16 %v417
        %v1380 = vunpack.c.h.b16 %v417
        %v1381 = vunpack.c.l.b16 %v418
        %v1382 = vunpack.c.h.b16 %v418
        %v1383 = vunpack.c.l.b16 %v419
        %v1384 = vunpack.c.h.b16 %v419
        %v1385 = vunpack.c.l.b16 %v420
        %v1386 = vunpack.c.h.b16 %v420
        %v1387 = vunpack.c.l.b16 %v421
        %v1388 = vunpack.c.h.b16 %v421
        %v1389 = vunpack.c.l.b16 %v422
        %v1390 = vunpack.c.h.b16 %v422
        %v1391 = vunpack.c.l.b16 %v423
        %v1392 = vunpack.c.h.b16 %v423
        %v1393 = vunpack.c.l.b16 %v424
        %v1394 = vunpack.c.h.b16 %v424
        %v1395 = vunpack.c.l.b16 %v425
        %v1396 = vunpack.c.h.b16 %v425
        %v1397 = vunpack.c.l.b16 %v426
        %v1398 = vunpack.c.h.b16 %v426
        %v1399 = vunpack.c.l.b16 %v427
        %v1400 = vunpack.c.h.b16 %v427
        %v1401 = vunpack.c.l.b16 %v428
        %v1402 = vunpack.c.h.b16 %v428
        %v1403 = vunpack.c.l.b16 %v429
        %v1404 = vunpack.c.h.b16 %v429
        %v1405 = vunpack.c.l.b16 %v430
        %v1406 = vunpack.c.h.b16 %v430
        %v1407 = vunpack.c.l.b16 %v431
        %v1408 = vunpack.c.h.b16 %v431
        %v1409 = vunpack.c.l.b16 %v432
        %v1410 = vunpack.c.h.b16 %v432
        %v1411 = vunpack.c.l.b16 %v433
        %v1412 = vunpack.c.h.b16 %v433
        %v1413 = vunpack.c.l.b16 %v434
        %v1414 = vunpack.c.h.b16 %v434
        %v1415 = vunpack.c.l.b16 %v435
        %v1416 = vunpack.c.h.b16 %v435
        %v1417 = vunpack.c.l.b16 %v436
        %v1418 = vunpack.c.h.b16 %v436
        %v1419 = vunpack.c.l.b16 %v437
        %v1420 = vunpack.c.h.b16 %v437
        %v1421 = vunpack.c.l.b16 %v438
        %v1422 = vunpack.c.h.b16 %v438
        %v1423 = vunpack.c.l.b16 %v439
        %v1424 = vunpack.c.h.b16 %v439
        %v1425 = vunpack.c.l.b16 %v440
        %v1426 = vunpack.c.h.b16 %v440
        %v1427 = vunpack.c.l.b16 %v441
        %v1428 = vunpack.c.h.b16 %v441
        %v1429 = vunpack.c.l.b16 %v442
        %v1430 = vunpack.c.h.b16 %v442
        %v1431 = vunpack.c.l.b16 %v443
        %v1432 = vunpack.c.h.b16 %v443
        %v1433 = vunpack.c.l.b16 %v444
        %v1434 = vunpack.c.h.b16 %v444
        %v1435 = vunpack.c.l.b16 %v445
        %v1436 = vunpack.c.h.b16 %v445
        %v1437 = vunpack.c.l.b16 %v446
        %v1438 = vunpack.c.h.b16 %v446
        %v1439 = vunpack.c.l.b16 %v447
        %v1440 = vunpack.c.h.b16 %v447
        %v1441 = vunpack.c.l.b16 %v448
        %v1442 = vunpack.c.h.b16 %v448
        %v1443 = vunpack.c.l.b16 %v449
        %v1444 = vunpack.c.h.b16 %v449
        %v1445 = vunpack.c.l.b16 %v450
        %v1446 = vunpack.c.h.b16 %v450
        %v1447 = vunpack.c.l.b16 %v451
        %v1448 = vunpack.c.h.b16 %v451
        %v1449 = vunpack.c.l.b16 %v452
        %v1450 = vunpack.c.h.b16 %v452
        %v1451 = vunpack.c.l.b16 %v453
        %v1452 = vunpack.c.h.b16 %v453
        %v1453 = vunpack.c.l.b16 %v454
        %v1454 = vunpack.c.h.b16 %v454
        %v1455 = vunpack.c.l.b16 %v455
        %v1456 = vunpack.c.h.b16 %v455
        %v1457 = vunpack.c.l.b16 %v456
        %v1458 = vunpack.c.h.b16 %v456
        %v1459 = vunpack.c.l.b16 %v457
        %v1460 = vunpack.c.h.b16 %v457
        %v1461 = vunpack.c.l.b16 %v458
        %v1462 = vunpack.c.h.b16 %v458
        %v1463 = vunpack.c.l.b16 %v459
        %v1464 = vunpack.c.h.b16 %v459
        %v1465 = vunpack.c.l.b16 %v460
        %v1466 = vunpack.c.h.b16 %v460
        %v1467 = vunpack.c.l.b16 %v461
        %v1468 = vunpack.c.h.b16 %v461
        %v1469 = vunpack.c.l.b16 %v462
        %v1470 = vunpack.c.h.b16 %v462
        %v1471 = vunpack.c.l.b16 %v463
        %v1472 = vunpack.c.h.b16 %v463
        %v1473 = vunpack.c.l.b16 %v464
        %v1474 = vunpack.c.h.b16 %v464
        %v1475 = vunpack.c.l.b16 %v465
        %v1476 = vunpack.c.h.b16 %v465
        %v1477 = vunpack.c.l.b16 %v466
        %v1478 = vunpack.c.h.b16 %v466
        %v1479 = vunpack.c.l.b16 %v467
        %v1480 = vunpack.c.h.b16 %v467
        %v1481 = vunpack.c.l.b16 %v468
        %v1482 = vunpack.c.h.b16 %v468
        %v1483 = vunpack.c.l.b16 %v469
        %v1484 = vunpack.c.h.b16 %v469
        %v1485 = vunpack.c.l.b16 %v470
        %v1486 = vunpack.c.h.b16 %v470
        %v1487 = vunpack.c.l.b16 %v471
        %v1488 = vunpack.c.h.b16 %v471
        %v1489 = vunpack.c.l.b16 %v472
        %v1490 = vunpack.c.h.b16 %v472
        %v1491 = vunpack.c.l.b16 %v473
        %v1492 = vunpack.c.h.b16 %v473
        %v1493 = vunpack.c.l.b16 %v474
        %v1494 = vunpack.c.h.b16 %v474
        %v1495 = vunpack.c.l.b16 %v475
        %v1496 = vunpack.c.h.b16 %v475
        %v1497 = vunpack.c.l.b16 %v476
        %v1498 = vunpack.c.h.b16 %v476
        %v1499 = vunpack.c.l.b16 %v477
        %v1500 = vunpack.c.h.b16 %v477
        %v1501 = vunpack.c.l.b16 %v478
        %v1502 = vunpack.c.h.b16 %v478
        %v1503 = vunpack.c.l.b16 %v479
        %v1504 = vunpack.c.h.b16 %v479
        %v1505 = vunpack.c.l.b16 %v480
        %v1506 = vunpack.c.h.b16 %v480
        %v1507 = vunpack.c.l.b16 %v481
        %v1508 = vunpack.c.h.b16 %v481
        %v1509 = vunpack.c.l.b16 %v482
        %v1510 = vunpack.c.h.b16 %v482
        %v1511 = vunpack.c.l.b16 %v483
        %v1512 = vunpack.c.h.b16 %v483
        %v1513 = vunpack.c.l.b16 %v484
        %v1514 = vunpack.c.h.b16 %v484
        %v1515 = vunpack.c.l.b16 %v485
        %v1516 = vunpack.c.h.b16 %v485
        %v1517 = vunpack.c.l.b16 %v486
        %v1518 = vunpack.c.h.b16 %v486
        %v1519 = vunpack.c.l.b16 %v487
        %v1520 = vunpack.c.h.b16 %v487
        %v1521 = vunpack.c.l.b16 %v488
        %v1522 = vunpack.c.h.b16 %v488
        %v1523 = vunpack.c.l.b16 %v489
        %v1524 = vunpack.c.h.b16 %v489
        %v1525 = vunpack.c.l.b16 %v490
        %v1526 = vunpack.c.h.b16 %v490
        %v1527 = vunpack.c.l.b16 %v491
        %v1528 = vunpack.c.h.b16 %v491
        %v1529 = vunpack.c.l.b16 %v492
        %v1530 = vunpack.c.h.b16 %v492
        %v1531 = vunpack.c.l.b16 %v493
        %v1532 = vunpack.c.h.b16 %v493
        %v1533 = vunpack.c.l.b16 %v494
        %v1534 = vunpack.c.h.b16 %v494
        %v1535 = vunpack.c.l.b16 %v495
        %v1536 = vunpack.c.h.b16 %v495
        %v1537 = vunpack.c.l.b16 %v496
        %v1538 = vunpack.c.h.b16 %v496
        %v1539 = vunpack.c.l.b16 %v497
        %v1540 = vunpack.c.h.b16 %v497
        %v1541 = vunpack.c.l.b16 %v498
        %v1542 = vunpack.c.h.b16 %v498
        %v1543 = vunpack.c.l.b16 %v499
        %v1544 = vunpack.c.h.b16 %v499
        %v1545 = vunpack.c.l.b16 %v500
        %v1546 = vunpack.c.h.b16 %v500
        %v1547 = vunpack.c.l.b16 %v501
        %v1548 = vunpack.c.h.b16 %v501
        %v1549 = vunpack.c.l.b16 %v502
        %v1550 = vunpack.c.h.b16 %v502
        %v1551 = vunpack.c.l.b16 %v503
        %v1552 = vunpack.c.h.b16 %v503
        %v1553 = vunpack.c.l.b16 %v504
        %v1554 = vunpack.c.h.b16 %v504
        %v1555 = vunpack.c.l.b16 %v505
        %v1556 = vunpack.c.h.b16 %v505
        %v1557 = vunpack.c.l.b16 %v506
        %v1558 = vunpack.c.h.b16 %v506
        %v1559 = vunpack.c.l.b16 %v507
        %v1560 = vunpack.c.h.b16 %v507
        %v1561 = vunpack.c.l.b16 %v508
        %v1562 = vunpack.c.h.b16 %v508
        %v1563 = vunpack.c.l.b16 %v509
        %v1564 = vunpack.c.h.b16 %v509
        %v1565 = vunpack.c.l.b16 %v510
        %v1566 = vunpack.c.h.b16 %v510
        %v1567 = vunpack.c.l.b16 %v511
        %v1568 = vunpack.c.h.b16 %v511
        %v1569 = vunpack.c.l.b16 %v512
        %v1570 = vunpack.c.h.b16 %v512
        %v1571 = vunpack.c.l.b16 %v513
        %v1572 = vunpack.c.h.b16 %v513
        %v1573 = vunpack.c.l.b16 %v514
        %v1574 = vunpack.c.h.b16 %v514
        %v1575 = vunpack.c.l.b16 %v515
        %v1576 = vunpack.c.h.b16 %v515
        %v1577 = vunpack.c.l.b16 %v516
        %v1578 = vunpack.c.h.b16 %v516
        %v1579 = vunpack.c.l.b16 %v517
        %v1580 = vunpack.c.h.b16 %v517
        %v1581 = vunpack.c.l.b16 %v518
        %v1582 = vunpack.c.h.b16 %v518
        %v1583 = vunpack.c.l.b16 %v519
        %v1584 = vunpack.c.h.b16 %v519
        %v1585 = vunpack.c.l.b16 %v520
        %v1586 = vunpack.c.h.b16 %v520
        %v1587 = vunpack.c.l.b16 %v521
        %v1588 = vunpack.c.h.b16 %v521
        %v1589 = vunpack.c.l.b16 %v522
        %v1590 = vunpack.c.h.b16 %v522
        %v1591 = vunpack.c.l.b16 %v523
        %v1592 = vunpack.c.h.b16 %v523
        %v1593 = vunpack.c.l.b16 %v524
        %v1594 = vunpack.c.h.b16 %v524
        %v1595 = vunpack.c.l.b16 %v525
        %v1596 = vunpack.c.h.b16 %v525
        %v1597 = vunpack.c.l.b16 %v526
        %v1598 = vunpack.c.h.b16 %v526
        %v1599 = vunpack.c.l.b16 %v527
        %v1600 = vunpack.c.h.b16 %v527
        %v1601 = vunpack.c.l.b16 %v528
        %v1602 = vunpack.c.h.b16 %v528
        %v1603 = vunpack.c.l.b16 %v529
        %v1604 = vunpack.c.h.b16 %v529
        %v1605 = vunpack.c.l.b16 %v530
        %v1606 = vunpack.c.h.b16 %v530
        %v1607 = vunpack.c.l.b16 %v531
        %v1608 = vunpack.c.h.b16 %v531
        %v1609 = vunpack.c.l.b16 %v532
        %v1610 = vunpack.c.h.b16 %v532
        %v1611 = vunpack.c.l.b16 %v533
        %v1612 = vunpack.c.h.b16 %v533
        %v1613 = vunpack.c.l.b16 %v534
        %v1614 = vunpack.c.h.b16 %v534
        %v1615 = vunpack.c.l.b16 %v535
        %v1616 = vunpack.c.h.b16 %v535
        %v1617 = vunpack.c.l.b16 %v536
        %v1618 = vunpack.c.h.b16 %v536
        %v1619 = vunpack.c.l.b16 %v537
        %v1620 = vunpack.c.h.b16 %v537
        %v1621 = vunpack.c.l.b16 %v538
        %v1622 = vunpack.c.h.b16 %v538
        %v1623 = vunpack.c.l.b16 %v539
        %v1624 = vunpack.c.h.b16 %v539
        %v1625 = vunpack.c.l.b16 %v540
        %v1626 = vunpack.c.h.b16 %v540
        %v1627 = vunpack.c.l.b16 %v541
        %v1628 = vunpack.c.h.b16 %v541
        %v1629 = vunpack.c.l.b16 %v542
        %v1630 = vunpack.c.h.b16 %v542
        %v1631 = vunpack.c.l.b16 %v543
        %v1632 = vunpack.c.h.b16 %v543
        %v1633 = vunpack.c.l.b16 %v544
        %v1634 = vunpack.c.h.b16 %v544
        %v1635 = vunpack.c.l.b16 %v545
        %v1636 = vunpack.c.h.b16 %v545
        %v1637 = vunpack.c.l.b16 %v546
        %v1638 = vunpack.c.h.b16 %v546
        %v1639 = vunpack.c.l.b16 %v547
        %v1640 = vunpack.c.h.b16 %v547
        %v1641 = vunpack.c.l.b16 %v548
        %v1642 = vunpack.c.h.b16 %v548
        %v1643 = vunpack.c.l.b16 %v549
        %v1644 = vunpack.c.h.b16 %v549
        %v1645 = vunpack.c.l.b16 %v550
        %v1646 = vunpack.c.h.b16 %v550
        %v1647 = vunpack.c.l.b16 %v551
        %v1648 = vunpack.c.h.b16 %v551
        %v1649 = vunpack.c.l.b16 %v552
        %v1650 = vunpack.c.h.b16 %v552
        %v1651 = vunpack.c.l.b16 %v553
        %v1652 = vunpack.c.h.b16 %v553
        %v1653 = vunpack.c.l.b16 %v554
        %v1654 = vunpack.c.h.b16 %v554
        %v1655 = vunpack.c.l.b16 %v555
        %v1656 = vunpack.c.h.b16 %v555
        %v1657 = vunpack.c.l.b16 %v556
        %v1658 = vunpack.c.h.b16 %v556
        %v1659 = vunpack.c.l.b16 %v557
        %v1660 = vunpack.c.h.b16 %v557
        %v1661 = vunpack.c.l.b16 %v558
        %v1662 = vunpack.c.h.b16 %v558
        %v1663 = vunpack.c.l.b16 %v559
        %v1664 = vunpack.c.h.b16 %v559
        %v1665 = vunpack.c.l.b16 %v560
        %v1666 = vunpack.c.h.b16 %v560
        %v1667 = vunpack.c.l.b16 %v561
        %v1668 = vunpack.c.h.b16 %v561
        %v1669 = vunpack.c.l.b16 %v562
        %v1670 = vunpack.c.h.b16 %v562
        %v1671 = vunpack.c.l.b16 %v563
        %v1672 = vunpack.c.h.b16 %v563
        %v1673 = vunpack.c.l.b16 %v564
        %v1674 = vunpack.c.h.b16 %v564
        %v1675 = vunpack.c.l.b16 %v565
        %v1676 = vunpack.c.h.b16 %v565
        %v1677 = vunpack.c.l.b16 %v566
        %v1678 = vunpack.c.h.b16 %v566
        %v1679 = vunpack.c.l.b16 %v567
        %v1680 = vunpack.c.h.b16 %v567
        %v1681 = vunpack.c.l.b16 %v568
        %v1682 = vunpack.c.h.b16 %v568
        %v1683 = vunpack.c.l.b16 %v569
        %v1684 = vunpack.c.h.b16 %v569
        %v1685 = vunpack.c.l.b16 %v570
        %v1686 = vunpack.c.h.b16 %v570
        %v1687 = vunpack.c.l.b16 %v571
        %v1688 = vunpack.c.h.b16 %v571
        %v1689 = vunpack.c.l.b16 %v572
        %v1690 = vunpack.c.h.b16 %v572
        %v1691 = vunpack.c.l.b16 %v573
        %v1692 = vunpack.c.h.b16 %v573
        %v1693 = vunpack.c.l.b16 %v574
        %v1694 = vunpack.c.h.b16 %v574
        %v1695 = vunpack.c.l.b16 %v575
        %v1696 = vunpack.c.h.b16 %v575
        %v1697 = vunpack.c.l.b16 %v576
        %v1698 = vunpack.c.h.b16 %v576
        %v1699 = vunpack.c.l.b16 %v577
        %v1700 = vunpack.c.h.b16 %v577
        %v1701 = vunpack.c.l.b16 %v578
        %v1702 = vunpack.c.h.b16 %v578
        %v1703 = vunpack.c.l.b16 %v579
        %v1704 = vunpack.c.h.b16 %v579
        %v1705 = vunpack.c.l.b16 %v580
        %v1706 = vunpack.c.h.b16 %v580
        %v1707 = vunpack.c.l.b16 %v581
        %v1708 = vunpack.c.h.b16 %v581
        %v1709 = vunpack.c.l.b16 %v582
        %v1710 = vunpack.c.h.b16 %v582
        %v1711 = vunpack.c.l.b16 %v583
        %v1712 = vunpack.c.h.b16 %v583
        %v1713 = vunpack.c.l.b16 %v584
        %v1714 = vunpack.c.h.b16 %v584
        %v1715 = vunpack.c.l.b16 %v585
        %v1716 = vunpack.c.h.b16 %v585
        %v1717 = vunpack.c.l.b16 %v586
        %v1718 = vunpack.c.h.b16 %v586
        %v1719 = vunpack.c.l.b16 %v587
        %v1720 = vunpack.c.h.b16 %v587
        %v1721 = vunpack.c.l.b16 %v588
        %v1722 = vunpack.c.h.b16 %v588
        %v1723 = vunpack.c.l.b16 %v589
        %v1724 = vunpack.c.h.b16 %v589
        %v1725 = vunpack.c.l.b16 %v590
        %v1726 = vunpack.c.h.b16 %v590
        %v1727 = vunpack.c.l.b16 %v591
        %v1728 = vunpack.c.h.b16 %v591
        %v1729 = vunpack.c.l.b16 %v592
        %v1730 = vunpack.c.h.b16 %v592
        %v1731 = vunpack.c.l.b16 %v593
        %v1732 = vunpack.c.h.b16 %v593
        %v1733 = vunpack.c.l.b16 %v594
        %v1734 = vunpack.c.h.b16 %v594
        %v1735 = vunpack.c.l.b16 %v595
        %v1736 = vunpack.c.h.b16 %v595
        %v1737 = vunpack.c.l.b16 %v596
        %v1738 = vunpack.c.h.b16 %v596
        %v1739 = vunpack.c.l.b16 %v597
        %v1740 = vunpack.c.h.b16 %v597
        %v1741 = vunpack.c.l.b16 %v598
        %v1742 = vunpack.c.h.b16 %v598
        %v1743 = vunpack.c.l.b16 %v599
        %v1744 = vunpack.c.h.b16 %v599
        %v1745 = vunpack.c.l.b16 %v600
        %v1746 = vunpack.c.h.b16 %v600
        %v1747 = vunpack.c.l.b16 %v601
        %v1748 = vunpack.c.h.b16 %v601
        %v1749 = vunpack.c.l.b16 %v602
        %v1750 = vunpack.c.h.b16 %v602
        %v1751 = vunpack.c.l.b16 %v603
        %v1752 = vunpack.c.h.b16 %v603
        %v1753 = vunpack.c.l.b16 %v604
        %v1754 = vunpack.c.h.b16 %v604
        %v1755 = vunpack.c.l.b16 %v605
        %v1756 = vunpack.c.h.b16 %v605
        %v1757 = vunpack.c.l.b16 %v606
        %v1758 = vunpack.c.h.b16 %v606
        %v1759 = vunpack.c.l.b16 %v607
        %v1760 = vunpack.c.h.b16 %v607
        %v1761 = vunpack.c.l.b16 %v608
        %v1762 = vunpack.c.h.b16 %v608
        %v1763 = vunpack.c.l.b16 %v609
        %v1764 = vunpack.c.h.b16 %v609
        %v1765 = vunpack.c.l.b16 %v610
        %v1766 = vunpack.c.h.b16 %v610
        %v1767 = vunpack.c.l.b16 %v611
        %v1768 = vunpack.c.h.b16 %v611
        %v1769 = vunpack.c.l.b16 %v612
        %v1770 = vunpack.c.h.b16 %v612
        %v1771 = vunpack.c.l.b16 %v613
        %v1772 = vunpack.c.h.b16 %v613
        %v1773 = vunpack.c.l.b16 %v614
        %v1774 = vunpack.c.h.b16 %v614
        %v1775 = vunpack.c.l.b16 %v615
        %v1776 = vunpack.c.h.b16 %v615
        %v1777 = vunpack.c.l.b16 %v616
        %v1778 = vunpack.c.h.b16 %v616
        %v1779 = vunpack.c.l.b16 %v617
        %v1780 = vunpack.c.h.b16 %v617
        %v1781 = vunpack.c.l.b16 %v618
        %v1782 = vunpack.c.h.b16 %v618
        %v1783 = vunpack.c.l.b16 %v619
        %v1784 = vunpack.c.h.b16 %v619
        %v1785 = vunpack.c.l.b16 %v620
        %v1786 = vunpack.c.h.b16 %v620
        %v1787 = vunpack.c.l.b16 %v621
        %v1788 = vunpack.c.h.b16 %v621
        %v1789 = vunpack.c.l.b16 %v622
        %v1790 = vunpack.c.h.b16 %v622
        %v1791 = vunpack.c.l.b16 %v623
        %v1792 = vunpack.c.h.b16 %v623
        %v1793 = vunpack.c.l.b16 %v624
        %v1794 = vunpack.c.h.b16 %v624
        %v1795 = vunpack.c.l.b16 %v625
        %v1796 = vunpack.c.h.b16 %v625
        %v1797 = vunpack.c.l.b16 %v626
        %v1798 = vunpack.c.h.b16 %v626
        %v1799 = vunpack.c.l.b16 %v627
        %v1800 = vunpack.c.h.b16 %v627
        %v1801 = vunpack.c.l.b16 %v628
        %v1802 = vunpack.c.h.b16 %v628
        %v1803 = vunpack.c.l.b16 %v629
        %v1804 = vunpack.c.h.b16 %v629
        %v1805 = vunpack.c.l.b16 %v630
        %v1806 = vunpack.c.h.b16 %v630
        %v1807 = vunpack.c.l.b16 %v631
        %v1808 = vunpack.c.h.b16 %v631
        %v1809 = vunpack.c.l.b16 %v632
        %v1810 = vunpack.c.h.b16 %v632
        %v1811 = vunpack.c.l.b16 %v633
        %v1812 = vunpack.c.h.b16 %v633
        %v1813 = vunpack.c.l.b16 %v634
        %v1814 = vunpack.c.h.b16 %v634
        %v1815 = vunpack.c.l.b16 %v635
        %v1816 = vunpack.c.h.b16 %v635
        %v1817 = vunpack.c.l.b16 %v636
        %v1818 = vunpack.c.h.b16 %v636
        %v1819 = vunpack.c.l.b16 %v637
        %v1820 = vunpack.c.h.b16 %v637
        %v1821 = vunpack.c.l.b16 %v638
        %v1822 = vunpack.c.h.b16 %v638
        %v1823 = vunpack.c.l.b16 %v639
        %v1824 = vunpack.c.h.b16 %v639
        %v1825 = vunpack.c.l.b16 %v640
        %v1826 = vunpack.c.h.b16 %v640
        %v1827 = vunpack.c.l.b16 %v641
        %v1828 = vunpack.c.h.b16 %v641
        %v1829 = vunpack.c.l.b16 %v642
        %v1830 = vunpack.c.h.b16 %v642
        %v1831 = vunpack.c.l.b16 %v643
        %v1832 = vunpack.c.h.b16 %v643
        %v1833 = vunpack.c.l.b16 %v644
        %v1834 = vunpack.c.h.b16 %v644
        %v1835 = vunpack.c.l.b16 %v645
        %v1836 = vunpack.c.h.b16 %v645
        %v1837 = vunpack.c.l.b16 %v646
        %v1838 = vunpack.c.h.b16 %v646
        %v1839 = vunpack.c.l.b16 %v647
        %v1840 = vunpack.c.h.b16 %v647
        %v1841 = vunpack.c.l.b16 %v648
        %v1842 = vunpack.c.h.b16 %v648
        %v1843 = vunpack.c.l.b16 %v649
        %v1844 = vunpack.c.h.b16 %v649
        %v1845 = vunpack.c.l.b16 %v650
        %v1846 = vunpack.c.h.b16 %v650
        %v1847 = vunpack.c.l.b16 %v651
        %v1848 = vunpack.c.h.b16 %v651
        %v1849 = vunpack.c.l.b16 %v652
        %v1850 = vunpack.c.h.b16 %v652
        %v1851 = vunpack.c.l.b16 %v653
        %v1852 = vunpack.c.h.b16 %v653
        %v1853 = vunpack.c.l.b16 %v654
        %v1854 = vunpack.c.h.b16 %v654
        %v1855 = vunpack.c.l.b16 %v655
        %v1856 = vunpack.c.h.b16 %v655
        %v1857 = vunpack.c.l.b16 %v656
        %v1858 = vunpack.c.h.b16 %v656
        %v1859 = vunpack.c.l.b16 %v657
        %v1860 = vunpack.c.h.b16 %v657
        %v1861 = vunpack.c.l.b16 %v658
        %v1862 = vunpack.c.h.b16 %v658
        %v1863 = vunpack.c.l.b16 %v659
        %v1864 = vunpack.c.h.b16 %v659
        %v1865 = vunpack.c.l.b16 %v660
        %v1866 = vunpack.c.h.b16 %v660
        %v1867 = vunpack.c.l.b16 %v661
        %v1868 = vunpack.c.h.b16 %v661
        %v1869 = vunpack.c.l.b16 %v662
        %v1870 = vunpack.c.h.b16 %v662
        %v1871 = vunpack.c.l.b16 %v663
        %v1872 = vunpack.c.h.b16 %v663
        %v1873 = vunpack.c.l.b16 %v664
        %v1874 = vunpack.c.h.b16 %v664
        %v1875 = vunpack.c.l.b16 %v665
        %v1876 = vunpack.c.h.b16 %v665
        %v1877 = vunpack.c.l.b16 %v666
        %v1878 = vunpack.c.h.b16 %v666
        %v1879 = vpack.c.b16 %v1115, %v1111
        %v1880 = vpack.c.b16 %v1116, %v1112
        %v1881 = vpack.c.b16 %v1117, %v1113
        %v1882 = vpack.c.b16 %v1118, %v1114
        %v1883 = vpack.c.b16 %v1123, %v1119
        %v1884 = vpack.c.b16 %v1124, %v1120
        %v1885 = vpack.c.b16 %v1125, %v1121
        %v1886 = vpack.c.b16 %v1126, %v1122
        %v1887 = vpack.c.b16 %v1131, %v1127
        %v1888 = vpack.c.b16 %v1132, %v1128
        %v1889 = vpack.c.b16 %v1133, %v1129
        %v1890 = vpack.c.b16 %v1134, %v1130
        %v1891 = vpack.c.b16 %v1139, %v1135
        %v1892 = vpack.c.b16 %v1140, %v1136
        %v1893 = vpack.c.b16 %v1141, %v1137
        %v1894 = vpack.c.b16 %v1142, %v1138
        %v1895 = vpack.c.b16 %v1147, %v1143
        %v1896 = vpack.c.b16 %v1148, %v1144
        %v1897 = vpack.c.b16 %v1149, %v1145
        %v1898 = vpack.c.b16 %v1150, %v1146
        %v1899 = vpack.c.b16 %v1155, %v1151
        %v1900 = vpack.c.b16 %v1156, %v1152
        %v1901 = vpack.c.b16 %v1157, %v1153
        %v1902 = vpack.c.b16 %v1158, %v1154
        %v1903 = vpack.c.b16 %v1163, %v1159
        %v1904 = vpack.c.b16 %v1164, %v1160
        %v1905 = vpack.c.b16 %v1165, %v1161
        %v1906 = vpack.c.b16 %v1166, %v1162
        %v1907 = vpack.c.b16 %v1171, %v1167
        %v1908 = vpack.c.b16 %v1172, %v1168
        %v1909 = vpack.c.b16 %v1173, %v1169
        %v1910 = vpack.c.b16 %v1174, %v1170
        %v1911 = vpack.c.b16 %v1179, %v1175
        %v1912 = vpack.c.b16 %v1180, %v1176
        %v1913 = vpack.c.b16 %v1181, %v1177
        %v1914 = vpack.c.b16 %v1182, %v1178
        %v1915 = vpack.c.b16 %v1187, %v1183
        %v1916 = vpack.c.b16 %v1188, %v1184
        %v1917 = vpack.c.b16 %v1189, %v1185
        %v1918 = vpack.c.b16 %v1190, %v1186
        %v1919 = vpack.c.b16 %v1195, %v1191
        %v1920 = vpack.c.b16 %v1196, %v1192
        %v1921 = vpack.c.b16 %v1197, %v1193
        %v1922 = vpack.c.b16 %v1198, %v1194
        %v1923 = vpack.c.b16 %v1203, %v1199
        %v1924 = vpack.c.b16 %v1204, %v1200
        %v1925 = vpack.c.b16 %v1205, %v1201
        %v1926 = vpack.c.b16 %v1206, %v1202
        %v1927 = vpack.c.b16 %v1211, %v1207
        %v1928 = vpack.c.b16 %v1212, %v1208
        %v1929 = vpack.c.b16 %v1213, %v1209
        %v1930 = vpack.c.b16 %v1214, %v1210
        %v1931 = vpack.c.b16 %v1219, %v1215
        %v1932 = vpack.c.b16 %v1220, %v1216
        %v1933 = vpack.c.b16 %v1221, %v1217
        %v1934 = vpack.c.b16 %v1222, %v1218
        %v1935 = vpack.c.b16 %v1227, %v1223
        %v1936 = vpack.c.b16 %v1228, %v1224
        %v1937 = vpack.c.b16 %v1229, %v1225
        %v1938 = vpack.c.b16 %v1230, %v1226
        %v1939 = vpack.c.b16 %v1235, %v1231
        %v1940 = vpack.c.b16 %v1236, %v1232
        %v1941 = vpack.c.b16 %v1237, %v1233
        %v1942 = vpack.c.b16 %v1238, %v1234
        %v1943 = vpack.c.b16 %v1243, %v1239
        %v1944 = vpack.c.b16 %v1244, %v1240
        %v1945 = vpack.c.b16 %v1245, %v1241
        %v1946 = vpack.c.b16 %v1246, %v1242
        %v1947 = vpack.c.b16 %v1251, %v1247
        %v1948 = vpack.c.b16 %v1252, %v1248
        %v1949 = vpack.c.b16 %v1253, %v1249
        %v1950 = vpack.c.b16 %v1254, %v1250
        %v1951 = vpack.c.b16 %v1259, %v1255
        %v1952 = vpack.c.b16 %v1260, %v1256
        %v1953 = vpack.c.b16 %v1261, %v1257
        %v1954 = vpack.c.b16 %v1262, %v1258
        %v1955 = vpack.c.b16 %v1267, %v1263
        %v1956 = vpack.c.b16 %v1268, %v1264
        %v1957 = vpack.c.b16 %v1269, %v1265
        %v1958 = vpack.c.b16 %v1270, %v1266
        %v1959 = vpack.c.b16 %v1275, %v1271
        %v1960 = vpack.c.b16 %v1276, %v1272
        %v1961 = vpack.c.b16 %v1277, %v1273
        %v1962 = vpack.c.b16 %v1278, %v1274
        %v1963 = vpack.c.b16 %v1283, %v1279
        %v1964 = vpack.c.b16 %v1284, %v1280
        %v1965 = vpack.c.b16 %v1285, %v1281
        %v1966 = vpack.c.b16 %v1286, %v1282
        %v1967 = vpack.c.b16 %v1291, %v1287
        %v1968 = vpack.c.b16 %v1292, %v1288
        %v1969 = vpack.c.b16 %v1293, %v1289
        %v1970 = vpack.c.b16 %v1294, %v1290
        %v1971 = vpack.c.b16 %v1299, %v1295
        %v1972 = vpack.c.b16 %v1300, %v1296
        %v1973 = vpack.c.b16 %v1301, %v1297
        %v1974 = vpack.c.b16 %v1302, %v1298
        %v1975 = vpack.c.b16 %v1307, %v1303
        %v1976 = vpack.c.b16 %v1308, %v1304
        %v1977 = vpack.c.b16 %v1309, %v1305
        %v1978 = vpack.c.b16 %v1310, %v1306
        %v1979 = vpack.c.b16 %v1315, %v1311
        %v1980 = vpack.c.b16 %v1316, %v1312
        %v1981 = vpack.c.b16 %v1317, %v1313
        %v1982 = vpack.c.b16 %v1318, %v1314
        %v1983 = vpack.c.b16 %v1323, %v1319
        %v1984 = vpack.c.b16 %v1324, %v1320
        %v1985 = vpack.c.b16 %v1325, %v1321
        %v1986 = vpack.c.b16 %v1326, %v1322
        %v1987 = vpack.c.b16 %v1331, %v1327
        %v1988 = vpack.c.b16 %v1332, %v1328
        %v1989 = vpack.c.b16 %v1333, %v1329
        %v1990 = vpack.c.b16 %v1334, %v1330
        %v1991 = vpack.c.b16 %v1339, %v1335
        %v1992 = vpack.c.b16 %v1340, %v1336
        %v1993 = vpack.c.b16 %v1341, %v1337
        %v1994 = vpack.c.b16 %v1342, %v1338
        %v1995 = vpack.c.b16 %v1347, %v1343
        %v1996 = vpack.c.b16 %v1348, %v1344
        %v1997 = vpack.c.b16 %v1349, %v1345
        %v1998 = vpack.c.b16 %v1350, %v1346
        %v1999 = vpack.c.b16 %v1355, %v1351
        %v2000 = vpack.c.b16 %v1356, %v1352
        %v2001 = vpack.c.b16 %v1357, %v1353
        %v2002 = vpack.c.b16 %v1358, %v1354
        %v2003 = vpack.c.b16 %v1363, %v1359
        %v2004 = vpack.c.b16 %v1364, %v1360
        %v2005 = vpack.c.b16 %v1365, %v1361
        %v2006 = vpack.c.b16 %v1366, %v1362
        %v2007 = vpack.c.b16 %v1371, %v1367
        %v2008 = vpack.c.b16 %v1372, %v1368
        %v2009 = vpack.c.b16 %v1373, %v1369
        %v2010 = vpack.c.b16 %v1374, %v1370
        %v2011 = vpack.c.b16 %v1379, %v1375
        %v2012 = vpack.c.b16 %v1380, %v1376
        %v2013 = vpack.c.b16 %v1381, %v1377
        %v2014 = vpack.c.b16 %v1382, %v1378
        %v2015 = vpack.c.b16 %v1387, %v1383
        %v2016 = vpack.c.b16 %v1388, %v1384
        %v2017 = vpack.c.b16 %v1389, %v1385
        %v2018 = vpack.c.b16 %v1390, %v1386
        %v2019 = vpack.c.b16 %v1395, %v1391
        %v2020 = vpack.c.b16 %v1396, %v1392
        %v2021 = vpack.c.b16 %v1397, %v1393
        %v2022 = vpack.c.b16 %v1398, %v1394
        %v2023 = vpack.c.b16 %v1403, %v1399
        %v2024 = vpack.c.b16 %v1404, %v1400
        %v2025 = vpack.c.b16 %v1405, %v1401
        %v2026 = vpack.c.b16 %v1406, %v1402
        %v2027 = vpack.c.b16 %v1411, %v1407
        %v2028 = vpack.c.b16 %v1412, %v1408
        %v2029 = vpack.c.b16 %v1413, %v1409
        %v2030 = vpack.c.b16 %v1414, %v1410
        %v2031 = vpack.c.b16 %v1419, %v1415
        %v2032 = vpack.c.b16 %v1420, %v1416
        %v2033 = vpack.c.b16 %v1421, %v1417
        %v2034 = vpack.c.b16 %v1422, %v1418
        %v2035 = vpack.c.b16 %v1427, %v1423
        %v2036 = vpack.c.b16 %v1428, %v1424
        %v2037 = vpack.c.b16 %v1429, %v1425
        %v2038 = vpack.c.b16 %v1430, %v1426
        %v2039 = vpack.c.b16 %v1435, %v1431
        %v2040 = vpack.c.b16 %v1436, %v1432
        %v2041 = vpack.c.b16 %v1437, %v1433
        %v2042 = vpack.c.b16 %v1438, %v1434
        %v2043 = vpack.c.b16 %v1443, %v1439
        %v2044 = vpack.c.b16 %v1444, %v1440
        %v2045 = vpack.c.b16 %v1445, %v1441
        %v2046 = vpack.c.b16 %v1446, %v1442
        %v2047 = vpack.c.b16 %v1451, %v1447
        %v2048 = vpack.c.b16 %v1452, %v1448
        %v2049 = vpack.c.b16 %v1453, %v1449
        %v2050 = vpack.c.b16 %v1454, %v1450
        %v2051 = vpack.c.b16 %v1459, %v1455
        %v2052 = vpack.c.b16 %v1460, %v1456
        %v2053 = vpack.c.b16 %v1461, %v1457
        %v2054 = vpack.c.b16 %v1462, %v1458
        %v2055 = vpack.c.b16 %v1467, %v1463
        %v2056 = vpack.c.b16 %v1468, %v1464
        %v2057 = vpack.c.b16 %v1469, %v1465
        %v2058 = vpack.c.b16 %v1470, %v1466
        %v2059 = vpack.c.b16 %v1475, %v1471
        %v2060 = vpack.c.b16 %v1476, %v1472
        %v2061 = vpack.c.b16 %v1477, %v1473
        %v2062 = vpack.c.b16 %v1478, %v1474
        %v2063 = vpack.c.b16 %v1483, %v1479
        %v2064 = vpack.c.b16 %v1484, %v1480
        %v2065 = vpack.c.b16 %v1485, %v1481
        %v2066 = vpack.c.b16 %v1486, %v1482
        %v2067 = vpack.c.b16 %v1491, %v1487
        %v2068 = vpack.c.b16 %v1492, %v1488
        %v2069 = vpack.c.b16 %v1493, %v1489
        %v2070 = vpack.c.b16 %v1494, %v1490
        %v2071 = vpack.c.b16 %v1499, %v1495
        %v2072 = vpack.c.b16 %v1500, %v1496
        %v2073 = vpack.c.b16 %v1501, %v1497
        %v2074 = vpack.c.b16 %v1502, %v1498
        %v2075 = vpack.c.b16 %v1507, %v1503
        %v2076 = vpack.c.b16 %v1508, %v1504
        %v2077 = vpack.c.b16 %v1509, %v1505
        %v2078 = vpack.c.b16 %v1510, %v1506
        %v2079 = vpack.c.b16 %v1515, %v1511
        %v2080 = vpack.c.b16 %v1516, %v1512
        %v2081 = vpack.c.b16 %v1517, %v1513
        %v2082 = vpack.c.b16 %v1518, %v1514
        %v2083 = vpack.c.b16 %v1523, %v1519
        %v2084 = vpack.c.b16 %v1524, %v1520
        %v2085 = vpack.c.b16 %v1525, %v1521
        %v2086 = vpack.c.b16 %v1526, %v1522
        %v2087 = vpack.c.b16 %v1531, %v1527
        %v2088 = vpack.c.b16 %v1532, %v1528
        %v2089 = vpack.c.b16 %v1533, %v1529
        %v2090 = vpack.c.b16 %v1534, %v1530
        %v2091 = vpack.c.b16 %v1539, %v1535
        %v2092 = vpack.c.b16 %v1540, %v1536
        %v2093 = vpack.c.b16 %v1541, %v1537
        %v2094 = vpack.c.b16 %v1542, %v1538
        %v2095 = vpack.c.b16 %v1547, %v1543
        %v2096 = vpack.c.b16 %v1548, %v1544
        %v2097 = vpack.c.b16 %v1549, %v1545
        %v2098 = vpack.c.b16 %v1550, %v1546
        %v2099 = vpack.c.b16 %v1555, %v1551
        %v2100 = vpack.c.b16 %v1556, %v1552
        %v2101 = vpack.c.b16 %v1557, %v1553
        %v2102 = vpack.c.b16 %v1558, %v1554
        %v2103 = vpack.c.b16 %v1563, %v1559
        %v2104 = vpack.c.b16 %v1564, %v1560
        %v2105 = vpack.c.b16 %v1565, %v1561
        %v2106 = vpack.c.b16 %v1566, %v1562
        %v2107 = vpack.c.b16 %v1571, %v1567
        %v2108 = vpack.c.b16 %v1572, %v1568
        %v2109 = vpack.c.b16 %v1573, %v1569
        %v2110 = vpack.c.b16 %v1574, %v1570
        %v2111 = vpack.c.b16 %v1579, %v1575
        %v2112 = vpack.c.b16 %v1580, %v1576
        %v2113 = vpack.c.b16 %v1581, %v1577
        %v2114 = vpack.c.b16 %v1582, %v1578
        %v2115 = vpack.c.b16 %v1587, %v1583
        %v2116 = vpack.c.b16 %v1588, %v1584
        %v2117 = vpack.c.b16 %v1589, %v1585
        %v2118 = vpack.c.b16 %v1590, %v1586
        %v2119 = vpack.c.b16 %v1595, %v1591
        %v2120 = vpack.c.b16 %v1596, %v1592
        %v2121 = vpack.c.b16 %v1597, %v1593
        %v2122 = vpack.c.b16 %v1598, %v1594
        %v2123 = vpack.c.b16 %v1603, %v1599
        %v2124 = vpack.c.b16 %v1604, %v1600
        %v2125 = vpack.c.b16 %v1605, %v1601
        %v2126 = vpack.c.b16 %v1606, %v1602
        %v2127 = vpack.c.b16 %v1611, %v1607
        %v2128 = vpack.c.b16 %v1612, %v1608
        %v2129 = vpack.c.b16 %v1613, %v1609
        %v2130 = vpack.c.b16 %v1614, %v1610
        %v2131 = vpack.c.b16 %v1619, %v1615
        %v2132 = vpack.c.b16 %v1620, %v1616
        %v2133 = vpack.c.b16 %v1621, %v1617
        %v2134 = vpack.c.b16 %v1622, %v1618
        %v2135 = vpack.c.b16 %v1627, %v1623
        %v2136 = vpack.c.b16 %v1628, %v1624
        %v2137 = vpack.c.b16 %v1629, %v1625
        %v2138 = vpack.c.b16 %v1630, %v1626
        %v2139 = vpack.c.b16 %v1635, %v1631
        %v2140 = vpack.c.b16 %v1636, %v1632
        %v2141 = vpack.c.b16 %v1637, %v1633
        %v2142 = vpack.c.b16 %v1638, %v1634
        %v2143 = vpack.c.b16 %v1643, %v1639
        %v2144 = vpack.c.b16 %v1644, %v1640
        %v2145 = vpack.c.b16 %v1645, %v1641
        %v2146 = vpack.c.b16 %v1646, %v1642
        %v2147 = vpack.c.b16 %v1651, %v1647
        %v2148 = vpack.c.b16 %v1652, %v1648
        %v2149 = vpack.c.b16 %v1653, %v1649
        %v2150 = vpack.c.b16 %v1654, %v1650
        %v2151 = vpack.c.b16 %v1659, %v1655
        %v2152 = vpack.c.b16 %v1660, %v1656
        %v2153 = vpack.c.b16 %v1661, %v1657
        %v2154 = vpack.c.b16 %v1662, %v1658
        %v2155 = vpack.c.b16 %v1667, %v1663
        %v2156 = vpack.c.b16 %v1668, %v1664
        %v2157 = vpack.c.b16 %v1669, %v1665
        %v2158 = vpack.c.b16 %v1670, %v1666
        %v2159 = vpack.c.b16 %v1675, %v1671
        %v2160 = vpack.c.b16 %v1676, %v1672
        %v2161 = vpack.c.b16 %v1677, %v1673
        %v2162 = vpack.c.b16 %v1678, %v1674
        %v2163 = vpack.c.b16 %v1683, %v1679
        %v2164 = vpack.c.b16 %v1684, %v1680
        %v2165 = vpack.c.b16 %v1685, %v1681
        %v2166 = vpack.c.b16 %v1686, %v1682
        %v2167 = vpack.c.b16 %v1691, %v1687
        %v2168 = vpack.c.b16 %v1692, %v1688
        %v2169 = vpack.c.b16 %v1693, %v1689
        %v2170 = vpack.c.b16 %v1694, %v1690
        %v2171 = vpack.c.b16 %v1699, %v1695
        %v2172 = vpack.c.b16 %v1700, %v1696
        %v2173 = vpack.c.b16 %v1701, %v1697
        %v2174 = vpack.c.b16 %v1702, %v1698
        %v2175 = vpack.c.b16 %v1707, %v1703
        %v2176 = vpack.c.b16 %v1708, %v1704
        %v2177 = vpack.c.b16 %v1709, %v1705
        %v2178 = vpack.c.b16 %v1710, %v1706
        %v2179 = vpack.c.b16 %v1715, %v1711
        %v2180 = vpack.c.b16 %v1716, %v1712
        %v2181 = vpack.c.b16 %v1717, %v1713
        %v2182 = vpack.c.b16 %v1718, %v1714
        %v2183 = vpack.c.b16 %v1723, %v1719
        %v2184 = vpack.c.b16 %v1724, %v1720
        %v2185 = vpack.c.b16 %v1725, %v1721
        %v2186 = vpack.c.b16 %v1726, %v1722
        %v2187 = vpack.c.b16 %v1731, %v1727
        %v2188 = vpack.c.b16 %v1732, %v1728
        %v2189 = vpack.c.b16 %v1733, %v1729
        %v2190 = vpack.c.b16 %v1734, %v1730
        %v2191 = vpack.c.b16 %v1739, %v1735
        %v2192 = vpack.c.b16 %v1740, %v1736
        %v2193 = vpack.c.b16 %v1741, %v1737
        %v2194 = vpack.c.b16 %v1742, %v1738
        %v2195 = vpack.c.b16 %v1747, %v1743
        %v2196 = vpack.c.b16 %v1748, %v1744
        %v2197 = vpack.c.b16 %v1749, %v1745
        %v2198 = vpack.c.b16 %v1750, %v1746
        %v2199 = vpack.c.b16 %v1755, %v1751
        %v2200 = vpack.c.b16 %v1756, %v1752
        %v2201 = vpack.c.b16 %v1757, %v1753
        %v2202 = vpack.c.b16 %v1758, %v1754
        %v2203 = vpack.c.b16 %v1763, %v1759
        %v2204 = vpack.c.b16 %v1764, %v1760
        %v2205 = vpack.c.b16 %v1765, %v1761
        %v2206 = vpack.c.b16 %v1766, %v1762
        %v2207 = vpack.c.b16 %v1771, %v1767
        %v2208 = vpack.c.b16 %v1772, %v1768
        %v2209 = vpack.c.b16 %v1773, %v1769
        %v2210 = vpack.c.b16 %v1774, %v1770
        %v2211 = vpack.c.b16 %v1779, %v1775
        %v2212 = vpack.c.b16 %v1780, %v1776
        %v2213 = vpack.c.b16 %v1781, %v1777
        %v2214 = vpack.c.b16 %v1782, %v1778
        %v2215 = vpack.c.b16 %v1787, %v1783
        %v2216 = vpack.c.b16 %v1788, %v1784
        %v2217 = vpack.c.b16 %v1789, %v1785
        %v2218 = vpack.c.b16 %v1790, %v1786
        %v2219 = vpack.c.b16 %v1795, %v1791
        %v2220 = vpack.c.b16 %v1796, %v1792
        %v2221 = vpack.c.b16 %v1797, %v1793
        %v2222 = vpack.c.b16 %v1798, %v1794
        %v2223 = vpack.c.b16 %v1803, %v1799
        %v2224 = vpack.c.b16 %v1804, %v1800
        %v2225 = vpack.c.b16 %v1805, %v1801
        %v2226 = vpack.c.b16 %v1806, %v1802
        %v2227 = vpack.c.b16 %v1811, %v1807
        %v2228 = vpack.c.b16 %v1812, %v1808
        %v2229 = vpack.c.b16 %v1813, %v1809
        %v2230 = vpack.c.b16 %v1814, %v1810
        %v2231 = vpack.c.b16 %v1819, %v1815
        %v2232 = vpack.c.b16 %v1820, %v1816
        %v2233 = vpack.c.b16 %v1821, %v1817
        %v2234 = vpack.c.b16 %v1822, %v1818
        %v2235 = vpack.c.b16 %v1827, %v1823
        %v2236 = vpack.c.b16 %v1828, %v1824
        %v2237 = vpack.c.b16 %v1829, %v1825
        %v2238 = vpack.c.b16 %v1830, %v1826
        %v2239 = vpack.c.b16 %v1835, %v1831
        %v2240 = vpack.c.b16 %v1836, %v1832
        %v2241 = vpack.c.b16 %v1837, %v1833
        %v2242 = vpack.c.b16 %v1838, %v1834
        %v2243 = vpack.c.b16 %v1843, %v1839
        %v2244 = vpack.c.b16 %v1844, %v1840
        %v2245 = vpack.c.b16 %v1845, %v1841
        %v2246 = vpack.c.b16 %v1846, %v1842
        %v2247 = vpack.c.b16 %v1851, %v1847
        %v2248 = vpack.c.b16 %v1852, %v1848
        %v2249 = vpack.c.b16 %v1853, %v1849
        %v2250 = vpack.c.b16 %v1854, %v1850
        %v2251 = vpack.c.b16 %v1859, %v1855
        %v2252 = vpack.c.b16 %v1860, %v1856
        %v2253 = vpack.c.b16 %v1861, %v1857
        %v2254 = vpack.c.b16 %v1862, %v1858
        %v2255 = vpack.c.b16 %v1867, %v1863
        %v2256 = vpack.c.b16 %v1868, %v1864
        %v2257 = vpack.c.b16 %v1869, %v1865
        %v2258 = vpack.c.b16 %v1870, %v1866
        %v2259 = vpack.c.b16 %v1875, %v1871
        %v2260 = vpack.c.b16 %v1876, %v1872
        %v2261 = vpack.c.b16 %v1877, %v1873
        %v2262 = vpack.c.b16 %v1878, %v1874
        %2647 = vmatpush.bf16.msra.mxu0 %v1907
        %2648 = vmatpush.bf16.msra.mxu0 %v1903
        %2649 = vmatpush.bf16.msra.mxu0 %v1899
        %2650 = vmatpush.bf16.msra.mxu0 %v1895
        %2651 = vmatpush.bf16.msra.mxu0 %v1891
        %2652 = vmatpush.bf16.msra.mxu0 %v1887
        %2653 = vmatpush.bf16.msra.mxu0 %v1883
        %2654 = vmatpush.bf16.msra.mxu0 %v1879
        %2655 = vmatmul.bf16.gmra.mxu0 %v703
        %v2656 = vpop.f32.mrf.mxu0
        %v2657 = vadd.f32 0.0, %v2656
        %v2658 = vpop.f32.mrf.mxu0
        %v2659 = vadd.f32 0.0, %v2658
        %2660 = vdwg.mxu0
        %2661 = vmatpush.bf16.msra.mxu0 %v1939
        %2662 = vmatpush.bf16.msra.mxu0 %v1935
        %2663 = vmatpush.bf16.msra.mxu0 %v1931
        %2664 = vmatpush.bf16.msra.mxu0 %v1927
        %2665 = vmatpush.bf16.msra.mxu0 %v1923
        %2666 = vmatpush.bf16.msra.mxu0 %v1919
        %2667 = vmatpush.bf16.msra.mxu0 %v1915
        %2668 = vmatpush.bf16.msra.mxu0 %v1911
        %2669 = vmatmul.bf16.gmra.mxu0 %v704
        %v2670 = vpop.f32.mrf.mxu0
        %v2671 = vadd.f32 %v2657, %v2670
        %v2672 = vpop.f32.mrf.mxu0
        %v2673 = vadd.f32 %v2659, %v2672
        %2674 = vdwg.mxu0
        %2675 = vmatpush.bf16.msra.mxu0 %v1971
        %2676 = vmatpush.bf16.msra.mxu0 %v1967
        %2677 = vmatpush.bf16.msra.mxu0 %v1963
        %2678 = vmatpush.bf16.msra.mxu0 %v1959
        %2679 = vmatpush.bf16.msra.mxu0 %v1955
        %2680 = vmatpush.bf16.msra.mxu0 %v1951
        %2681 = vmatpush.bf16.msra.mxu0 %v1947
        %2682 = vmatpush.bf16.msra.mxu0 %v1943
        %2683 = vmatmul.bf16.gmra.mxu0 %v705
        %v2684 = vpop.f32.mrf.mxu0
        %v2685 = vadd.f32 %v2671, %v2684
        %v2686 = vpop.f32.mrf.mxu0
        %v2687 = vadd.f32 %v2673, %v2686
        %2688 = vdwg.mxu0
        %2689 = vmatpush.bf16.msra.mxu0 %v2003
        %2690 = vmatpush.bf16.msra.mxu0 %v1999
        %2691 = vmatpush.bf16.msra.mxu0 %v1995
        %2692 = vmatpush.bf16.msra.mxu0 %v1991
        %2693 = vmatpush.bf16.msra.mxu0 %v1987
        %2694 = vmatpush.bf16.msra.mxu0 %v1983
        %2695 = vmatpush.bf16.msra.mxu0 %v1979
        %2696 = vmatpush.bf16.msra.mxu0 %v1975
        %2697 = vmatmul.bf16.gmra.mxu0 %v706
        %v2698 = vpop.f32.mrf.mxu0
        %v2699 = vadd.f32 %v2685, %v2698
        %v2700 = vpop.f32.mrf.mxu0
        %v2701 = vadd.f32 %v2687, %v2700
        %2702 = vdwg.mxu0
        %2703 = vmatpush.bf16.msra.mxu0 %v2035
        %2704 = vmatpush.bf16.msra.mxu0 %v2031
        %2705 = vmatpush.bf16.msra.mxu0 %v2027
        %2706 = vmatpush.bf16.msra.mxu0 %v2023
        %2707 = vmatpush.bf16.msra.mxu0 %v2019
        %2708 = vmatpush.bf16.msra.mxu0 %v2015
        %2709 = vmatpush.bf16.msra.mxu0 %v2011
        %2710 = vmatpush.bf16.msra.mxu0 %v2007
        %2711 = vmatmul.bf16.gmra.mxu0 %v707
        %v2712 = vpop.f32.mrf.mxu0
        %v2713 = vadd.f32 %v2699, %v2712
        %v2714 = vpop.f32.mrf.mxu0
        %v2715 = vadd.f32 %v2701, %v2714
        %2716 = vdwg.mxu0
        %2717 = vmatpush.bf16.msra.mxu0 %v2067
        %2718 = vmatpush.bf16.msra.mxu0 %v2063
        %2719 = vmatpush.bf16.msra.mxu0 %v2059
        %2720 = vmatpush.bf16.msra.mxu0 %v2055
        %2721 = vmatpush.bf16.msra.mxu0 %v2051
        %2722 = vmatpush.bf16.msra.mxu0 %v2047
        %2723 = vmatpush.bf16.msra.mxu0 %v2043
        %2724 = vmatpush.bf16.msra.mxu0 %v2039
        %2725 = vmatmul.bf16.gmra.mxu0 %v708
        %v2726 = vpop.f32.mrf.mxu0
        %v2727 = vadd.f32 %v2713, %v2726
        %v2728 = vpop.f32.mrf.mxu0
        %v2729 = vadd.f32 %v2715, %v2728
        %2730 = vdwg.mxu0
        %2731 = vmatpush.bf16.msra.mxu0 %v2099
        %2732 = vmatpush.bf16.msra.mxu0 %v2095
        %2733 = vmatpush.bf16.msra.mxu0 %v2091
        %2734 = vmatpush.bf16.msra.mxu0 %v2087
        %2735 = vmatpush.bf16.msra.mxu0 %v2083
        %2736 = vmatpush.bf16.msra.mxu0 %v2079
        %2737 = vmatpush.bf16.msra.mxu0 %v2075
        %2738 = vmatpush.bf16.msra.mxu0 %v2071
        %2739 = vmatmul.bf16.gmra.mxu0 %v709
        %v2740 = vpop.f32.mrf.mxu0
        %v2741 = vadd.f32 %v2727, %v2740
        %v2742 = vpop.f32.mrf.mxu0
        %v2743 = vadd.f32 %v2729, %v2742
        %2744 = vdwg.mxu0
        %2745 = vmatpush.bf16.msra.mxu0 %v2131
        %2746 = vmatpush.bf16.msra.mxu0 %v2127
        %2747 = vmatpush.bf16.msra.mxu0 %v2123
        %2748 = vmatpush.bf16.msra.mxu0 %v2119
        %2749 = vmatpush.bf16.msra.mxu0 %v2115
        %2750 = vmatpush.bf16.msra.mxu0 %v2111
        %2751 = vmatpush.bf16.msra.mxu0 %v2107
        %2752 = vmatpush.bf16.msra.mxu0 %v2103
        %2753 = vmatmul.bf16.gmra.mxu0 %v710
        %v2754 = vpop.f32.mrf.mxu0
        %v2755 = vadd.f32 %v2741, %v2754
        %v2756 = vpop.f32.mrf.mxu0
        %v2757 = vadd.f32 %v2743, %v2756
        %2758 = vdwg.mxu0
        %2759 = vmatpush.bf16.msra.mxu0 %v2163
        %2760 = vmatpush.bf16.msra.mxu0 %v2159
        %2761 = vmatpush.bf16.msra.mxu0 %v2155
        %2762 = vmatpush.bf16.msra.mxu0 %v2151
        %2763 = vmatpush.bf16.msra.mxu0 %v2147
        %2764 = vmatpush.bf16.msra.mxu0 %v2143
        %2765 = vmatpush.bf16.msra.mxu0 %v2139
        %2766 = vmatpush.bf16.msra.mxu0 %v2135
        %2767 = vmatmul.bf16.gmra.mxu0 %v711
        %v2768 = vpop.f32.mrf.mxu0
        %v2769 = vadd.f32 %v2755, %v2768
        %v2770 = vpop.f32.mrf.mxu0
        %v2771 = vadd.f32 %v2757, %v2770
        %2772 = vdwg.mxu0
        %2773 = vmatpush.bf16.msra.mxu0 %v2195
        %2774 = vmatpush.bf16.msra.mxu0 %v2191
        %2775 = vmatpush.bf16.msra.mxu0 %v2187
        %2776 = vmatpush.bf16.msra.mxu0 %v2183
        %2777 = vmatpush.bf16.msra.mxu0 %v2179
        %2778 = vmatpush.bf16.msra.mxu0 %v2175
        %2779 = vmatpush.bf16.msra.mxu0 %v2171
        %2780 = vmatpush.bf16.msra.mxu0 %v2167
        %2781 = vmatmul.bf16.gmra.mxu0 %v712
        %v2782 = vpop.f32.mrf.mxu0
        %v2783 = vadd.f32 %v2769, %v2782
        %v2784 = vpop.f32.mrf.mxu0
        %v2785 = vadd.f32 %v2771, %v2784
        %2786 = vdwg.mxu0
        %2787 = vmatpush.bf16.msra.mxu0 %v2227
        %2788 = vmatpush.bf16.msra.mxu0 %v2223
        %2789 = vmatpush.bf16.msra.mxu0 %v2219
        %2790 = vmatpush.bf16.msra.mxu0 %v2215
        %2791 = vmatpush.bf16.msra.mxu0 %v2211
        %2792 = vmatpush.bf16.msra.mxu0 %v2207
        %2793 = vmatpush.bf16.msra.mxu0 %v2203
        %2794 = vmatpush.bf16.msra.mxu0 %v2199
        %2795 = vmatmul.bf16.gmra.mxu0 %v713
        %v2796 = vpop.f32.mrf.mxu0
        %v2797 = vadd.f32 %v2783, %v2796
        %v2798 = vpop.f32.mrf.mxu0
        %v2799 = vadd.f32 %v2785, %v2798
        %2800 = vdwg.mxu0
        %2801 = vmatpush.bf16.msra.mxu0 %v2259
        %2802 = vmatpush.bf16.msra.mxu0 %v2255
        %2803 = vmatpush.bf16.msra.mxu0 %v2251
        %2804 = vmatpush.bf16.msra.mxu0 %v2247
        %2805 = vmatpush.bf16.msra.mxu0 %v2243
        %2806 = vmatpush.bf16.msra.mxu0 %v2239
        %2807 = vmatpush.bf16.msra.mxu0 %v2235
        %2808 = vmatpush.bf16.msra.mxu0 %v2231
        %2809 = vmatmul.bf16.gmra.mxu0 %v714
        %v2810 = vpop.f32.mrf.mxu0
        %v2811 = vadd.f32 %v2797, %v2810
        %v2812 = vpop.f32.mrf.mxu0
        %v2813 = vadd.f32 %v2799, %v2812
        %2814 = vdwg.mxu0
        %2815 = vmatpush.bf16.msra.mxu0 %v1908
        %2816 = vmatpush.bf16.msra.mxu0 %v1904
        %2817 = vmatpush.bf16.msra.mxu0 %v1900
        %2818 = vmatpush.bf16.msra.mxu0 %v1896
        %2819 = vmatpush.bf16.msra.mxu0 %v1892
        %2820 = vmatpush.bf16.msra.mxu0 %v1888
        %2821 = vmatpush.bf16.msra.mxu0 %v1884
        %2822 = vmatpush.bf16.msra.mxu0 %v1880
        %2823 = vmatmul.bf16.gmra.mxu0 %v703
        %v2824 = vpop.f32.mrf.mxu0
        %v2825 = vadd.f32 0.0, %v2824
        %v2826 = vpop.f32.mrf.mxu0
        %v2827 = vadd.f32 0.0, %v2826
        %2828 = vdwg.mxu0
        %2829 = vmatpush.bf16.msra.mxu0 %v1940
        %2830 = vmatpush.bf16.msra.mxu0 %v1936
        %2831 = vmatpush.bf16.msra.mxu0 %v1932
        %2832 = vmatpush.bf16.msra.mxu0 %v1928
        %2833 = vmatpush.bf16.msra.mxu0 %v1924
        %2834 = vmatpush.bf16.msra.mxu0 %v1920
        %2835 = vmatpush.bf16.msra.mxu0 %v1916
        %2836 = vmatpush.bf16.msra.mxu0 %v1912
        %2837 = vmatmul.bf16.gmra.mxu0 %v704
        %v2838 = vpop.f32.mrf.mxu0
        %v2839 = vadd.f32 %v2825, %v2838
        %v2840 = vpop.f32.mrf.mxu0
        %v2841 = vadd.f32 %v2827, %v2840
        %2842 = vdwg.mxu0
        %2843 = vmatpush.bf16.msra.mxu0 %v1972
        %2844 = vmatpush.bf16.msra.mxu0 %v1968
        %2845 = vmatpush.bf16.msra.mxu0 %v1964
        %2846 = vmatpush.bf16.msra.mxu0 %v1960
        %2847 = vmatpush.bf16.msra.mxu0 %v1956
        %2848 = vmatpush.bf16.msra.mxu0 %v1952
        %2849 = vmatpush.bf16.msra.mxu0 %v1948
        %2850 = vmatpush.bf16.msra.mxu0 %v1944
        %2851 = vmatmul.bf16.gmra.mxu0 %v705
        %v2852 = vpop.f32.mrf.mxu0
        %v2853 = vadd.f32 %v2839, %v2852
        %v2854 = vpop.f32.mrf.mxu0
        %v2855 = vadd.f32 %v2841, %v2854
        %2856 = vdwg.mxu0
        %2857 = vmatpush.bf16.msra.mxu0 %v2004
        %2858 = vmatpush.bf16.msra.mxu0 %v2000
        %2859 = vmatpush.bf16.msra.mxu0 %v1996
        %2860 = vmatpush.bf16.msra.mxu0 %v1992
        %2861 = vmatpush.bf16.msra.mxu0 %v1988
        %2862 = vmatpush.bf16.msra.mxu0 %v1984
        %2863 = vmatpush.bf16.msra.mxu0 %v1980
        %2864 = vmatpush.bf16.msra.mxu0 %v1976
        %2865 = vmatmul.bf16.gmra.mxu0 %v706
        %v2866 = vpop.f32.mrf.mxu0
        %v2867 = vadd.f32 %v2853, %v2866
        %v2868 = vpop.f32.mrf.mxu0
        %v2869 = vadd.f32 %v2855, %v2868
        %2870 = vdwg.mxu0
        %2871 = vmatpush.bf16.msra.mxu0 %v2036
        %2872 = vmatpush.bf16.msra.mxu0 %v2032
        %2873 = vmatpush.bf16.msra.mxu0 %v2028
        %2874 = vmatpush.bf16.msra.mxu0 %v2024
        %2875 = vmatpush.bf16.msra.mxu0 %v2020
        %2876 = vmatpush.bf16.msra.mxu0 %v2016
        %2877 = vmatpush.bf16.msra.mxu0 %v2012
        %2878 = vmatpush.bf16.msra.mxu0 %v2008
        %2879 = vmatmul.bf16.gmra.mxu0 %v707
        %v2880 = vpop.f32.mrf.mxu0
        %v2881 = vadd.f32 %v2867, %v2880
        %v2882 = vpop.f32.mrf.mxu0
        %v2883 = vadd.f32 %v2869, %v2882
        %2884 = vdwg.mxu0
        %2885 = vmatpush.bf16.msra.mxu0 %v2068
        %2886 = vmatpush.bf16.msra.mxu0 %v2064
        %2887 = vmatpush.bf16.msra.mxu0 %v2060
        %2888 = vmatpush.bf16.msra.mxu0 %v2056
        %2889 = vmatpush.bf16.msra.mxu0 %v2052
        %2890 = vmatpush.bf16.msra.mxu0 %v2048
        %2891 = vmatpush.bf16.msra.mxu0 %v2044
        %2892 = vmatpush.bf16.msra.mxu0 %v2040
        %2893 = vmatmul.bf16.gmra.mxu0 %v708
        %v2894 = vpop.f32.mrf.mxu0
        %v2895 = vadd.f32 %v2881, %v2894
        %v2896 = vpop.f32.mrf.mxu0
        %v2897 = vadd.f32 %v2883, %v2896
        %2898 = vdwg.mxu0
        %2899 = vmatpush.bf16.msra.mxu0 %v2100
        %2900 = vmatpush.bf16.msra.mxu0 %v2096
        %2901 = vmatpush.bf16.msra.mxu0 %v2092
        %2902 = vmatpush.bf16.msra.mxu0 %v2088
        %2903 = vmatpush.bf16.msra.mxu0 %v2084
        %2904 = vmatpush.bf16.msra.mxu0 %v2080
        %2905 = vmatpush.bf16.msra.mxu0 %v2076
        %2906 = vmatpush.bf16.msra.mxu0 %v2072
        %2907 = vmatmul.bf16.gmra.mxu0 %v709
        %v2908 = vpop.f32.mrf.mxu0
        %v2909 = vadd.f32 %v2895, %v2908
        %v2910 = vpop.f32.mrf.mxu0
        %v2911 = vadd.f32 %v2897, %v2910
        %2912 = vdwg.mxu0
        %2913 = vmatpush.bf16.msra.mxu0 %v2132
        %2914 = vmatpush.bf16.msra.mxu0 %v2128
        %2915 = vmatpush.bf16.msra.mxu0 %v2124
        %2916 = vmatpush.bf16.msra.mxu0 %v2120
        %2917 = vmatpush.bf16.msra.mxu0 %v2116
        %2918 = vmatpush.bf16.msra.mxu0 %v2112
        %2919 = vmatpush.bf16.msra.mxu0 %v2108
        %2920 = vmatpush.bf16.msra.mxu0 %v2104
        %2921 = vmatmul.bf16.gmra.mxu0 %v710
        %v2922 = vpop.f32.mrf.mxu0
        %v2923 = vadd.f32 %v2909, %v2922
        %v2924 = vpop.f32.mrf.mxu0
        %v2925 = vadd.f32 %v2911, %v2924
        %2926 = vdwg.mxu0
        %2927 = vmatpush.bf16.msra.mxu0 %v2164
        %2928 = vmatpush.bf16.msra.mxu0 %v2160
        %2929 = vmatpush.bf16.msra.mxu0 %v2156
        %2930 = vmatpush.bf16.msra.mxu0 %v2152
        %2931 = vmatpush.bf16.msra.mxu0 %v2148
        %2932 = vmatpush.bf16.msra.mxu0 %v2144
        %2933 = vmatpush.bf16.msra.mxu0 %v2140
        %2934 = vmatpush.bf16.msra.mxu0 %v2136
        %2935 = vmatmul.bf16.gmra.mxu0 %v711
        %v2936 = vpop.f32.mrf.mxu0
        %v2937 = vadd.f32 %v2923, %v2936
        %v2938 = vpop.f32.mrf.mxu0
        %v2939 = vadd.f32 %v2925, %v2938
        %2940 = vdwg.mxu0
        %2941 = vmatpush.bf16.msra.mxu0 %v2196
        %2942 = vmatpush.bf16.msra.mxu0 %v2192
        %2943 = vmatpush.bf16.msra.mxu0 %v2188
        %2944 = vmatpush.bf16.msra.mxu0 %v2184
        %2945 = vmatpush.bf16.msra.mxu0 %v2180
        %2946 = vmatpush.bf16.msra.mxu0 %v2176
        %2947 = vmatpush.bf16.msra.mxu0 %v2172
        %2948 = vmatpush.bf16.msra.mxu0 %v2168
        %2949 = vmatmul.bf16.gmra.mxu0 %v712
        %v2950 = vpop.f32.mrf.mxu0
        %v2951 = vadd.f32 %v2937, %v2950
        %v2952 = vpop.f32.mrf.mxu0
        %v2953 = vadd.f32 %v2939, %v2952
        %2954 = vdwg.mxu0
        %2955 = vmatpush.bf16.msra.mxu0 %v2228
        %2956 = vmatpush.bf16.msra.mxu0 %v2224
        %2957 = vmatpush.bf16.msra.mxu0 %v2220
        %2958 = vmatpush.bf16.msra.mxu0 %v2216
        %2959 = vmatpush.bf16.msra.mxu0 %v2212
        %2960 = vmatpush.bf16.msra.mxu0 %v2208
        %2961 = vmatpush.bf16.msra.mxu0 %v2204
        %2962 = vmatpush.bf16.msra.mxu0 %v2200
        %2963 = vmatmul.bf16.gmra.mxu0 %v713
        %v2964 = vpop.f32.mrf.mxu0
        %v2965 = vadd.f32 %v2951, %v2964
        %v2966 = vpop.f32.mrf.mxu0
        %v2967 = vadd.f32 %v2953, %v2966
        %2968 = vdwg.mxu0
        %2969 = vmatpush.bf16.msra.mxu0 %v2260
        %2970 = vmatpush.bf16.msra.mxu0 %v2256
        %2971 = vmatpush.bf16.msra.mxu0 %v2252
        %2972 = vmatpush.bf16.msra.mxu0 %v2248
        %2973 = vmatpush.bf16.msra.mxu0 %v2244
        %2974 = vmatpush.bf16.msra.mxu0 %v2240
        %2975 = vmatpush.bf16.msra.mxu0 %v2236
        %2976 = vmatpush.bf16.msra.mxu0 %v2232
        %2977 = vmatmul.bf16.gmra.mxu0 %v714
        %v2978 = vpop.f32.mrf.mxu0
        %v2979 = vadd.f32 %v2965, %v2978
        %v2980 = vpop.f32.mrf.mxu0
        %v2981 = vadd.f32 %v2967, %v2980
        %2982 = vdwg.mxu0
        %2983 = vmatpush.bf16.msra.mxu0 %v1909
        %2984 = vmatpush.bf16.msra.mxu0 %v1905
        %2985 = vmatpush.bf16.msra.mxu0 %v1901
        %2986 = vmatpush.bf16.msra.mxu0 %v1897
        %2987 = vmatpush.bf16.msra.mxu0 %v1893
        %2988 = vmatpush.bf16.msra.mxu0 %v1889
        %2989 = vmatpush.bf16.msra.mxu0 %v1885
        %2990 = vmatpush.bf16.msra.mxu0 %v1881
        %2991 = vmatmul.bf16.gmra.mxu0 %v703
        %v2992 = vpop.f32.mrf.mxu0
        %v2993 = vadd.f32 0.0, %v2992
        %v2994 = vpop.f32.mrf.mxu0
        %v2995 = vadd.f32 0.0, %v2994
        %2996 = vdwg.mxu0
        %2997 = vmatpush.bf16.msra.mxu0 %v1941
        %2998 = vmatpush.bf16.msra.mxu0 %v1937
        %2999 = vmatpush.bf16.msra.mxu0 %v1933
        %3000 = vmatpush.bf16.msra.mxu0 %v1929
        %3001 = vmatpush.bf16.msra.mxu0 %v1925
        %3002 = vmatpush.bf16.msra.mxu0 %v1921
        %3003 = vmatpush.bf16.msra.mxu0 %v1917
        %3004 = vmatpush.bf16.msra.mxu0 %v1913
        %3005 = vmatmul.bf16.gmra.mxu0 %v704
        %v3006 = vpop.f32.mrf.mxu0
        %v3007 = vadd.f32 %v2993, %v3006
        %v3008 = vpop.f32.mrf.mxu0
        %v3009 = vadd.f32 %v2995, %v3008
        %3010 = vdwg.mxu0
        %3011 = vmatpush.bf16.msra.mxu0 %v1973
        %3012 = vmatpush.bf16.msra.mxu0 %v1969
        %3013 = vmatpush.bf16.msra.mxu0 %v1965
        %3014 = vmatpush.bf16.msra.mxu0 %v1961
        %3015 = vmatpush.bf16.msra.mxu0 %v1957
        %3016 = vmatpush.bf16.msra.mxu0 %v1953
        %3017 = vmatpush.bf16.msra.mxu0 %v1949
        %3018 = vmatpush.bf16.msra.mxu0 %v1945
        %3019 = vmatmul.bf16.gmra.mxu0 %v705
        %v3020 = vpop.f32.mrf.mxu0
        %v3021 = vadd.f32 %v3007, %v3020
        %v3022 = vpop.f32.mrf.mxu0
        %v3023 = vadd.f32 %v3009, %v3022
        %3024 = vdwg.mxu0
        %3025 = vmatpush.bf16.msra.mxu0 %v2005
        %3026 = vmatpush.bf16.msra.mxu0 %v2001
        %3027 = vmatpush.bf16.msra.mxu0 %v1997
        %3028 = vmatpush.bf16.msra.mxu0 %v1993
        %3029 = vmatpush.bf16.msra.mxu0 %v1989
        %3030 = vmatpush.bf16.msra.mxu0 %v1985
        %3031 = vmatpush.bf16.msra.mxu0 %v1981
        %3032 = vmatpush.bf16.msra.mxu0 %v1977
        %3033 = vmatmul.bf16.gmra.mxu0 %v706
        %v3034 = vpop.f32.mrf.mxu0
        %v3035 = vadd.f32 %v3021, %v3034
        %v3036 = vpop.f32.mrf.mxu0
        %v3037 = vadd.f32 %v3023, %v3036
        %3038 = vdwg.mxu0
        %3039 = vmatpush.bf16.msra.mxu0 %v2037
        %3040 = vmatpush.bf16.msra.mxu0 %v2033
        %3041 = vmatpush.bf16.msra.mxu0 %v2029
        %3042 = vmatpush.bf16.msra.mxu0 %v2025
        %3043 = vmatpush.bf16.msra.mxu0 %v2021
        %3044 = vmatpush.bf16.msra.mxu0 %v2017
        %3045 = vmatpush.bf16.msra.mxu0 %v2013
        %3046 = vmatpush.bf16.msra.mxu0 %v2009
        %3047 = vmatmul.bf16.gmra.mxu0 %v707
        %v3048 = vpop.f32.mrf.mxu0
        %v3049 = vadd.f32 %v3035, %v3048
        %v3050 = vpop.f32.mrf.mxu0
        %v3051 = vadd.f32 %v3037, %v3050
        %3052 = vdwg.mxu0
        %3053 = vmatpush.bf16.msra.mxu0 %v2069
        %3054 = vmatpush.bf16.msra.mxu0 %v2065
        %3055 = vmatpush.bf16.msra.mxu0 %v2061
        %3056 = vmatpush.bf16.msra.mxu0 %v2057
        %3057 = vmatpush.bf16.msra.mxu0 %v2053
        %3058 = vmatpush.bf16.msra.mxu0 %v2049
        %3059 = vmatpush.bf16.msra.mxu0 %v2045
        %3060 = vmatpush.bf16.msra.mxu0 %v2041
        %3061 = vmatmul.bf16.gmra.mxu0 %v708
        %v3062 = vpop.f32.mrf.mxu0
        %v3063 = vadd.f32 %v3049, %v3062
        %v3064 = vpop.f32.mrf.mxu0
        %v3065 = vadd.f32 %v3051, %v3064
        %3066 = vdwg.mxu0
        %3067 = vmatpush.bf16.msra.mxu0 %v2101
        %3068 = vmatpush.bf16.msra.mxu0 %v2097
        %3069 = vmatpush.bf16.msra.mxu0 %v2093
        %3070 = vmatpush.bf16.msra.mxu0 %v2089
        %3071 = vmatpush.bf16.msra.mxu0 %v2085
        %3072 = vmatpush.bf16.msra.mxu0 %v2081
        %3073 = vmatpush.bf16.msra.mxu0 %v2077
        %3074 = vmatpush.bf16.msra.mxu0 %v2073
        %3075 = vmatmul.bf16.gmra.mxu0 %v709
        %v3076 = vpop.f32.mrf.mxu0
        %v3077 = vadd.f32 %v3063, %v3076
        %v3078 = vpop.f32.mrf.mxu0
        %v3079 = vadd.f32 %v3065, %v3078
        %3080 = vdwg.mxu0
        %3081 = vmatpush.bf16.msra.mxu0 %v2133
        %3082 = vmatpush.bf16.msra.mxu0 %v2129
        %3083 = vmatpush.bf16.msra.mxu0 %v2125
        %3084 = vmatpush.bf16.msra.mxu0 %v2121
        %3085 = vmatpush.bf16.msra.mxu0 %v2117
        %3086 = vmatpush.bf16.msra.mxu0 %v2113
        %3087 = vmatpush.bf16.msra.mxu0 %v2109
        %3088 = vmatpush.bf16.msra.mxu0 %v2105
        %3089 = vmatmul.bf16.gmra.mxu0 %v710
        %v3090 = vpop.f32.mrf.mxu0
        %v3091 = vadd.f32 %v3077, %v3090
        %v3092 = vpop.f32.mrf.mxu0
        %v3093 = vadd.f32 %v3079, %v3092
        %3094 = vdwg.mxu0
        %3095 = vmatpush.bf16.msra.mxu0 %v2165
        %3096 = vmatpush.bf16.msra.mxu0 %v2161
        %3097 = vmatpush.bf16.msra.mxu0 %v2157
        %3098 = vmatpush.bf16.msra.mxu0 %v2153
        %3099 = vmatpush.bf16.msra.mxu0 %v2149
        %3100 = vmatpush.bf16.msra.mxu0 %v2145
        %3101 = vmatpush.bf16.msra.mxu0 %v2141
        %3102 = vmatpush.bf16.msra.mxu0 %v2137
        %3103 = vmatmul.bf16.gmra.mxu0 %v711
        %v3104 = vpop.f32.mrf.mxu0
        %v3105 = vadd.f32 %v3091, %v3104
        %v3106 = vpop.f32.mrf.mxu0
        %v3107 = vadd.f32 %v3093, %v3106
        %3108 = vdwg.mxu0
        %3109 = vmatpush.bf16.msra.mxu0 %v2197
        %3110 = vmatpush.bf16.msra.mxu0 %v2193
        %3111 = vmatpush.bf16.msra.mxu0 %v2189
        %3112 = vmatpush.bf16.msra.mxu0 %v2185
        %3113 = vmatpush.bf16.msra.mxu0 %v2181
        %3114 = vmatpush.bf16.msra.mxu0 %v2177
        %3115 = vmatpush.bf16.msra.mxu0 %v2173
        %3116 = vmatpush.bf16.msra.mxu0 %v2169
        %3117 = vmatmul.bf16.gmra.mxu0 %v712
        %v3118 = vpop.f32.mrf.mxu0
        %v3119 = vadd.f32 %v3105, %v3118
        %v3120 = vpop.f32.mrf.mxu0
        %v3121 = vadd.f32 %v3107, %v3120
        %3122 = vdwg.mxu0
        %3123 = vmatpush.bf16.msra.mxu0 %v2229
        %3124 = vmatpush.bf16.msra.mxu0 %v2225
        %3125 = vmatpush.bf16.msra.mxu0 %v2221
        %3126 = vmatpush.bf16.msra.mxu0 %v2217
        %3127 = vmatpush.bf16.msra.mxu0 %v2213
        %3128 = vmatpush.bf16.msra.mxu0 %v2209
        %3129 = vmatpush.bf16.msra.mxu0 %v2205
        %3130 = vmatpush.bf16.msra.mxu0 %v2201
        %3131 = vmatmul.bf16.gmra.mxu0 %v713
        %v3132 = vpop.f32.mrf.mxu0
        %v3133 = vadd.f32 %v3119, %v3132
        %v3134 = vpop.f32.mrf.mxu0
        %v3135 = vadd.f32 %v3121, %v3134
        %3136 = vdwg.mxu0
        %3137 = vmatpush.bf16.msra.mxu0 %v2261
        %3138 = vmatpush.bf16.msra.mxu0 %v2257
        %3139 = vmatpush.bf16.msra.mxu0 %v2253
        %3140 = vmatpush.bf16.msra.mxu0 %v2249
        %3141 = vmatpush.bf16.msra.mxu0 %v2245
        %3142 = vmatpush.bf16.msra.mxu0 %v2241
        %3143 = vmatpush.bf16.msra.mxu0 %v2237
        %3144 = vmatpush.bf16.msra.mxu0 %v2233
        %3145 = vmatmul.bf16.gmra.mxu0 %v714
        %v3146 = vpop.f32.mrf.mxu0
        %v3147 = vadd.f32 %v3133, %v3146
        %v3148 = vpop.f32.mrf.mxu0
        %v3149 = vadd.f32 %v3135, %v3148
        %3150 = vdwg.mxu0
        %3151 = vmatpush.bf16.msra.mxu0 %v1910
        %3152 = vmatpush.bf16.msra.mxu0 %v1906
        %3153 = vmatpush.bf16.msra.mxu0 %v1902
        %3154 = vmatpush.bf16.msra.mxu0 %v1898
        %3155 = vmatpush.bf16.msra.mxu0 %v1894
        %3156 = vmatpush.bf16.msra.mxu0 %v1890
        %3157 = vmatpush.bf16.msra.mxu0 %v1886
        %3158 = vmatpush.bf16.msra.mxu0 %v1882
        %3159 = vmatmul.bf16.gmra.mxu0 %v703
        %v3160 = vpop.f32.mrf.mxu0
        %v3161 = vadd.f32 0.0, %v3160
        %v3162 = vpop.f32.mrf.mxu0
        %v3163 = vadd.f32 0.0, %v3162
        %3164 = vdwg.mxu0
        %3165 = vmatpush.bf16.msra.mxu0 %v1942
        %3166 = vmatpush.bf16.msra.mxu0 %v1938
        %3167 = vmatpush.bf16.msra.mxu0 %v1934
        %3168 = vmatpush.bf16.msra.mxu0 %v1930
        %3169 = vmatpush.bf16.msra.mxu0 %v1926
        %3170 = vmatpush.bf16.msra.mxu0 %v1922
        %3171 = vmatpush.bf16.msra.mxu0 %v1918
        %3172 = vmatpush.bf16.msra.mxu0 %v1914
        %3173 = vmatmul.bf16.gmra.mxu0 %v704
        %v3174 = vpop.f32.mrf.mxu0
        %v3175 = vadd.f32 %v3161, %v3174
        %v3176 = vpop.f32.mrf.mxu0
        %v3177 = vadd.f32 %v3163, %v3176
        %3178 = vdwg.mxu0
        %3179 = vmatpush.bf16.msra.mxu0 %v1974
        %3180 = vmatpush.bf16.msra.mxu0 %v1970
        %3181 = vmatpush.bf16.msra.mxu0 %v1966
        %3182 = vmatpush.bf16.msra.mxu0 %v1962
        %3183 = vmatpush.bf16.msra.mxu0 %v1958
        %3184 = vmatpush.bf16.msra.mxu0 %v1954
        %3185 = vmatpush.bf16.msra.mxu0 %v1950
        %3186 = vmatpush.bf16.msra.mxu0 %v1946
        %3187 = vmatmul.bf16.gmra.mxu0 %v705
        %v3188 = vpop.f32.mrf.mxu0
        %v3189 = vadd.f32 %v3175, %v3188
        %v3190 = vpop.f32.mrf.mxu0
        %v3191 = vadd.f32 %v3177, %v3190
        %3192 = vdwg.mxu0
        %3193 = vmatpush.bf16.msra.mxu0 %v2006
        %3194 = vmatpush.bf16.msra.mxu0 %v2002
        %3195 = vmatpush.bf16.msra.mxu0 %v1998
        %3196 = vmatpush.bf16.msra.mxu0 %v1994
        %3197 = vmatpush.bf16.msra.mxu0 %v1990
        %3198 = vmatpush.bf16.msra.mxu0 %v1986
        %3199 = vmatpush.bf16.msra.mxu0 %v1982
        %3200 = vmatpush.bf16.msra.mxu0 %v1978
        %3201 = vmatmul.bf16.gmra.mxu0 %v706
        %v3202 = vpop.f32.mrf.mxu0
        %v3203 = vadd.f32 %v3189, %v3202
        %v3204 = vpop.f32.mrf.mxu0
        %v3205 = vadd.f32 %v3191, %v3204
        %3206 = vdwg.mxu0
        %3207 = vmatpush.bf16.msra.mxu0 %v2038
        %3208 = vmatpush.bf16.msra.mxu0 %v2034
        %3209 = vmatpush.bf16.msra.mxu0 %v2030
        %3210 = vmatpush.bf16.msra.mxu0 %v2026
        %3211 = vmatpush.bf16.msra.mxu0 %v2022
        %3212 = vmatpush.bf16.msra.mxu0 %v2018
        %3213 = vmatpush.bf16.msra.mxu0 %v2014
        %3214 = vmatpush.bf16.msra.mxu0 %v2010
        %3215 = vmatmul.bf16.gmra.mxu0 %v707
        %v3216 = vpop.f32.mrf.mxu0
        %v3217 = vadd.f32 %v3203, %v3216
        %v3218 = vpop.f32.mrf.mxu0
        %v3219 = vadd.f32 %v3205, %v3218
        %3220 = vdwg.mxu0
        %3221 = vmatpush.bf16.msra.mxu0 %v2070
        %3222 = vmatpush.bf16.msra.mxu0 %v2066
        %3223 = vmatpush.bf16.msra.mxu0 %v2062
        %3224 = vmatpush.bf16.msra.mxu0 %v2058
        %3225 = vmatpush.bf16.msra.mxu0 %v2054
        %3226 = vmatpush.bf16.msra.mxu0 %v2050
        %3227 = vmatpush.bf16.msra.mxu0 %v2046
        %3228 = vmatpush.bf16.msra.mxu0 %v2042
        %3229 = vmatmul.bf16.gmra.mxu0 %v708
        %v3230 = vpop.f32.mrf.mxu0
        %v3231 = vadd.f32 %v3217, %v3230
        %v3232 = vpop.f32.mrf.mxu0
        %v3233 = vadd.f32 %v3219, %v3232
        %3234 = vdwg.mxu0
        %3235 = vmatpush.bf16.msra.mxu0 %v2102
        %3236 = vmatpush.bf16.msra.mxu0 %v2098
        %3237 = vmatpush.bf16.msra.mxu0 %v2094
        %3238 = vmatpush.bf16.msra.mxu0 %v2090
        %3239 = vmatpush.bf16.msra.mxu0 %v2086
        %3240 = vmatpush.bf16.msra.mxu0 %v2082
        %3241 = vmatpush.bf16.msra.mxu0 %v2078
        %3242 = vmatpush.bf16.msra.mxu0 %v2074
        %3243 = vmatmul.bf16.gmra.mxu0 %v709
        %v3244 = vpop.f32.mrf.mxu0
        %v3245 = vadd.f32 %v3231, %v3244
        %v3246 = vpop.f32.mrf.mxu0
        %v3247 = vadd.f32 %v3233, %v3246
        %3248 = vdwg.mxu0
        %3249 = vmatpush.bf16.msra.mxu0 %v2134
        %3250 = vmatpush.bf16.msra.mxu0 %v2130
        %3251 = vmatpush.bf16.msra.mxu0 %v2126
        %3252 = vmatpush.bf16.msra.mxu0 %v2122
        %3253 = vmatpush.bf16.msra.mxu0 %v2118
        %3254 = vmatpush.bf16.msra.mxu0 %v2114
        %3255 = vmatpush.bf16.msra.mxu0 %v2110
        %3256 = vmatpush.bf16.msra.mxu0 %v2106
        %3257 = vmatmul.bf16.gmra.mxu0 %v710
        %v3258 = vpop.f32.mrf.mxu0
        %v3259 = vadd.f32 %v3245, %v3258
        %v3260 = vpop.f32.mrf.mxu0
        %v3261 = vadd.f32 %v3247, %v3260
        %3262 = vdwg.mxu0
        %3263 = vmatpush.bf16.msra.mxu0 %v2166
        %3264 = vmatpush.bf16.msra.mxu0 %v2162
        %3265 = vmatpush.bf16.msra.mxu0 %v2158
        %3266 = vmatpush.bf16.msra.mxu0 %v2154
        %3267 = vmatpush.bf16.msra.mxu0 %v2150
        %3268 = vmatpush.bf16.msra.mxu0 %v2146
        %3269 = vmatpush.bf16.msra.mxu0 %v2142
        %3270 = vmatpush.bf16.msra.mxu0 %v2138
        %3271 = vmatmul.bf16.gmra.mxu0 %v711
        %v3272 = vpop.f32.mrf.mxu0
        %v3273 = vadd.f32 %v3259, %v3272
        %v3274 = vpop.f32.mrf.mxu0
        %v3275 = vadd.f32 %v3261, %v3274
        %3276 = vdwg.mxu0
        %3277 = vmatpush.bf16.msra.mxu0 %v2198
        %3278 = vmatpush.bf16.msra.mxu0 %v2194
        %3279 = vmatpush.bf16.msra.mxu0 %v2190
        %3280 = vmatpush.bf16.msra.mxu0 %v2186
        %3281 = vmatpush.bf16.msra.mxu0 %v2182
        %3282 = vmatpush.bf16.msra.mxu0 %v2178
        %3283 = vmatpush.bf16.msra.mxu0 %v2174
        %3284 = vmatpush.bf16.msra.mxu0 %v2170
        %3285 = vmatmul.bf16.gmra.mxu0 %v712
        %v3286 = vpop.f32.mrf.mxu0
        %v3287 = vadd.f32 %v3273, %v3286
        %v3288 = vpop.f32.mrf.mxu0
        %v3289 = vadd.f32 %v3275, %v3288
        %3290 = vdwg.mxu0
        %3291 = vmatpush.bf16.msra.mxu0 %v2230
        %3292 = vmatpush.bf16.msra.mxu0 %v2226
        %3293 = vmatpush.bf16.msra.mxu0 %v2222
        %3294 = vmatpush.bf16.msra.mxu0 %v2218
        %3295 = vmatpush.bf16.msra.mxu0 %v2214
        %3296 = vmatpush.bf16.msra.mxu0 %v2210
        %3297 = vmatpush.bf16.msra.mxu0 %v2206
        %3298 = vmatpush.bf16.msra.mxu0 %v2202
        %3299 = vmatmul.bf16.gmra.mxu0 %v713
        %v3300 = vpop.f32.mrf.mxu0
        %v3301 = vadd.f32 %v3287, %v3300
        %v3302 = vpop.f32.mrf.mxu0
        %v3303 = vadd.f32 %v3289, %v3302
        %3304 = vdwg.mxu0
        %3305 = vmatpush.bf16.msra.mxu0 %v2262
        %3306 = vmatpush.bf16.msra.mxu0 %v2258
        %3307 = vmatpush.bf16.msra.mxu0 %v2254
        %3308 = vmatpush.bf16.msra.mxu0 %v2250
        %3309 = vmatpush.bf16.msra.mxu0 %v2246
        %3310 = vmatpush.bf16.msra.mxu0 %v2242
        %3311 = vmatpush.bf16.msra.mxu0 %v2238
        %3312 = vmatpush.bf16.msra.mxu0 %v2234
        %3313 = vmatmul.bf16.gmra.mxu0 %v714
        %v3314 = vpop.f32.mrf.mxu0
        %v3315 = vadd.f32 %v3301, %v3314
        %v3316 = vpop.f32.mrf.mxu0
        %v3317 = vadd.f32 %v3303, %v3316
        %3318 = vdwg.mxu0
        %v3319 = vadd.f32 %v263, %v2811
        %v3320 = vadd.f32 %v264, %v2979
        %v3321 = vadd.f32 %v265, %v3147
        %v3322 = vadd.f32 %v266, %v3315
        %v3323 = vadd.f32 %v267, %v2813
        %v3324 = vadd.f32 %v268, %v2981
        %v3325 = vadd.f32 %v269, %v3149
        %v3326 = vadd.f32 %v270, %v3317
        %3327 = vst [vmem:[#allocation2] sm:$0xff] %v3319
        %3328 = vst [vmem:[#allocation2 + $0x8] sm:$0xff] %v3320
        %3329 = vst [vmem:[#allocation2 + $0x10] sm:$0xff] %v3321
        %3330 = vst [vmem:[#allocation2 + $0x18] sm:$0xff] %v3322
        %3331 = vst [vmem:[#allocation2 + $0x20] sm:$0xff] %v3323
        %3332 = vst [vmem:[#allocation2 + $0x28] sm:$0xff] %v3324
        %3333 = vst [vmem:[#allocation2 + $0x30] sm:$0xff] %v3325
        %3334 = vst [vmem:[#allocation2 + $0x38] sm:$0xff] %v3326
        // Predicated region
        $region60: #{channel_selector_forward.2} parent=46 // pred_check
          %p3335 = pneg %p251
        $region61: #{channel_selector_forward.2} parent=46 // pred_check_branch
          %3337 = sbr.rel (%p3335) target = $region63
        $region62: #{channel_selector_forward.2} parent=46 // pred_region
          %v3338 = vld [vmem:[#allocation2] sm:$0xff]
          %v3339 = vld [vmem:[#allocation2 + $0x8] sm:$0xff]
          %v3340 = vld [vmem:[#allocation2 + $0x10] sm:$0xff]
          %v3341 = vld [vmem:[#allocation2 + $0x18] sm:$0xff]
          %v3342 = vld [vmem:[#allocation2 + $0x20] sm:$0xff]
          %v3343 = vld [vmem:[#allocation2 + $0x28] sm:$0xff]
          %v3344 = vld [vmem:[#allocation2 + $0x30] sm:$0xff]
          %v3345 = vld [vmem:[#allocation2 + $0x38] sm:$0xff]
          %3346 = vst [vmem:[%s250] sm:$0xff] %v3338
          %3347 = vst [vmem:[%s250 + $0x8] sm:$0xff] %v3339
          %3348 = vst [vmem:[%s250 + $0x10] sm:$0xff] %v3340
          %3349 = vst [vmem:[%s250 + $0x18] sm:$0xff] %v3341
          %3350 = vst [vmem:[%s250 + $0x20] sm:$0xff] %v3342
          %3351 = vst [vmem:[%s250 + $0x28] sm:$0xff] %v3343
          %3352 = vst [vmem:[%s250 + $0x30] sm:$0xff] %v3344
          %3353 = vst [vmem:[%s250 + $0x38] sm:$0xff] %v3345
        $region63: #{channel_selector_forward.2} parent=46 // pred_fallthru
          _
        %p3354 = scmp.lt.s32.totalorder %s20, 1
        %s3355 = scalar_select %p3354, %s20, 1
        %s3356 = smul.addr %s3355, 8
        %s3357 = smul.addr %s3356, 8
        %s3358 = scalar_lea.vmem %s2, %s3357
        // Predicated region
        $region64: #{channel_selector_forward.2} parent=46 // pred_check
          %p3359 = pneg %p102
        $region65: #{channel_selector_forward.2} parent=46 // pred_check_branch
          %3361 = sbr.rel (%p3359) target = $region67
        $region66: #{channel_selector_forward.2} parent=46 // pred_region
          _
        $region67: #{channel_selector_forward.2} parent=46 // pred_fallthru
          _
      $region47: #{channel_selector_forward.2} parent=5 // pred_fallthru
        _
      %p3362 = scmp.le.s32.totalorder 2, %s11
      // Predicated region
      $region68: #{channel_selector_forward.2} parent=5 // pred_check
        %p3363 = pneg %p3362
      $region69: #{channel_selector_forward.2} parent=5 // pred_check_branch
        %3365 = sbr.rel (%p3363) target = $region71
      $region70: #{channel_selector_forward.2} parent=5 // pred_region
        %s3366 = ssub.s32 %s11, 2
        // Predicated region
        $region72: #{channel_selector_forward.2} parent=70 // pred_check
          %p3367 = pneg %p108
        $region73: #{channel_selector_forward.2} parent=70 // pred_check_branch
          %3369 = sbr.rel (%p3367) target = $region75
        $region74: #{channel_selector_forward.2} parent=70 // pred_region
          %p3370 = scmp.lt.s32.totalorder %s22, 1
          %s3371 = scalar_select %p3370, %s22, 1
          %s3372 = smul.addr %s3371, 8
          %s3373 = smul.addr %s3372, 8
          %s3374 = scalar_lea.vmem %s2, %s3373
        $region75: #{channel_selector_forward.2} parent=70 // pred_fallthru
          _
      $region71: #{channel_selector_forward.2} parent=5 // pred_fallthru
        _
    $region6: #{channel_selector_forward.2} parent=1 // loop_footer
      %s15 = sadd.s32 1, %s11
    $region7: #{channel_selector_forward.2} parent=1 // loop_footer_branch
      %10 = sbr.rel target = $region3
    $region8: #{channel_selector_forward.2} parent=1 // loop_exit
      _
    %3375 = vsyncpa [#allocation5], 1
    %s3376 = scalar_lea.sflag [#allocation5], 1
    %3377 = vsyncpa %s3376, 1

</llo_original>
